<compile_context>
chip_gen: v6e
topology: v6e:2x2x1
jax: 0.10.0
libtpu: 0.0.40
codegen_flags: <defaults>
</compile_context>

<pallas_src>
import functools

import jax
import jax.numpy as jnp
from jax.experimental import pallas as pl
from jax.experimental.pallas import tpu as pltpu

LEAKY_SLOPE = 0.01   # nn.LeakyReLU / F.leaky_relu default
BN_EPS = 1e-5        # nn.BatchNorm1d default
LANE = 128           # TPU lane width


def _leaky_relu(x):
    return jnp.where(x >= 0, x, LEAKY_SLOPE * x)


def tapnet_kernel(kernels, dilation, n_valid, npad, lout3, apply_mask,
                  x_ref, mask_ref,
                  cw1_ref, g1_ref, be1_ref,
                  cw2_ref, g2_ref, be2_ref,
                  cw3_ref, g3_ref, be3_ref,
                  w0_ref, gf_ref, bf_ref,
                  wc_ref, bc_ref,
                  o_ref):
    """Whole TapNet forward for one (padded) batch, everything resident in VMEM.

    Activation slab layout: (C, L*npad) with column index t*npad + n, so every
    conv tap / time-step slice is a contiguous, 128-aligned lane block.
    """
    mask = mask_ref[...]                       # (1, L*npad) f32, periodic in npad

    def conv_bn_act(slab_bf16, w_ref, g_col, be_col, k, d):
        # slab_bf16: (Cin, Lin*npad) bf16; padded columns are exactly zero.
        cin, cols = slab_bf16.shape
        lin = cols // npad
        lout = lin - d * (k - 1)
        width = lout * npad
        # Conv1d as K accumulated tap matmuls (no im2col concat / repack).
        y = jnp.dot(w_ref[0], slab_bf16[:, :width],
                    preferred_element_type=jnp.float32)
        for j in range(1, k):
            start = j * d * npad               # static, multiple of 128
            y = y + jnp.dot(w_ref[j], slab_bf16[:, start:start + width],
                            preferred_element_type=jnp.float32)
        # Training-mode BatchNorm1d stats over the (N, Lout) real positions per
        # channel.  Padded columns of y are exactly zero (zero input, no conv
        # bias), so unmasked sums equal sums over real columns.
        inv_cnt = 1.0 / float(n_valid * lout)
        mu = jnp.sum(y, axis=1, keepdims=True) * inv_cnt
        var = jnp.maximum(
            jnp.sum(y * y, axis=1, keepdims=True) * inv_cnt - mu * mu, 0.0)
        scale = g_col * jax.lax.rsqrt(var + BN_EPS)
        act = _leaky_relu(y * scale + (be_col - mu * scale))
        if apply_mask:
            # Re-zero padded columns so they don't pollute the next BN's stats.
            act = act * mask[:, :width]
        # Hand back bf16 directly (fused cast, halves the live slab).
        return act.astype(jnp.bfloat16)

    slab = conv_bn_act(x_ref[...], cw1_ref, g1_ref[...], be1_ref[...],
                       kernels[0], dilation)
    slab = conv_bn_act(slab, cw2_ref, g2_ref[...], be2_ref[...], kernels[1], 1)
    slab = conv_bn_act(slab, cw3_ref, g3_ref[...], be3_ref[...], kernels[2], 1)
    # slab: (C3, lout3*npad) bf16, padded columns exactly zero.

    # ---- mapping.fc_0 as Lout3 accumulated per-time-step matmuls ------------
    # (fc_0 bias omitted: cancelled by mapping.bn_0's batch-mean subtraction.)
    h1 = jnp.dot(w0_ref[0], slab[:, :npad], preferred_element_type=jnp.float32)
    for t in range(1, lout3):
        h1 = h1 + jnp.dot(w0_ref[t], slab[:, t * npad:(t + 1) * npad],
                          preferred_element_type=jnp.float32)      # (H1, npad)

    # ---- mapping.bn_0 (training-mode batch stats) + mapping.relu_0 ----------
    inv_n = 1.0 / float(n_valid)
    mu = jnp.sum(h1, axis=1, keepdims=True) * inv_n
    var = jnp.maximum(
        jnp.sum(h1 * h1, axis=1, keepdims=True) * inv_n - mu * mu, 0.0)
    scale = gf_ref[...] * jax.lax.rsqrt(var + BN_EPS)
    h1 = _leaky_relu(h1 * scale + (bf_ref[...] - mu * scale))

    # ---- fc_1 composed with the output linear (done in f32 in the wrapper) --
    o_ref[...] = jnp.dot(wc_ref[...], h1.astype(jnp.bfloat16),
                         preferred_element_type=jnp.float32) + bc_ref[...]


def init_params(key, nfeat, len_ts, nclass, filters, kernels, layers):
    """Deterministic synthetic parameters matching TapNet.__init__ shapes."""
    ks = jax.random.split(key, 20)

    def w(k, shape, scale=0.1):
        return (scale * jax.random.normal(k, shape)).astype(jnp.float32)

    p = {}
    c_in = nfeat
    for i, (f, ksz) in enumerate(zip(filters, kernels)):
        p[f"conv{i + 1}_w"] = w(ks[4 * i + 0], (f, c_in, ksz))
        p[f"conv{i + 1}_b"] = w(ks[4 * i + 1], (f,))
        p[f"bn{i + 1}_g"] = 1.0 + w(ks[4 * i + 2], (f,))
        p[f"bn{i + 1}_b"] = w(ks[4 * i + 3], (f,))
        c_in = f

    conv_size = len_ts
    for ksz in kernels:
        conv_size = int((conv_size - ksz) / 1) + 1       # output_conv_size
    fc_input = conv_size * filters[-1]
    dims = [fc_input] + list(layers)                     # e.g. [320, 64, 32]

    p["fc0_w"] = w(ks[12], (dims[1], dims[0]))
    p["fc0_b"] = w(ks[13], (dims[1],))
    p["bn_fc_g"] = 1.0 + w(ks[14], (dims[1],))
    p["bn_fc_b"] = w(ks[15], (dims[1],))
    p["fc1_w"] = w(ks[16], (dims[2], dims[1]))
    p["fc1_b"] = w(ks[17], (dims[2],))
    p["out_w"] = w(ks[18], (nclass, dims[2]))
    p["out_b"] = w(ks[19], (nclass,))
    return p


def tapnet_forward(inp, params, *, filters, kernels, dilation, layers, nclass):
    # PyTorch: x = input.view(-1, input.shape[2], input.shape[1])  (a reshape)
    N, L, C = inp.shape
    x = jnp.reshape(inp, (N, C, L)).astype(jnp.float32)

    # Pad the batch so the lane-minor index is a multiple of 128 (aligned
    # slices, unmasked output stores); padding is stripped at the end.
    npad = ((N + LANE - 1) // LANE) * LANE
    xt = jnp.transpose(x, (1, 2, 0))                         # (C, L, N)
    xt = jnp.pad(xt, ((0, 0), (0, 0), (0, npad - N)))        # zero-pad samples
    slab0 = xt.reshape(C, L * npad).astype(jnp.bfloat16)     # col = t*npad + n

    # Column-validity mask (1 for real samples, 0 for batch padding).
    mask_row = (jnp.arange(npad) < N).astype(jnp.float32)
    mask = jnp.broadcast_to(mask_row[None, :], (L, npad)).reshape(1, L * npad)

    # Conv output lengths (stride 1, padding 0; only conv_1 has dilation).
    l1 = L - dilation * (kernels[0] - 1)
    l2 = l1 - (kernels[1] - 1)
    lout3 = l2 - (kernels[2] - 1)
    c3 = filters[2]
    h1_dim, h2_dim = layers

    def split_conv_w(wt):
        # (Cout, Cin, K) -> (K, Cout, Cin) bf16: one tap matrix per shift.
        return jnp.transpose(wt, (2, 0, 1)).astype(jnp.bfloat16)

    def col(v):
        return v.reshape(-1, 1).astype(jnp.float32)

    # fc_0 weight split per time step: torch flat feature index is c*Lout3 + l,
    # so w0_split[l][h, c] = fc0_w[h, c*Lout3 + l].
    w0_split = jnp.transpose(params["fc0_w"].reshape(h1_dim, c3, lout3),
                             (2, 0, 1)).astype(jnp.bfloat16)   # (Lout3, H1, C3)

    # Pre-compose fc_1 with the output linear (exact: no nonlinearity between),
    # done once in f32 in the wrapper.
    wc = (params["out_w"] @ params["fc1_w"]).astype(jnp.bfloat16)     # (ncls,H1)
    bc = (params["out_w"] @ params["fc1_b"] + params["out_b"]).reshape(-1, 1)
    bc = bc.astype(jnp.float32)

    # NOTE: conv1/2/3 biases and fc0 bias are intentionally NOT passed: each is
    # followed by training-mode BatchNorm whose mean subtraction cancels them.
    args = (slab0, mask,
            split_conv_w(params["conv1_w"]), col(params["bn1_g"]), col(params["bn1_b"]),
            split_conv_w(params["conv2_w"]), col(params["bn2_g"]), col(params["bn2_b"]),
            split_conv_w(params["conv3_w"]), col(params["bn3_g"]), col(params["bn3_b"]),
            w0_split, col(params["bn_fc_g"]), col(params["bn_fc_b"]),
            wc, bc)

    # Cost estimate (matmul flops, per-channel rsqrts, arg/output bytes).
    flops = 0
    lin, cin = L, C
    for f, k, d in zip(filters, kernels, (dilation, 1, 1)):
        lout = lin - d * (k - 1)
        flops += 2 * f * cin * k * lout * npad
        lin, cin = lout, f
    flops += 2 * h1_dim * c3 * lout3 * npad          # fc_0
    flops += 2 * nclass * h1_dim * npad              # composed fc_1 o output
    bytes_accessed = sum(int(a.size) * a.dtype.itemsize for a in args)
    bytes_accessed += nclass * npad * 4
    transcendentals = filters[0] + filters[1] + filters[2] + h1_dim
    cost = pl.CostEstimate(flops=int(flops),
                           transcendentals=int(transcendentals),
                           bytes_accessed=int(bytes_accessed))

    out = pl.pallas_call(
        functools.partial(tapnet_kernel, tuple(kernels), dilation, N, npad,
                          lout3, npad != N),
        out_shape=jax.ShapeDtypeStruct((nclass, npad), jnp.float32),
        in_specs=[pl.BlockSpec(memory_space=pltpu.MemorySpace.VMEM)] * len(args),
        out_specs=pl.BlockSpec(memory_space=pltpu.MemorySpace.VMEM),
        cost_estimate=cost,
    )(*args)
    return out[:, :N].T                              # strip padding -> (N, nclass)


if __name__ == "__main__":
    # Small shapes consistent with TapNet's forward:
    #   nfeat (channels) = 4, len_ts = 16, batch N = 2, nclass = 4
    #   filters = [16, 16, 32], kernels = [3, 3, 3], dilation = 1
    #   mapping layers = [fc_input, 64, 32]
    N, C, L = 2, 4, 16
    nclass = 4
    filters = (16, 16, 32)
    kernels = (3, 3, 3)
    dilation = 1
    layers = (64, 32)

    key = jax.random.PRNGKey(0)
    k_inp, k_par = jax.random.split(key)
    inp = jax.random.normal(k_inp, (N, L, C), dtype=jnp.float32)
    params = init_params(k_par, C, L, nclass, filters, kernels, layers)

    out = tapnet_forward(inp, params, filters=filters, kernels=kernels,
                         dilation=dilation, layers=layers, nclass=nclass)
    jax.block_until_ready(out)
    assert out.shape == (N, nclass), out.shape
    assert jnp.all(jnp.isfinite(out))
    print("KERNEL_OK")
</pallas_src>

<mosaic_0001>
module attributes {stable_mosaic.version = 11 : i64} {
  func.func @tapnet_kernel(%arg0: memref<4x2048xbf16, #tpu.memory_space<vmem>>, %arg1: memref<1x2048xf32, #tpu.memory_space<vmem>>, %arg2: memref<3x16x4xbf16, #tpu.memory_space<vmem>>, %arg3: memref<16x1xf32, #tpu.memory_space<vmem>>, %arg4: memref<16x1xf32, #tpu.memory_space<vmem>>, %arg5: memref<3x16x16xbf16, #tpu.memory_space<vmem>>, %arg6: memref<16x1xf32, #tpu.memory_space<vmem>>, %arg7: memref<16x1xf32, #tpu.memory_space<vmem>>, %arg8: memref<3x32x16xbf16, #tpu.memory_space<vmem>>, %arg9: memref<32x1xf32, #tpu.memory_space<vmem>>, %arg10: memref<32x1xf32, #tpu.memory_space<vmem>>, %arg11: memref<10x64x32xbf16, #tpu.memory_space<vmem>>, %arg12: memref<64x1xf32, #tpu.memory_space<vmem>>, %arg13: memref<64x1xf32, #tpu.memory_space<vmem>>, %arg14: memref<4x64xbf16, #tpu.memory_space<vmem>>, %arg15: memref<4x1xf32, #tpu.memory_space<vmem>>, %arg16: memref<4x128xf32, #tpu.memory_space<vmem>>) attributes {dimension_semantics = [], scalar_prefetch = 0 : i64, scratch_operands = 0 : i64, tpu.core_type = #tpu.core_type<tc>} {
    %c0 = arith.constant 0 : index
    %c0_0 = arith.constant 0 : index
    %0 = vector.load %arg1[%c0, %c0_0] : memref<1x2048xf32, #tpu.memory_space<vmem>>, vector<1x2048xf32>
    %c0_1 = arith.constant 0 : index
    %c0_2 = arith.constant 0 : index
    %1 = vector.load %arg0[%c0_1, %c0_2] : memref<4x2048xbf16, #tpu.memory_space<vmem>>, vector<4x2048xbf16>
    %c0_3 = arith.constant 0 : index
    %c0_4 = arith.constant 0 : index
    %2 = vector.load %arg3[%c0_3, %c0_4] : memref<16x1xf32, #tpu.memory_space<vmem>>, vector<16x1xf32>
    %c0_5 = arith.constant 0 : index
    %c0_6 = arith.constant 0 : index
    %3 = vector.load %arg4[%c0_5, %c0_6] : memref<16x1xf32, #tpu.memory_space<vmem>>, vector<16x1xf32>
    %c0_7 = arith.constant 0 : index
    %c0_8 = arith.constant 0 : index
    %c0_9 = arith.constant 0 : index
    %4 = vector.load %arg2[%c0_7, %c0_8, %c0_9] : memref<3x16x4xbf16, #tpu.memory_space<vmem>>, vector<1x16x4xbf16>
    %5 = vector.shape_cast %4 : vector<1x16x4xbf16> to vector<16x4xbf16>
    %6 = vector.extract_strided_slice %1 {offsets = [0, 0], sizes = [4, 1792], strides = [1, 1]} : vector<4x2048xbf16> to vector<4x1792xbf16>
    %cst = arith.constant dense<0.000000e+00> : vector<16x1792xf32>
    %7 = tpu.matmul %5, %6, %cst {dimension_numbers = #tpu.dot_dimension_numbers<[1], [0], [0], [1], [0, 0, 1, 1], [], []>} : vector<16x4xbf16>, vector<4x1792xbf16>, vector<16x1792xf32> -> vector<16x1792xf32>
    %c1 = arith.constant 1 : index
    %c0_10 = arith.constant 0 : index
    %c0_11 = arith.constant 0 : index
    %8 = vector.load %arg2[%c1, %c0_10, %c0_11] : memref<3x16x4xbf16, #tpu.memory_space<vmem>>, vector<1x16x4xbf16>
    %9 = vector.shape_cast %8 : vector<1x16x4xbf16> to vector<16x4xbf16>
    %10 = vector.extract_strided_slice %1 {offsets = [0, 128], sizes = [4, 1792], strides = [1, 1]} : vector<4x2048xbf16> to vector<4x1792xbf16>
    %cst_12 = arith.constant dense<0.000000e+00> : vector<16x1792xf32>
    %11 = tpu.matmul %9, %10, %cst_12 {dimension_numbers = #tpu.dot_dimension_numbers<[1], [0], [0], [1], [0, 0, 1, 1], [], []>} : vector<16x4xbf16>, vector<4x1792xbf16>, vector<16x1792xf32> -> vector<16x1792xf32>
    %12 = arith.addf %7, %11 : vector<16x1792xf32>
    %c2 = arith.constant 2 : index
    %c0_13 = arith.constant 0 : index
    %c0_14 = arith.constant 0 : index
    %13 = vector.load %arg2[%c2, %c0_13, %c0_14] : memref<3x16x4xbf16, #tpu.memory_space<vmem>>, vector<1x16x4xbf16>
    %14 = vector.shape_cast %13 : vector<1x16x4xbf16> to vector<16x4xbf16>
    %15 = vector.extract_strided_slice %1 {offsets = [0, 256], sizes = [4, 1792], strides = [1, 1]} : vector<4x2048xbf16> to vector<4x1792xbf16>
    %cst_15 = arith.constant dense<0.000000e+00> : vector<16x1792xf32>
    %16 = tpu.matmul %14, %15, %cst_15 {dimension_numbers = #tpu.dot_dimension_numbers<[1], [0], [0], [1], [0, 0, 1, 1], [], []>} : vector<16x4xbf16>, vector<4x1792xbf16>, vector<16x1792xf32> -> vector<16x1792xf32>
    %17 = arith.addf %12, %16 : vector<16x1792xf32>
    %cst_16 = arith.constant dense<0.000000e+00> : vector<16xf32>
    %18 = vector.multi_reduction <add>, %17, %cst_16 [1] : vector<16x1792xf32> to vector<16xf32>
    %19 = vector.shape_cast %18 : vector<16xf32> to vector<16x1xf32>
    %cst_17 = arith.constant 0.0357142873 : f32
    %20 = vector.broadcast %cst_17 : f32 to vector<16x1xf32>
    %21 = arith.mulf %19, %20 : vector<16x1xf32>
    %22 = arith.mulf %17, %17 : vector<16x1792xf32>
    %cst_18 = arith.constant dense<0.000000e+00> : vector<16xf32>
    %23 = vector.multi_reduction <add>, %22, %cst_18 [1] : vector<16x1792xf32> to vector<16xf32>
    %24 = vector.shape_cast %23 : vector<16xf32> to vector<16x1xf32>
    %cst_19 = arith.constant 0.0357142873 : f32
    %25 = vector.broadcast %cst_19 : f32 to vector<16x1xf32>
    %26 = arith.mulf %24, %25 : vector<16x1xf32>
    %27 = arith.mulf %21, %21 : vector<16x1xf32>
    %28 = arith.subf %26, %27 : vector<16x1xf32>
    %cst_20 = arith.constant 0.000000e+00 : f32
    %29 = vector.broadcast %cst_20 : f32 to vector<16x1xf32>
    %30 = arith.maximumf %28, %29 : vector<16x1xf32>
    %cst_21 = arith.constant 9.99999974E-6 : f32
    %31 = vector.broadcast %cst_21 : f32 to vector<16x1xf32>
    %32 = arith.addf %30, %31 : vector<16x1xf32>
    %33 = math.rsqrt %32 : vector<16x1xf32>
    %34 = arith.mulf %2, %33 : vector<16x1xf32>
    %35 = vector.broadcast %34 : vector<16x1xf32> to vector<16x1792xf32>
    %36 = arith.mulf %17, %35 : vector<16x1792xf32>
    %37 = arith.mulf %21, %34 : vector<16x1xf32>
    %38 = arith.subf %3, %37 : vector<16x1xf32>
    %39 = vector.broadcast %38 : vector<16x1xf32> to vector<16x1792xf32>
    %40 = arith.addf %36, %39 : vector<16x1792xf32>
    %cst_22 = arith.constant 0.000000e+00 : f32
    %41 = vector.broadcast %cst_22 : f32 to vector<16x1792xf32>
    %42 = arith.cmpf oge, %40, %41 : vector<16x1792xf32>
    %cst_23 = arith.constant 0.00999999977 : f32
    %43 = vector.broadcast %cst_23 : f32 to vector<16x1792xf32>
    %44 = arith.mulf %43, %40 : vector<16x1792xf32>
    %45 = arith.select %42, %40, %44 : vector<16x1792xi1>, vector<16x1792xf32>
    %46 = vector.extract_strided_slice %0 {offsets = [0, 0], sizes = [1, 1792], strides = [1, 1]} : vector<1x2048xf32> to vector<1x1792xf32>
    %47 = vector.broadcast %46 : vector<1x1792xf32> to vector<16x1792xf32>
    %48 = arith.mulf %45, %47 : vector<16x1792xf32>
    %49 = arith.truncf %48 : vector<16x1792xf32> to vector<16x1792xbf16>
    %c0_24 = arith.constant 0 : index
    %c0_25 = arith.constant 0 : index
    %50 = vector.load %arg6[%c0_24, %c0_25] : memref<16x1xf32, #tpu.memory_space<vmem>>, vector<16x1xf32>
    %c0_26 = arith.constant 0 : index
    %c0_27 = arith.constant 0 : index
    %51 = vector.load %arg7[%c0_26, %c0_27] : memref<16x1xf32, #tpu.memory_space<vmem>>, vector<16x1xf32>
    %c0_28 = arith.constant 0 : index
    %c0_29 = arith.constant 0 : index
    %c0_30 = arith.constant 0 : index
    %52 = vector.load %arg5[%c0_28, %c0_29, %c0_30] : memref<3x16x16xbf16, #tpu.memory_space<vmem>>, vector<1x16x16xbf16>
    %53 = vector.shape_cast %52 : vector<1x16x16xbf16> to vector<16x16xbf16>
    %54 = vector.extract_strided_slice %49 {offsets = [0, 0], sizes = [16, 1536], strides = [1, 1]} : vector<16x1792xbf16> to vector<16x1536xbf16>
    %cst_31 = arith.constant dense<0.000000e+00> : vector<16x1536xf32>
    %55 = tpu.matmul %53, %54, %cst_31 {dimension_numbers = #tpu.dot_dimension_numbers<[1], [0], [0], [1], [0, 0, 1, 1], [], []>} : vector<16x16xbf16>, vector<16x1536xbf16>, vector<16x1536xf32> -> vector<16x1536xf32>
    %c1_32 = arith.constant 1 : index
    %c0_33 = arith.constant 0 : index
    %c0_34 = arith.constant 0 : index
    %56 = vector.load %arg5[%c1_32, %c0_33, %c0_34] : memref<3x16x16xbf16, #tpu.memory_space<vmem>>, vector<1x16x16xbf16>
    %57 = vector.shape_cast %56 : vector<1x16x16xbf16> to vector<16x16xbf16>
    %58 = vector.extract_strided_slice %49 {offsets = [0, 128], sizes = [16, 1536], strides = [1, 1]} : vector<16x1792xbf16> to vector<16x1536xbf16>
    %cst_35 = arith.constant dense<0.000000e+00> : vector<16x1536xf32>
    %59 = tpu.matmul %57, %58, %cst_35 {dimension_numbers = #tpu.dot_dimension_numbers<[1], [0], [0], [1], [0, 0, 1, 1], [], []>} : vector<16x16xbf16>, vector<16x1536xbf16>, vector<16x1536xf32> -> vector<16x1536xf32>
    %60 = arith.addf %55, %59 : vector<16x1536xf32>
    %c2_36 = arith.constant 2 : index
    %c0_37 = arith.constant 0 : index
    %c0_38 = arith.constant 0 : index
    %61 = vector.load %arg5[%c2_36, %c0_37, %c0_38] : memref<3x16x16xbf16, #tpu.memory_space<vmem>>, vector<1x16x16xbf16>
    %62 = vector.shape_cast %61 : vector<1x16x16xbf16> to vector<16x16xbf16>
    %63 = vector.extract_strided_slice %49 {offsets = [0, 256], sizes = [16, 1536], strides = [1, 1]} : vector<16x1792xbf16> to vector<16x1536xbf16>
    %cst_39 = arith.constant dense<0.000000e+00> : vector<16x1536xf32>
    %64 = tpu.matmul %62, %63, %cst_39 {dimension_numbers = #tpu.dot_dimension_numbers<[1], [0], [0], [1], [0, 0, 1, 1], [], []>} : vector<16x16xbf16>, vector<16x1536xbf16>, vector<16x1536xf32> -> vector<16x1536xf32>
    %65 = arith.addf %60, %64 : vector<16x1536xf32>
    %cst_40 = arith.constant dense<0.000000e+00> : vector<16xf32>
    %66 = vector.multi_reduction <add>, %65, %cst_40 [1] : vector<16x1536xf32> to vector<16xf32>
    %67 = vector.shape_cast %66 : vector<16xf32> to vector<16x1xf32>
    %cst_41 = arith.constant 0.0416666679 : f32
    %68 = vector.broadcast %cst_41 : f32 to vector<16x1xf32>
    %69 = arith.mulf %67, %68 : vector<16x1xf32>
    %70 = arith.mulf %65, %65 : vector<16x1536xf32>
    %cst_42 = arith.constant dense<0.000000e+00> : vector<16xf32>
    %71 = vector.multi_reduction <add>, %70, %cst_42 [1] : vector<16x1536xf32> to vector<16xf32>
    %72 = vector.shape_cast %71 : vector<16xf32> to vector<16x1xf32>
    %cst_43 = arith.constant 0.0416666679 : f32
    %73 = vector.broadcast %cst_43 : f32 to vector<16x1xf32>
    %74 = arith.mulf %72, %73 : vector<16x1xf32>
    %75 = arith.mulf %69, %69 : vector<16x1xf32>
    %76 = arith.subf %74, %75 : vector<16x1xf32>
    %cst_44 = arith.constant 0.000000e+00 : f32
    %77 = vector.broadcast %cst_44 : f32 to vector<16x1xf32>
    %78 = arith.maximumf %76, %77 : vector<16x1xf32>
    %cst_45 = arith.constant 9.99999974E-6 : f32
    %79 = vector.broadcast %cst_45 : f32 to vector<16x1xf32>
    %80 = arith.addf %78, %79 : vector<16x1xf32>
    %81 = math.rsqrt %80 : vector<16x1xf32>
    %82 = arith.mulf %50, %81 : vector<16x1xf32>
    %83 = vector.broadcast %82 : vector<16x1xf32> to vector<16x1536xf32>
    %84 = arith.mulf %65, %83 : vector<16x1536xf32>
    %85 = arith.mulf %69, %82 : vector<16x1xf32>
    %86 = arith.subf %51, %85 : vector<16x1xf32>
    %87 = vector.broadcast %86 : vector<16x1xf32> to vector<16x1536xf32>
    %88 = arith.addf %84, %87 : vector<16x1536xf32>
    %cst_46 = arith.constant 0.000000e+00 : f32
    %89 = vector.broadcast %cst_46 : f32 to vector<16x1536xf32>
    %90 = arith.cmpf oge, %88, %89 : vector<16x1536xf32>
    %cst_47 = arith.constant 0.00999999977 : f32
    %91 = vector.broadcast %cst_47 : f32 to vector<16x1536xf32>
    %92 = arith.mulf %91, %88 : vector<16x1536xf32>
    %93 = arith.select %90, %88, %92 : vector<16x1536xi1>, vector<16x1536xf32>
    %94 = vector.extract_strided_slice %0 {offsets = [0, 0], sizes = [1, 1536], strides = [1, 1]} : vector<1x2048xf32> to vector<1x1536xf32>
    %95 = vector.broadcast %94 : vector<1x1536xf32> to vector<16x1536xf32>
    %96 = arith.mulf %93, %95 : vector<16x1536xf32>
    %97 = arith.truncf %96 : vector<16x1536xf32> to vector<16x1536xbf16>
    %c0_48 = arith.constant 0 : index
    %c0_49 = arith.constant 0 : index
    %98 = vector.load %arg9[%c0_48, %c0_49] : memref<32x1xf32, #tpu.memory_space<vmem>>, vector<32x1xf32>
    %c0_50 = arith.constant 0 : index
    %c0_51 = arith.constant 0 : index
    %99 = vector.load %arg10[%c0_50, %c0_51] : memref<32x1xf32, #tpu.memory_space<vmem>>, vector<32x1xf32>
    %c0_52 = arith.constant 0 : index
    %c0_53 = arith.constant 0 : index
    %c0_54 = arith.constant 0 : index
    %100 = vector.load %arg8[%c0_52, %c0_53, %c0_54] : memref<3x32x16xbf16, #tpu.memory_space<vmem>>, vector<1x32x16xbf16>
    %101 = vector.shape_cast %100 : vector<1x32x16xbf16> to vector<32x16xbf16>
    %102 = vector.extract_strided_slice %97 {offsets = [0, 0], sizes = [16, 1280], strides = [1, 1]} : vector<16x1536xbf16> to vector<16x1280xbf16>
    %cst_55 = arith.constant dense<0.000000e+00> : vector<32x1280xf32>
    %103 = tpu.matmul %101, %102, %cst_55 {dimension_numbers = #tpu.dot_dimension_numbers<[1], [0], [0], [1], [0, 0, 1, 1], [], []>} : vector<32x16xbf16>, vector<16x1280xbf16>, vector<32x1280xf32> -> vector<32x1280xf32>
    %c1_56 = arith.constant 1 : index
    %c0_57 = arith.constant 0 : index
    %c0_58 = arith.constant 0 : index
    %104 = vector.load %arg8[%c1_56, %c0_57, %c0_58] : memref<3x32x16xbf16, #tpu.memory_space<vmem>>, vector<1x32x16xbf16>
    %105 = vector.shape_cast %104 : vector<1x32x16xbf16> to vector<32x16xbf16>
    %106 = vector.extract_strided_slice %97 {offsets = [0, 128], sizes = [16, 1280], strides = [1, 1]} : vector<16x1536xbf16> to vector<16x1280xbf16>
    %cst_59 = arith.constant dense<0.000000e+00> : vector<32x1280xf32>
    %107 = tpu.matmul %105, %106, %cst_59 {dimension_numbers = #tpu.dot_dimension_numbers<[1], [0], [0], [1], [0, 0, 1, 1], [], []>} : vector<32x16xbf16>, vector<16x1280xbf16>, vector<32x1280xf32> -> vector<32x1280xf32>
    %108 = arith.addf %103, %107 : vector<32x1280xf32>
    %c2_60 = arith.constant 2 : index
    %c0_61 = arith.constant 0 : index
    %c0_62 = arith.constant 0 : index
    %109 = vector.load %arg8[%c2_60, %c0_61, %c0_62] : memref<3x32x16xbf16, #tpu.memory_space<vmem>>, vector<1x32x16xbf16>
    %110 = vector.shape_cast %109 : vector<1x32x16xbf16> to vector<32x16xbf16>
    %111 = vector.extract_strided_slice %97 {offsets = [0, 256], sizes = [16, 1280], strides = [1, 1]} : vector<16x1536xbf16> to vector<16x1280xbf16>
    %cst_63 = arith.constant dense<0.000000e+00> : vector<32x1280xf32>
    %112 = tpu.matmul %110, %111, %cst_63 {dimension_numbers = #tpu.dot_dimension_numbers<[1], [0], [0], [1], [0, 0, 1, 1], [], []>} : vector<32x16xbf16>, vector<16x1280xbf16>, vector<32x1280xf32> -> vector<32x1280xf32>
    %113 = arith.addf %108, %112 : vector<32x1280xf32>
    %cst_64 = arith.constant dense<0.000000e+00> : vector<32xf32>
    %114 = vector.multi_reduction <add>, %113, %cst_64 [1] : vector<32x1280xf32> to vector<32xf32>
    %115 = vector.shape_cast %114 : vector<32xf32> to vector<32x1xf32>
    %cst_65 = arith.constant 5.000000e-02 : f32
    %116 = vector.broadcast %cst_65 : f32 to vector<32x1xf32>
    %117 = arith.mulf %115, %116 : vector<32x1xf32>
    %118 = arith.mulf %113, %113 : vector<32x1280xf32>
    %cst_66 = arith.constant dense<0.000000e+00> : vector<32xf32>
    %119 = vector.multi_reduction <add>, %118, %cst_66 [1] : vector<32x1280xf32> to vector<32xf32>
    %120 = vector.shape_cast %119 : vector<32xf32> to vector<32x1xf32>
    %cst_67 = arith.constant 5.000000e-02 : f32
    %121 = vector.broadcast %cst_67 : f32 to vector<32x1xf32>
    %122 = arith.mulf %120, %121 : vector<32x1xf32>
    %123 = arith.mulf %117, %117 : vector<32x1xf32>
    %124 = arith.subf %122, %123 : vector<32x1xf32>
    %cst_68 = arith.constant 0.000000e+00 : f32
    %125 = vector.broadcast %cst_68 : f32 to vector<32x1xf32>
    %126 = arith.maximumf %124, %125 : vector<32x1xf32>
    %cst_69 = arith.constant 9.99999974E-6 : f32
    %127 = vector.broadcast %cst_69 : f32 to vector<32x1xf32>
    %128 = arith.addf %126, %127 : vector<32x1xf32>
    %129 = math.rsqrt %128 : vector<32x1xf32>
    %130 = arith.mulf %98, %129 : vector<32x1xf32>
    %131 = vector.broadcast %130 : vector<32x1xf32> to vector<32x1280xf32>
    %132 = arith.mulf %113, %131 : vector<32x1280xf32>
    %133 = arith.mulf %117, %130 : vector<32x1xf32>
    %134 = arith.subf %99, %133 : vector<32x1xf32>
    %135 = vector.broadcast %134 : vector<32x1xf32> to vector<32x1280xf32>
    %136 = arith.addf %132, %135 : vector<32x1280xf32>
    %cst_70 = arith.constant 0.000000e+00 : f32
    %137 = vector.broadcast %cst_70 : f32 to vector<32x1280xf32>
    %138 = arith.cmpf oge, %136, %137 : vector<32x1280xf32>
    %cst_71 = arith.constant 0.00999999977 : f32
    %139 = vector.broadcast %cst_71 : f32 to vector<32x1280xf32>
    %140 = arith.mulf %139, %136 : vector<32x1280xf32>
    %141 = arith.select %138, %136, %140 : vector<32x1280xi1>, vector<32x1280xf32>
    %142 = vector.extract_strided_slice %0 {offsets = [0, 0], sizes = [1, 1280], strides = [1, 1]} : vector<1x2048xf32> to vector<1x1280xf32>
    %143 = vector.broadcast %142 : vector<1x1280xf32> to vector<32x1280xf32>
    %144 = arith.mulf %141, %143 : vector<32x1280xf32>
    %145 = arith.truncf %144 : vector<32x1280xf32> to vector<32x1280xbf16>
    %c0_72 = arith.constant 0 : index
    %c0_73 = arith.constant 0 : index
    %c0_74 = arith.constant 0 : index
    %146 = vector.load %arg11[%c0_72, %c0_73, %c0_74] : memref<10x64x32xbf16, #tpu.memory_space<vmem>>, vector<1x64x32xbf16>
    %147 = vector.shape_cast %146 : vector<1x64x32xbf16> to vector<64x32xbf16>
    %148 = vector.extract_strided_slice %145 {offsets = [0, 0], sizes = [32, 128], strides = [1, 1]} : vector<32x1280xbf16> to vector<32x128xbf16>
    %cst_75 = arith.constant dense<0.000000e+00> : vector<64x128xf32>
    %149 = tpu.matmul %147, %148, %cst_75 {dimension_numbers = #tpu.dot_dimension_numbers<[1], [0], [0], [1], [0, 0, 1, 1], [], []>} : vector<64x32xbf16>, vector<32x128xbf16>, vector<64x128xf32> -> vector<64x128xf32>
    %c1_76 = arith.constant 1 : index
    %c0_77 = arith.constant 0 : index
    %c0_78 = arith.constant 0 : index
    %150 = vector.load %arg11[%c1_76, %c0_77, %c0_78] : memref<10x64x32xbf16, #tpu.memory_space<vmem>>, vector<1x64x32xbf16>
    %151 = vector.shape_cast %150 : vector<1x64x32xbf16> to vector<64x32xbf16>
    %152 = vector.extract_strided_slice %145 {offsets = [0, 128], sizes = [32, 128], strides = [1, 1]} : vector<32x1280xbf16> to vector<32x128xbf16>
    %cst_79 = arith.constant dense<0.000000e+00> : vector<64x128xf32>
    %153 = tpu.matmul %151, %152, %cst_79 {dimension_numbers = #tpu.dot_dimension_numbers<[1], [0], [0], [1], [0, 0, 1, 1], [], []>} : vector<64x32xbf16>, vector<32x128xbf16>, vector<64x128xf32> -> vector<64x128xf32>
    %154 = arith.addf %149, %153 : vector<64x128xf32>
    %c2_80 = arith.constant 2 : index
    %c0_81 = arith.constant 0 : index
    %c0_82 = arith.constant 0 : index
    %155 = vector.load %arg11[%c2_80, %c0_81, %c0_82] : memref<10x64x32xbf16, #tpu.memory_space<vmem>>, vector<1x64x32xbf16>
    %156 = vector.shape_cast %155 : vector<1x64x32xbf16> to vector<64x32xbf16>
    %157 = vector.extract_strided_slice %145 {offsets = [0, 256], sizes = [32, 128], strides = [1, 1]} : vector<32x1280xbf16> to vector<32x128xbf16>
    %cst_83 = arith.constant dense<0.000000e+00> : vector<64x128xf32>
    %158 = tpu.matmul %156, %157, %cst_83 {dimension_numbers = #tpu.dot_dimension_numbers<[1], [0], [0], [1], [0, 0, 1, 1], [], []>} : vector<64x32xbf16>, vector<32x128xbf16>, vector<64x128xf32> -> vector<64x128xf32>
    %159 = arith.addf %154, %158 : vector<64x128xf32>
    %c3 = arith.constant 3 : index
    %c0_84 = arith.constant 0 : index
    %c0_85 = arith.constant 0 : index
    %160 = vector.load %arg11[%c3, %c0_84, %c0_85] : memref<10x64x32xbf16, #tpu.memory_space<vmem>>, vector<1x64x32xbf16>
    %161 = vector.shape_cast %160 : vector<1x64x32xbf16> to vector<64x32xbf16>
    %162 = vector.extract_strided_slice %145 {offsets = [0, 384], sizes = [32, 128], strides = [1, 1]} : vector<32x1280xbf16> to vector<32x128xbf16>
    %cst_86 = arith.constant dense<0.000000e+00> : vector<64x128xf32>
    %163 = tpu.matmul %161, %162, %cst_86 {dimension_numbers = #tpu.dot_dimension_numbers<[1], [0], [0], [1], [0, 0, 1, 1], [], []>} : vector<64x32xbf16>, vector<32x128xbf16>, vector<64x128xf32> -> vector<64x128xf32>
    %164 = arith.addf %159, %163 : vector<64x128xf32>
    %c4 = arith.constant 4 : index
    %c0_87 = arith.constant 0 : index
    %c0_88 = arith.constant 0 : index
    %165 = vector.load %arg11[%c4, %c0_87, %c0_88] : memref<10x64x32xbf16, #tpu.memory_space<vmem>>, vector<1x64x32xbf16>
    %166 = vector.shape_cast %165 : vector<1x64x32xbf16> to vector<64x32xbf16>
    %167 = vector.extract_strided_slice %145 {offsets = [0, 512], sizes = [32, 128], strides = [1, 1]} : vector<32x1280xbf16> to vector<32x128xbf16>
    %cst_89 = arith.constant dense<0.000000e+00> : vector<64x128xf32>
    %168 = tpu.matmul %166, %167, %cst_89 {dimension_numbers = #tpu.dot_dimension_numbers<[1], [0], [0], [1], [0, 0, 1, 1], [], []>} : vector<64x32xbf16>, vector<32x128xbf16>, vector<64x128xf32> -> vector<64x128xf32>
    %169 = arith.addf %164, %168 : vector<64x128xf32>
    %c5 = arith.constant 5 : index
    %c0_90 = arith.constant 0 : index
    %c0_91 = arith.constant 0 : index
    %170 = vector.load %arg11[%c5, %c0_90, %c0_91] : memref<10x64x32xbf16, #tpu.memory_space<vmem>>, vector<1x64x32xbf16>
    %171 = vector.shape_cast %170 : vector<1x64x32xbf16> to vector<64x32xbf16>
    %172 = vector.extract_strided_slice %145 {offsets = [0, 640], sizes = [32, 128], strides = [1, 1]} : vector<32x1280xbf16> to vector<32x128xbf16>
    %cst_92 = arith.constant dense<0.000000e+00> : vector<64x128xf32>
    %173 = tpu.matmul %171, %172, %cst_92 {dimension_numbers = #tpu.dot_dimension_numbers<[1], [0], [0], [1], [0, 0, 1, 1], [], []>} : vector<64x32xbf16>, vector<32x128xbf16>, vector<64x128xf32> -> vector<64x128xf32>
    %174 = arith.addf %169, %173 : vector<64x128xf32>
    %c6 = arith.constant 6 : index
    %c0_93 = arith.constant 0 : index
    %c0_94 = arith.constant 0 : index
    %175 = vector.load %arg11[%c6, %c0_93, %c0_94] : memref<10x64x32xbf16, #tpu.memory_space<vmem>>, vector<1x64x32xbf16>
    %176 = vector.shape_cast %175 : vector<1x64x32xbf16> to vector<64x32xbf16>
    %177 = vector.extract_strided_slice %145 {offsets = [0, 768], sizes = [32, 128], strides = [1, 1]} : vector<32x1280xbf16> to vector<32x128xbf16>
    %cst_95 = arith.constant dense<0.000000e+00> : vector<64x128xf32>
    %178 = tpu.matmul %176, %177, %cst_95 {dimension_numbers = #tpu.dot_dimension_numbers<[1], [0], [0], [1], [0, 0, 1, 1], [], []>} : vector<64x32xbf16>, vector<32x128xbf16>, vector<64x128xf32> -> vector<64x128xf32>
    %179 = arith.addf %174, %178 : vector<64x128xf32>
    %c7 = arith.constant 7 : index
    %c0_96 = arith.constant 0 : index
    %c0_97 = arith.constant 0 : index
    %180 = vector.load %arg11[%c7, %c0_96, %c0_97] : memref<10x64x32xbf16, #tpu.memory_space<vmem>>, vector<1x64x32xbf16>
    %181 = vector.shape_cast %180 : vector<1x64x32xbf16> to vector<64x32xbf16>
    %182 = vector.extract_strided_slice %145 {offsets = [0, 896], sizes = [32, 128], strides = [1, 1]} : vector<32x1280xbf16> to vector<32x128xbf16>
    %cst_98 = arith.constant dense<0.000000e+00> : vector<64x128xf32>
    %183 = tpu.matmul %181, %182, %cst_98 {dimension_numbers = #tpu.dot_dimension_numbers<[1], [0], [0], [1], [0, 0, 1, 1], [], []>} : vector<64x32xbf16>, vector<32x128xbf16>, vector<64x128xf32> -> vector<64x128xf32>
    %184 = arith.addf %179, %183 : vector<64x128xf32>
    %c8 = arith.constant 8 : index
    %c0_99 = arith.constant 0 : index
    %c0_100 = arith.constant 0 : index
    %185 = vector.load %arg11[%c8, %c0_99, %c0_100] : memref<10x64x32xbf16, #tpu.memory_space<vmem>>, vector<1x64x32xbf16>
    %186 = vector.shape_cast %185 : vector<1x64x32xbf16> to vector<64x32xbf16>
    %187 = vector.extract_strided_slice %145 {offsets = [0, 1024], sizes = [32, 128], strides = [1, 1]} : vector<32x1280xbf16> to vector<32x128xbf16>
    %cst_101 = arith.constant dense<0.000000e+00> : vector<64x128xf32>
    %188 = tpu.matmul %186, %187, %cst_101 {dimension_numbers = #tpu.dot_dimension_numbers<[1], [0], [0], [1], [0, 0, 1, 1], [], []>} : vector<64x32xbf16>, vector<32x128xbf16>, vector<64x128xf32> -> vector<64x128xf32>
    %189 = arith.addf %184, %188 : vector<64x128xf32>
    %c9 = arith.constant 9 : index
    %c0_102 = arith.constant 0 : index
    %c0_103 = arith.constant 0 : index
    %190 = vector.load %arg11[%c9, %c0_102, %c0_103] : memref<10x64x32xbf16, #tpu.memory_space<vmem>>, vector<1x64x32xbf16>
    %191 = vector.shape_cast %190 : vector<1x64x32xbf16> to vector<64x32xbf16>
    %192 = vector.extract_strided_slice %145 {offsets = [0, 1152], sizes = [32, 128], strides = [1, 1]} : vector<32x1280xbf16> to vector<32x128xbf16>
    %cst_104 = arith.constant dense<0.000000e+00> : vector<64x128xf32>
    %193 = tpu.matmul %191, %192, %cst_104 {dimension_numbers = #tpu.dot_dimension_numbers<[1], [0], [0], [1], [0, 0, 1, 1], [], []>} : vector<64x32xbf16>, vector<32x128xbf16>, vector<64x128xf32> -> vector<64x128xf32>
    %194 = arith.addf %189, %193 : vector<64x128xf32>
    %cst_105 = arith.constant dense<0.000000e+00> : vector<64xf32>
    %195 = vector.multi_reduction <add>, %194, %cst_105 [1] : vector<64x128xf32> to vector<64xf32>
    %196 = vector.shape_cast %195 : vector<64xf32> to vector<64x1xf32>
    %cst_106 = arith.constant 5.000000e-01 : f32
    %197 = vector.broadcast %cst_106 : f32 to vector<64x1xf32>
    %198 = arith.mulf %196, %197 : vector<64x1xf32>
    %199 = arith.mulf %194, %194 : vector<64x128xf32>
    %cst_107 = arith.constant dense<0.000000e+00> : vector<64xf32>
    %200 = vector.multi_reduction <add>, %199, %cst_107 [1] : vector<64x128xf32> to vector<64xf32>
    %201 = vector.shape_cast %200 : vector<64xf32> to vector<64x1xf32>
    %cst_108 = arith.constant 5.000000e-01 : f32
    %202 = vector.broadcast %cst_108 : f32 to vector<64x1xf32>
    %203 = arith.mulf %201, %202 : vector<64x1xf32>
    %204 = arith.mulf %198, %198 : vector<64x1xf32>
    %205 = arith.subf %203, %204 : vector<64x1xf32>
    %cst_109 = arith.constant 0.000000e+00 : f32
    %206 = vector.broadcast %cst_109 : f32 to vector<64x1xf32>
    %207 = arith.maximumf %205, %206 : vector<64x1xf32>
    %c0_110 = arith.constant 0 : index
    %c0_111 = arith.constant 0 : index
    %208 = vector.load %arg12[%c0_110, %c0_111] : memref<64x1xf32, #tpu.memory_space<vmem>>, vector<64x1xf32>
    %cst_112 = arith.constant 9.99999974E-6 : f32
    %209 = vector.broadcast %cst_112 : f32 to vector<64x1xf32>
    %210 = arith.addf %207, %209 : vector<64x1xf32>
    %211 = math.rsqrt %210 : vector<64x1xf32>
    %212 = arith.mulf %208, %211 : vector<64x1xf32>
    %213 = vector.broadcast %212 : vector<64x1xf32> to vector<64x128xf32>
    %214 = arith.mulf %194, %213 : vector<64x128xf32>
    %c0_113 = arith.constant 0 : index
    %c0_114 = arith.constant 0 : index
    %215 = vector.load %arg13[%c0_113, %c0_114] : memref<64x1xf32, #tpu.memory_space<vmem>>, vector<64x1xf32>
    %216 = arith.mulf %198, %212 : vector<64x1xf32>
    %217 = arith.subf %215, %216 : vector<64x1xf32>
    %218 = vector.broadcast %217 : vector<64x1xf32> to vector<64x128xf32>
    %219 = arith.addf %214, %218 : vector<64x128xf32>
    %cst_115 = arith.constant 0.000000e+00 : f32
    %220 = vector.broadcast %cst_115 : f32 to vector<64x128xf32>
    %221 = arith.cmpf oge, %219, %220 : vector<64x128xf32>
    %cst_116 = arith.constant 0.00999999977 : f32
    %222 = vector.broadcast %cst_116 : f32 to vector<64x128xf32>
    %223 = arith.mulf %222, %219 : vector<64x128xf32>
    %224 = arith.select %221, %219, %223 : vector<64x128xi1>, vector<64x128xf32>
    %c0_117 = arith.constant 0 : index
    %c0_118 = arith.constant 0 : index
    %225 = vector.load %arg14[%c0_117, %c0_118] : memref<4x64xbf16, #tpu.memory_space<vmem>>, vector<4x64xbf16>
    %226 = arith.truncf %224 : vector<64x128xf32> to vector<64x128xbf16>
    %cst_119 = arith.constant dense<0.000000e+00> : vector<4x128xf32>
    %227 = tpu.matmul %225, %226, %cst_119 {dimension_numbers = #tpu.dot_dimension_numbers<[1], [0], [0], [1], [0, 0, 1, 1], [], []>} : vector<4x64xbf16>, vector<64x128xbf16>, vector<4x128xf32> -> vector<4x128xf32>
    %c0_120 = arith.constant 0 : index
    %c0_121 = arith.constant 0 : index
    %228 = vector.load %arg15[%c0_120, %c0_121] : memref<4x1xf32, #tpu.memory_space<vmem>>, vector<4x1xf32>
    %229 = vector.broadcast %228 : vector<4x1xf32> to vector<4x128xf32>
    %230 = arith.addf %227, %229 : vector<4x128xf32>
    %c0_122 = arith.constant 0 : index
    %c0_123 = arith.constant 0 : index
    %231 = vector.load %arg16[%c0_122, %c0_123] : memref<4x128xf32, #tpu.memory_space<vmem>>, vector<4x128xf32>
    tpu.vector_store %arg16[%c0_122, %c0_123], %230 {strides = array<i32>} : memref<4x128xf32, #tpu.memory_space<vmem>>, vector<4x128xf32>,
    return
  }
}

</mosaic_0001>

<llo_original>
// kernel: tpu_custom_call.1
$region0: #{tpu_custom_call.1}
  #allocation0 [shape = 'u32[]', space=smem, size = 0x4, offset = 0x4, fixed_abs, tag = 'smem constant byte address 0x4 - core index']
  #allocation1 [shape = 'u32[144,128]{1,0:T(1,128)}', space=vmem, size = 0x12000, scoped, tag = 'internal scratch']
  %s0 = inlined_call_operand.vmem [shape: bf16[4,2048], index: 0, kind: input, shape index: {}]
  %s1 = inlined_call_operand.vmem [shape: f32[1,2048], index: 1, kind: input, shape index: {}]
  %s2 = inlined_call_operand.vmem [shape: bf16[3,16,4], index: 2, kind: input, shape index: {}]
  %s3 = inlined_call_operand.vmem [shape: f32[16,1], index: 3, kind: input, shape index: {}]
  %s4 = inlined_call_operand.vmem [shape: f32[16,1], index: 4, kind: input, shape index: {}]
  %s5 = inlined_call_operand.vmem [shape: bf16[3,16,16], index: 5, kind: input, shape index: {}]
  %s6 = inlined_call_operand.vmem [shape: f32[16,1], index: 6, kind: input, shape index: {}]
  %s7 = inlined_call_operand.vmem [shape: f32[16,1], index: 7, kind: input, shape index: {}]
  %s8 = inlined_call_operand.vmem [shape: bf16[3,32,16], index: 8, kind: input, shape index: {}]
  %s9 = inlined_call_operand.vmem [shape: f32[32,1], index: 9, kind: input, shape index: {}]
  %s10 = inlined_call_operand.vmem [shape: f32[32,1], index: 10, kind: input, shape index: {}]
  %s11 = inlined_call_operand.vmem [shape: bf16[10,64,32], index: 11, kind: input, shape index: {}]
  %s12 = inlined_call_operand.vmem [shape: f32[64,1], index: 12, kind: input, shape index: {}]
  %s13 = inlined_call_operand.vmem [shape: f32[64,1], index: 13, kind: input, shape index: {}]
  %s14 = inlined_call_operand.vmem [shape: bf16[4,64], index: 14, kind: input, shape index: {}]
  %s15 = inlined_call_operand.vmem [shape: f32[4,1], index: 15, kind: input, shape index: {}]
  %s16 = inlined_call_operand.hbm [shape: f32[4,128], index: 16, kind: output, shape index: {}]
  %s17 = sld [smem:[#allocation0]]
  $region74: #{tpu_custom_call.1} parent=0
    _
  %s19 = ssub.s32 1, %s17
  %s20 = scalar_select 0, %s19, %s17
  $region1: #{tpu_custom_call.1} parent=0
    #allocation2 [shape = 'u8[2048]{0}', space=vmem, size = 0x800, scoped, tag = 'output window, operand 0, single buffered']
    #allocation3 [shape = 's32[1]{0}', space=sflag, size = 0x4, scoped, tag = 'scoped memory for tpu_custom_call.1']
    %21 = vsyncpa [#allocation3], 0
    // Predicated region
    $region2: #{tpu_custom_call.1} parent=1 // pred_check
      _
    $region3: #{tpu_custom_call.1} parent=1 // pred_check_branch
      %23 = sbr.rel (0) target = $region5
    $region4: #{tpu_custom_call.1} parent=1 // pred_region
      _
    $region5: #{tpu_custom_call.1} parent=1 // pred_fallthru
      _
    // Predicated region
    $region6: #{tpu_custom_call.1} parent=1 // pred_check
      _
    $region7: #{tpu_custom_call.1} parent=1 // pred_check_branch
      %25 = sbr.rel (0) target = $region9
    $region8: #{tpu_custom_call.1} parent=1 // pred_region
      _
    $region9: #{tpu_custom_call.1} parent=1 // pred_fallthru
      _
    // Predicated region
    $region10: #{tpu_custom_call.1} parent=1 // pred_check
      _
    $region11: #{tpu_custom_call.1} parent=1 // pred_check_branch
      %27 = sbr.rel (0) target = $region13
    $region12: #{tpu_custom_call.1} parent=1 // pred_region
      _
    $region13: #{tpu_custom_call.1} parent=1 // pred_fallthru
      _
    // Predicated region
    $region14: #{tpu_custom_call.1} parent=1 // pred_check
      _
    $region15: #{tpu_custom_call.1} parent=1 // pred_check_branch
      %29 = sbr.rel (0) target = $region17
    $region16: #{tpu_custom_call.1} parent=1 // pred_region
      _
    $region17: #{tpu_custom_call.1} parent=1 // pred_fallthru
      _
    // Predicated region
    $region18: #{tpu_custom_call.1} parent=1 // pred_check
      _
    $region19: #{tpu_custom_call.1} parent=1 // pred_check_branch
      %31 = sbr.rel (0) target = $region21
    $region20: #{tpu_custom_call.1} parent=1 // pred_region
      _
    $region21: #{tpu_custom_call.1} parent=1 // pred_fallthru
      _
    // Predicated region
    $region22: #{tpu_custom_call.1} parent=1 // pred_check
      _
    $region23: #{tpu_custom_call.1} parent=1 // pred_check_branch
      %33 = sbr.rel (0) target = $region25
    $region24: #{tpu_custom_call.1} parent=1 // pred_region
      _
    $region25: #{tpu_custom_call.1} parent=1 // pred_fallthru
      _
    // Predicated region
    $region26: #{tpu_custom_call.1} parent=1 // pred_check
      _
    $region27: #{tpu_custom_call.1} parent=1 // pred_check_branch
      %35 = sbr.rel (0) target = $region29
    $region28: #{tpu_custom_call.1} parent=1 // pred_region
      _
    $region29: #{tpu_custom_call.1} parent=1 // pred_fallthru
      _
    // Predicated region
    $region30: #{tpu_custom_call.1} parent=1 // pred_check
      _
    $region31: #{tpu_custom_call.1} parent=1 // pred_check_branch
      %37 = sbr.rel (0) target = $region33
    $region32: #{tpu_custom_call.1} parent=1 // pred_region
      _
    $region33: #{tpu_custom_call.1} parent=1 // pred_fallthru
      _
    // Predicated region
    $region34: #{tpu_custom_call.1} parent=1 // pred_check
      _
    $region35: #{tpu_custom_call.1} parent=1 // pred_check_branch
      %39 = sbr.rel (0) target = $region37
    $region36: #{tpu_custom_call.1} parent=1 // pred_region
      _
    $region37: #{tpu_custom_call.1} parent=1 // pred_fallthru
      _
    // Predicated region
    $region38: #{tpu_custom_call.1} parent=1 // pred_check
      _
    $region39: #{tpu_custom_call.1} parent=1 // pred_check_branch
      %41 = sbr.rel (0) target = $region41
    $region40: #{tpu_custom_call.1} parent=1 // pred_region
      _
    $region41: #{tpu_custom_call.1} parent=1 // pred_fallthru
      _
    // Predicated region
    $region42: #{tpu_custom_call.1} parent=1 // pred_check
      _
    $region43: #{tpu_custom_call.1} parent=1 // pred_check_branch
      %43 = sbr.rel (0) target = $region45
    $region44: #{tpu_custom_call.1} parent=1 // pred_region
      _
    $region45: #{tpu_custom_call.1} parent=1 // pred_fallthru
      _
    // Predicated region
    $region46: #{tpu_custom_call.1} parent=1 // pred_check
      _
    $region47: #{tpu_custom_call.1} parent=1 // pred_check_branch
      %45 = sbr.rel (0) target = $region49
    $region48: #{tpu_custom_call.1} parent=1 // pred_region
      _
    $region49: #{tpu_custom_call.1} parent=1 // pred_fallthru
      _
    // Predicated region
    $region50: #{tpu_custom_call.1} parent=1 // pred_check
      _
    $region51: #{tpu_custom_call.1} parent=1 // pred_check_branch
      %47 = sbr.rel (0) target = $region53
    $region52: #{tpu_custom_call.1} parent=1 // pred_region
      _
    $region53: #{tpu_custom_call.1} parent=1 // pred_fallthru
      _
    // Predicated region
    $region54: #{tpu_custom_call.1} parent=1 // pred_check
      _
    $region55: #{tpu_custom_call.1} parent=1 // pred_check_branch
      %49 = sbr.rel (0) target = $region57
    $region56: #{tpu_custom_call.1} parent=1 // pred_region
      _
    $region57: #{tpu_custom_call.1} parent=1 // pred_fallthru
      _
    // Predicated region
    $region58: #{tpu_custom_call.1} parent=1 // pred_check
      _
    $region59: #{tpu_custom_call.1} parent=1 // pred_check_branch
      %51 = sbr.rel (0) target = $region61
    $region60: #{tpu_custom_call.1} parent=1 // pred_region
      _
    $region61: #{tpu_custom_call.1} parent=1 // pred_fallthru
      _
    // Predicated region
    $region62: #{tpu_custom_call.1} parent=1 // pred_check
      _
    $region63: #{tpu_custom_call.1} parent=1 // pred_check_branch
      %53 = sbr.rel (0) target = $region65
    $region64: #{tpu_custom_call.1} parent=1 // pred_region
      _
    $region65: #{tpu_custom_call.1} parent=1 // pred_fallthru
      _
    %v55 = vld [vmem:[%s1] sm:$0xff]
    %v56 = vld [vmem:[%s1 + $0x8] sm:$0xff]
    %v57 = vld [vmem:[%s0] sm:$0xff]
    %v58 = vld [vmem:[%s0 + $0x8] sm:$0xff]
    %v59 = vld [vmem:[%s0 + $0x10] sm:$0xff]
    %v60 = vld [vmem:[%s0 + $0x18] sm:$0xff]
    %v61 = vld [vmem:[%s3] sm:$0xff]
    %v62 = vld [vmem:[%s3 + $0x8] sm:$0xff]
    %v63 = vld [vmem:[%s4] sm:$0xff]
    %v64 = vld [vmem:[%s4 + $0x8] sm:$0xff]
    %v65 = vld [vmem:[%s2] sm:$0xf]
    %v66 = vld [vmem:[%s2 + $0x4] sm:$0xf]
    %s67 = scalar_lea.vmem %s2, 8
    %v68 = vld [vmem:[%s67] sm:$0xf]
    %v69 = vld [vmem:[%s67 + $0x4] sm:$0xf]
    %v72 = vunpack.c.l.b16 %v68
    %v73 = vunpack.c.l.b16 %v69
    %v74 = vpack.c.b16 %v73, %v72
    %v79 = vcombine.high %v57, %v57
    %v81 = vunpack.c.l.s4 1983009808
    %v82 = vunpack.c.0.s8 %v81
    %v83 = vlaneseq
    %v84 = vshrl.u32 %v83, 7
    %v85 = vsub.s32 %v82, %v84
    %v86 = vrot.slane %v57, %v85
    %v88 = vunpack.c.l.s4 1983009808
    %v89 = vunpack.c.0.s8 %v88
    %v90 = vlaneseq
    %v91 = vshrl.u32 %v90, 7
    %v92 = vsub.s32 %v89, %v91
    %v93 = vrot.slane %v79, %v92
    %v94 = vcombine.high %v86, %v86
    %v95 = vcombine.high %v93, %v93
    %v96 = vcombine.high %v58, %v58
    %v98 = vunpack.c.l.s4 1983009808
    %v99 = vunpack.c.0.s8 %v98
    %v100 = vlaneseq
    %v101 = vshrl.u32 %v100, 7
    %v102 = vsub.s32 %v99, %v101
    %v103 = vrot.slane %v58, %v102
    %v105 = vunpack.c.l.s4 1983009808
    %v106 = vunpack.c.0.s8 %v105
    %v107 = vlaneseq
    %v108 = vshrl.u32 %v107, 7
    %v109 = vsub.s32 %v106, %v108
    %v110 = vrot.slane %v96, %v109
    %v111 = vcombine.high %v103, %v103
    %v112 = vcombine.high %v110, %v110
    %v113 = vcombine.high %v59, %v59
    %v115 = vunpack.c.l.s4 1983009808
    %v116 = vunpack.c.0.s8 %v115
    %v117 = vlaneseq
    %v118 = vshrl.u32 %v117, 7
    %v119 = vsub.s32 %v116, %v118
    %v120 = vrot.slane %v59, %v119
    %v122 = vunpack.c.l.s4 1983009808
    %v123 = vunpack.c.0.s8 %v122
    %v124 = vlaneseq
    %v125 = vshrl.u32 %v124, 7
    %v126 = vsub.s32 %v123, %v125
    %v127 = vrot.slane %v113, %v126
    %v128 = vcombine.high %v120, %v120
    %v129 = vcombine.high %v127, %v127
    %v130 = vcombine.high %v60, %v60
    %v132 = vunpack.c.l.s4 1983009808
    %v133 = vunpack.c.0.s8 %v132
    %v134 = vlaneseq
    %v135 = vshrl.u32 %v134, 7
    %v136 = vsub.s32 %v133, %v135
    %v137 = vrot.slane %v60, %v136
    %v139 = vunpack.c.l.s4 1983009808
    %v140 = vunpack.c.0.s8 %v139
    %v141 = vlaneseq
    %v142 = vshrl.u32 %v141, 7
    %v143 = vsub.s32 %v140, %v142
    %v144 = vrot.slane %v130, %v143
    %v145 = vcombine.high %v137, %v137
    %vm146 = vcmask 31744
    %v148 = vsel %vm146, %v74, 0
    %vm150 = vcmask 1041408
    %v152 = vsel %vm150, %v94, 0
    %v155 = vsel %vm150, %v93, 0
    %v158 = vsel %vm150, %v95, 0
    %v161 = vsel %vm150, %v103, 0
    %v164 = vsel %vm150, %v111, 0
    %v167 = vsel %vm150, %v110, 0
    %v170 = vsel %vm150, %v112, 0
    %v173 = vsel %vm150, %v120, 0
    %v176 = vsel %vm150, %v128, 0
    %v179 = vsel %vm150, %v127, 0
    %v182 = vsel %vm150, %v129, 0
    %v185 = vsel %vm150, %v137, 0
    %v188 = vsel %vm150, %v145, 0
    %v191 = vsel %vm150, %v144, 0
    %193 = vmatprep.subr.bf16.mxu0 0
    %194 = vmatpush1.bf16.msra.mxu0 0
    %195 = vmatprep.subr.bf16.mxu0 0
    %196 = vmatpush1.bf16.msra.mxu0 0
    %197 = vmatprep.subr.bf16.mxu0 0
    %198 = vmatpush1.bf16.msra.mxu0 0
    %199 = vmatprep.subr.bf16.mxu0 0
    %200 = vmatpush1.bf16.msra.mxu0 0
    %201 = vmatprep.subr.bf16.mxu0 0
    %202 = vmatpush1.bf16.msra.mxu0 0
    %203 = vmatprep.subr.bf16.mxu0 0
    %204 = vmatpush1.bf16.msra.mxu0 0
    %205 = vmatprep.subr.bf16.mxu0 0
    %206 = vmatpush1.bf16.msra.mxu0 0
    %207 = vmatprep.subr.bf16.mxu0 %v155
    %208 = vmatpush1.bf16.msra.mxu0 %v152
    %209 = vmatprep.subr.bf16.mxu0 0
    %210 = vmatpush2.bf16.msra.mxu0 0
    %211 = vmatprep.subr.bf16.mxu0 0
    %212 = vmatpush2.bf16.msra.mxu0 0
    %213 = vmatprep.subr.bf16.mxu0 0
    %214 = vmatpush2.bf16.msra.mxu0 0
    %215 = vmatprep.subr.bf16.mxu0 0
    %216 = vmatpush2.bf16.msra.mxu0 0
    %217 = vmatprep.subr.bf16.mxu0 0
    %218 = vmatpush2.bf16.msra.mxu0 0
    %219 = vmatprep.subr.bf16.mxu0 0
    %220 = vmatpush2.bf16.msra.mxu0 0
    %221 = vmatprep.subr.bf16.mxu0 0
    %222 = vmatpush2.bf16.msra.mxu0 0
    %223 = vmatprep.subr.bf16.mxu0 0
    %224 = vmatpush2.bf16.msra.mxu0 0
    %225 = vmatprep.mubr.bf16.mxu0 0
    %226 = vmatmul.mubr.bf16.gmra.mxu0 %v148
    %v227 = vpop.f32.mrf.mxu0
    %v228 = vadd.f32 0.0, %v227
    %v229 = vpop.f32.mrf.mxu0
    %v230 = vadd.f32 0.0, %v229
    %v231 = vpop.f32.mrf.mxu0
    %v232 = vadd.f32 0.0, %v231
    %v233 = vpop.f32.mrf.mxu0
    %v234 = vadd.f32 0.0, %v233
    %235 = vdwg.mxu0
    %236 = vmatprep.subr.bf16.mxu0 0
    %237 = vmatpush1.bf16.msra.mxu0 0
    %238 = vmatprep.subr.bf16.mxu0 0
    %239 = vmatpush1.bf16.msra.mxu0 0
    %240 = vmatprep.subr.bf16.mxu0 0
    %241 = vmatpush1.bf16.msra.mxu0 0
    %242 = vmatprep.subr.bf16.mxu0 0
    %243 = vmatpush1.bf16.msra.mxu0 0
    %244 = vmatprep.subr.bf16.mxu0 0
    %245 = vmatpush1.bf16.msra.mxu0 0
    %246 = vmatprep.subr.bf16.mxu0 0
    %247 = vmatpush1.bf16.msra.mxu0 0
    %248 = vmatprep.subr.bf16.mxu0 0
    %249 = vmatpush1.bf16.msra.mxu0 0
    %250 = vmatprep.subr.bf16.mxu0 %v161
    %251 = vmatpush1.bf16.msra.mxu0 %v158
    %252 = vmatprep.subr.bf16.mxu0 0
    %253 = vmatpush2.bf16.msra.mxu0 0
    %254 = vmatprep.subr.bf16.mxu0 0
    %255 = vmatpush2.bf16.msra.mxu0 0
    %256 = vmatprep.subr.bf16.mxu0 0
    %257 = vmatpush2.bf16.msra.mxu0 0
    %258 = vmatprep.subr.bf16.mxu0 0
    %259 = vmatpush2.bf16.msra.mxu0 0
    %260 = vmatprep.subr.bf16.mxu0 0
    %261 = vmatpush2.bf16.msra.mxu0 0
    %262 = vmatprep.subr.bf16.mxu0 0
    %263 = vmatpush2.bf16.msra.mxu0 0
    %264 = vmatprep.subr.bf16.mxu0 0
    %265 = vmatpush2.bf16.msra.mxu0 0
    %266 = vmatprep.subr.bf16.mxu0 0
    %267 = vmatpush2.bf16.msra.mxu0 0
    %268 = vmatprep.mubr.bf16.mxu0 0
    %269 = vmatmul.mubr.bf16.gmra.mxu0 %v148
    %v270 = vpop.f32.mrf.mxu0
    %v271 = vadd.f32 0.0, %v270
    %v272 = vpop.f32.mrf.mxu0
    %v273 = vadd.f32 0.0, %v272
    %v274 = vpop.f32.mrf.mxu0
    %v275 = vadd.f32 0.0, %v274
    %v276 = vpop.f32.mrf.mxu0
    %v277 = vadd.f32 0.0, %v276
    %278 = vdwg.mxu0
    %279 = vmatprep.subr.bf16.mxu0 0
    %280 = vmatpush1.bf16.msra.mxu0 0
    %281 = vmatprep.subr.bf16.mxu0 0
    %282 = vmatpush1.bf16.msra.mxu0 0
    %283 = vmatprep.subr.bf16.mxu0 0
    %284 = vmatpush1.bf16.msra.mxu0 0
    %285 = vmatprep.subr.bf16.mxu0 0
    %286 = vmatpush1.bf16.msra.mxu0 0
    %287 = vmatprep.subr.bf16.mxu0 0
    %288 = vmatpush1.bf16.msra.mxu0 0
    %289 = vmatprep.subr.bf16.mxu0 0
    %290 = vmatpush1.bf16.msra.mxu0 0
    %291 = vmatprep.subr.bf16.mxu0 0
    %292 = vmatpush1.bf16.msra.mxu0 0
    %293 = vmatprep.subr.bf16.mxu0 %v167
    %294 = vmatpush1.bf16.msra.mxu0 %v164
    %295 = vmatprep.subr.bf16.mxu0 0
    %296 = vmatpush2.bf16.msra.mxu0 0
    %297 = vmatprep.subr.bf16.mxu0 0
    %298 = vmatpush2.bf16.msra.mxu0 0
    %299 = vmatprep.subr.bf16.mxu0 0
    %300 = vmatpush2.bf16.msra.mxu0 0
    %301 = vmatprep.subr.bf16.mxu0 0
    %302 = vmatpush2.bf16.msra.mxu0 0
    %303 = vmatprep.subr.bf16.mxu0 0
    %304 = vmatpush2.bf16.msra.mxu0 0
    %305 = vmatprep.subr.bf16.mxu0 0
    %306 = vmatpush2.bf16.msra.mxu0 0
    %307 = vmatprep.subr.bf16.mxu0 0
    %308 = vmatpush2.bf16.msra.mxu0 0
    %309 = vmatprep.subr.bf16.mxu0 0
    %310 = vmatpush2.bf16.msra.mxu0 0
    %311 = vmatprep.mubr.bf16.mxu0 0
    %312 = vmatmul.mubr.bf16.gmra.mxu0 %v148
    %v313 = vpop.f32.mrf.mxu0
    %v314 = vadd.f32 0.0, %v313
    %v315 = vpop.f32.mrf.mxu0
    %v316 = vadd.f32 0.0, %v315
    %v317 = vpop.f32.mrf.mxu0
    %v318 = vadd.f32 0.0, %v317
    %v319 = vpop.f32.mrf.mxu0
    %v320 = vadd.f32 0.0, %v319
    %321 = vdwg.mxu0
    %322 = vmatprep.subr.bf16.mxu0 0
    %323 = vmatpush1.bf16.msra.mxu0 0
    %324 = vmatprep.subr.bf16.mxu0 0
    %325 = vmatpush1.bf16.msra.mxu0 0
    %326 = vmatprep.subr.bf16.mxu0 0
    %327 = vmatpush1.bf16.msra.mxu0 0
    %328 = vmatprep.subr.bf16.mxu0 0
    %329 = vmatpush1.bf16.msra.mxu0 0
    %330 = vmatprep.subr.bf16.mxu0 0
    %331 = vmatpush1.bf16.msra.mxu0 0
    %332 = vmatprep.subr.bf16.mxu0 0
    %333 = vmatpush1.bf16.msra.mxu0 0
    %334 = vmatprep.subr.bf16.mxu0 0
    %335 = vmatpush1.bf16.msra.mxu0 0
    %336 = vmatprep.subr.bf16.mxu0 %v173
    %337 = vmatpush1.bf16.msra.mxu0 %v170
    %338 = vmatprep.subr.bf16.mxu0 0
    %339 = vmatpush2.bf16.msra.mxu0 0
    %340 = vmatprep.subr.bf16.mxu0 0
    %341 = vmatpush2.bf16.msra.mxu0 0
    %342 = vmatprep.subr.bf16.mxu0 0
    %343 = vmatpush2.bf16.msra.mxu0 0
    %344 = vmatprep.subr.bf16.mxu0 0
    %345 = vmatpush2.bf16.msra.mxu0 0
    %346 = vmatprep.subr.bf16.mxu0 0
    %347 = vmatpush2.bf16.msra.mxu0 0
    %348 = vmatprep.subr.bf16.mxu0 0
    %349 = vmatpush2.bf16.msra.mxu0 0
    %350 = vmatprep.subr.bf16.mxu0 0
    %351 = vmatpush2.bf16.msra.mxu0 0
    %352 = vmatprep.subr.bf16.mxu0 0
    %353 = vmatpush2.bf16.msra.mxu0 0
    %354 = vmatprep.mubr.bf16.mxu0 0
    %355 = vmatmul.mubr.bf16.gmra.mxu0 %v148
    %v356 = vpop.f32.mrf.mxu0
    %v357 = vadd.f32 0.0, %v356
    %v358 = vpop.f32.mrf.mxu0
    %v359 = vadd.f32 0.0, %v358
    %v360 = vpop.f32.mrf.mxu0
    %v361 = vadd.f32 0.0, %v360
    %v362 = vpop.f32.mrf.mxu0
    %v363 = vadd.f32 0.0, %v362
    %364 = vdwg.mxu0
    %365 = vmatprep.subr.bf16.mxu0 0
    %366 = vmatpush1.bf16.msra.mxu0 0
    %367 = vmatprep.subr.bf16.mxu0 0
    %368 = vmatpush1.bf16.msra.mxu0 0
    %369 = vmatprep.subr.bf16.mxu0 0
    %370 = vmatpush1.bf16.msra.mxu0 0
    %371 = vmatprep.subr.bf16.mxu0 0
    %372 = vmatpush1.bf16.msra.mxu0 0
    %373 = vmatprep.subr.bf16.mxu0 0
    %374 = vmatpush1.bf16.msra.mxu0 0
    %375 = vmatprep.subr.bf16.mxu0 0
    %376 = vmatpush1.bf16.msra.mxu0 0
    %377 = vmatprep.subr.bf16.mxu0 0
    %378 = vmatpush1.bf16.msra.mxu0 0
    %379 = vmatprep.subr.bf16.mxu0 %v179
    %380 = vmatpush1.bf16.msra.mxu0 %v176
    %381 = vmatprep.subr.bf16.mxu0 0
    %382 = vmatpush2.bf16.msra.mxu0 0
    %383 = vmatprep.subr.bf16.mxu0 0
    %384 = vmatpush2.bf16.msra.mxu0 0
    %385 = vmatprep.subr.bf16.mxu0 0
    %386 = vmatpush2.bf16.msra.mxu0 0
    %387 = vmatprep.subr.bf16.mxu0 0
    %388 = vmatpush2.bf16.msra.mxu0 0
    %389 = vmatprep.subr.bf16.mxu0 0
    %390 = vmatpush2.bf16.msra.mxu0 0
    %391 = vmatprep.subr.bf16.mxu0 0
    %392 = vmatpush2.bf16.msra.mxu0 0
    %393 = vmatprep.subr.bf16.mxu0 0
    %394 = vmatpush2.bf16.msra.mxu0 0
    %395 = vmatprep.subr.bf16.mxu0 0
    %396 = vmatpush2.bf16.msra.mxu0 0
    %397 = vmatprep.mubr.bf16.mxu0 0
    %398 = vmatmul.mubr.bf16.gmra.mxu0 %v148
    %v399 = vpop.f32.mrf.mxu0
    %v400 = vadd.f32 0.0, %v399
    %v401 = vpop.f32.mrf.mxu0
    %v402 = vadd.f32 0.0, %v401
    %v403 = vpop.f32.mrf.mxu0
    %v404 = vadd.f32 0.0, %v403
    %v405 = vpop.f32.mrf.mxu0
    %v406 = vadd.f32 0.0, %v405
    %407 = vdwg.mxu0
    %408 = vmatprep.subr.bf16.mxu0 0
    %409 = vmatpush1.bf16.msra.mxu0 0
    %410 = vmatprep.subr.bf16.mxu0 0
    %411 = vmatpush1.bf16.msra.mxu0 0
    %412 = vmatprep.subr.bf16.mxu0 0
    %413 = vmatpush1.bf16.msra.mxu0 0
    %414 = vmatprep.subr.bf16.mxu0 0
    %415 = vmatpush1.bf16.msra.mxu0 0
    %416 = vmatprep.subr.bf16.mxu0 0
    %417 = vmatpush1.bf16.msra.mxu0 0
    %418 = vmatprep.subr.bf16.mxu0 0
    %419 = vmatpush1.bf16.msra.mxu0 0
    %420 = vmatprep.subr.bf16.mxu0 0
    %421 = vmatpush1.bf16.msra.mxu0 0
    %422 = vmatprep.subr.bf16.mxu0 %v185
    %423 = vmatpush1.bf16.msra.mxu0 %v182
    %424 = vmatprep.subr.bf16.mxu0 0
    %425 = vmatpush2.bf16.msra.mxu0 0
    %426 = vmatprep.subr.bf16.mxu0 0
    %427 = vmatpush2.bf16.msra.mxu0 0
    %428 = vmatprep.subr.bf16.mxu0 0
    %429 = vmatpush2.bf16.msra.mxu0 0
    %430 = vmatprep.subr.bf16.mxu0 0
    %431 = vmatpush2.bf16.msra.mxu0 0
    %432 = vmatprep.subr.bf16.mxu0 0
    %433 = vmatpush2.bf16.msra.mxu0 0
    %434 = vmatprep.subr.bf16.mxu0 0
    %435 = vmatpush2.bf16.msra.mxu0 0
    %436 = vmatprep.subr.bf16.mxu0 0
    %437 = vmatpush2.bf16.msra.mxu0 0
    %438 = vmatprep.subr.bf16.mxu0 0
    %439 = vmatpush2.bf16.msra.mxu0 0
    %440 = vmatprep.mubr.bf16.mxu0 0
    %441 = vmatmul.mubr.bf16.gmra.mxu0 %v148
    %v442 = vpop.f32.mrf.mxu0
    %v443 = vadd.f32 0.0, %v442
    %v444 = vpop.f32.mrf.mxu0
    %v445 = vadd.f32 0.0, %v444
    %v446 = vpop.f32.mrf.mxu0
    %v447 = vadd.f32 0.0, %v446
    %v448 = vpop.f32.mrf.mxu0
    %v449 = vadd.f32 0.0, %v448
    %450 = vdwg.mxu0
    %451 = vmatprep.subr.bf16.mxu0 0
    %452 = vmatpush1.bf16.msra.mxu0 0
    %453 = vmatprep.subr.bf16.mxu0 0
    %454 = vmatpush1.bf16.msra.mxu0 0
    %455 = vmatprep.subr.bf16.mxu0 0
    %456 = vmatpush1.bf16.msra.mxu0 0
    %457 = vmatprep.subr.bf16.mxu0 0
    %458 = vmatpush1.bf16.msra.mxu0 0
    %459 = vmatprep.subr.bf16.mxu0 0
    %460 = vmatpush1.bf16.msra.mxu0 0
    %461 = vmatprep.subr.bf16.mxu0 0
    %462 = vmatpush1.bf16.msra.mxu0 0
    %463 = vmatprep.subr.bf16.mxu0 0
    %464 = vmatpush1.bf16.msra.mxu0 0
    %465 = vmatprep.subr.bf16.mxu0 %v191
    %466 = vmatpush1.bf16.msra.mxu0 %v188
    %467 = vmatprep.subr.bf16.mxu0 0
    %468 = vmatpush2.bf16.msra.mxu0 0
    %469 = vmatprep.subr.bf16.mxu0 0
    %470 = vmatpush2.bf16.msra.mxu0 0
    %471 = vmatprep.subr.bf16.mxu0 0
    %472 = vmatpush2.bf16.msra.mxu0 0
    %473 = vmatprep.subr.bf16.mxu0 0
    %474 = vmatpush2.bf16.msra.mxu0 0
    %475 = vmatprep.subr.bf16.mxu0 0
    %476 = vmatpush2.bf16.msra.mxu0 0
    %477 = vmatprep.subr.bf16.mxu0 0
    %478 = vmatpush2.bf16.msra.mxu0 0
    %479 = vmatprep.subr.bf16.mxu0 0
    %480 = vmatpush2.bf16.msra.mxu0 0
    %481 = vmatprep.subr.bf16.mxu0 0
    %482 = vmatpush2.bf16.msra.mxu0 0
    %483 = vmatprep.mubr.bf16.mxu0 0
    %484 = vmatmul.mubr.bf16.gmra.mxu0 %v148
    %v485 = vpop.f32.mrf.mxu0
    %v486 = vadd.f32 0.0, %v485
    %v487 = vpop.f32.mrf.mxu0
    %v488 = vadd.f32 0.0, %v487
    %v489 = vpop.f32.mrf.mxu0
    %v490 = vadd.f32 0.0, %v489
    %v491 = vpop.f32.mrf.mxu0
    %v492 = vadd.f32 0.0, %v491
    %493 = vdwg.mxu0
    %v496 = vunpack.c.l.b16 %v65
    %v497 = vunpack.c.l.b16 %v66
    %v498 = vpack.c.b16 %v497, %v496
    %v500 = vsel %vm146, %v498, 0
    %v503 = vsel %vm150, %v86, 0
    %505 = vmatprep.subr.bf16.mxu0 0
    %506 = vmatpush1.bf16.msra.mxu0 0
    %507 = vmatprep.subr.bf16.mxu0 0
    %508 = vmatpush1.bf16.msra.mxu0 0
    %509 = vmatprep.subr.bf16.mxu0 0
    %510 = vmatpush1.bf16.msra.mxu0 0
    %511 = vmatprep.subr.bf16.mxu0 0
    %512 = vmatpush1.bf16.msra.mxu0 0
    %513 = vmatprep.subr.bf16.mxu0 0
    %514 = vmatpush1.bf16.msra.mxu0 0
    %515 = vmatprep.subr.bf16.mxu0 0
    %516 = vmatpush1.bf16.msra.mxu0 0
    %517 = vmatprep.subr.bf16.mxu0 0
    %518 = vmatpush1.bf16.msra.mxu0 0
    %519 = vmatprep.subr.bf16.mxu0 %v152
    %520 = vmatpush1.bf16.msra.mxu0 %v503
    %521 = vmatprep.subr.bf16.mxu0 0
    %522 = vmatpush2.bf16.msra.mxu0 0
    %523 = vmatprep.subr.bf16.mxu0 0
    %524 = vmatpush2.bf16.msra.mxu0 0
    %525 = vmatprep.subr.bf16.mxu0 0
    %526 = vmatpush2.bf16.msra.mxu0 0
    %527 = vmatprep.subr.bf16.mxu0 0
    %528 = vmatpush2.bf16.msra.mxu0 0
    %529 = vmatprep.subr.bf16.mxu0 0
    %530 = vmatpush2.bf16.msra.mxu0 0
    %531 = vmatprep.subr.bf16.mxu0 0
    %532 = vmatpush2.bf16.msra.mxu0 0
    %533 = vmatprep.subr.bf16.mxu0 0
    %534 = vmatpush2.bf16.msra.mxu0 0
    %535 = vmatprep.subr.bf16.mxu0 0
    %536 = vmatpush2.bf16.msra.mxu0 0
    %537 = vmatprep.mubr.bf16.mxu0 0
    %538 = vmatmul.mubr.bf16.gmra.mxu0 %v500
    %v539 = vpop.f32.mrf.mxu0
    %v540 = vadd.f32 %v228, %v539
    %v541 = vpop.f32.mrf.mxu0
    %v542 = vadd.f32 %v230, %v541
    %v543 = vpop.f32.mrf.mxu0
    %v544 = vadd.f32 %v232, %v543
    %v545 = vpop.f32.mrf.mxu0
    %v546 = vadd.f32 %v234, %v545
    %547 = vdwg.mxu0
    %548 = vmatprep.subr.bf16.mxu0 0
    %549 = vmatpush1.bf16.msra.mxu0 0
    %550 = vmatprep.subr.bf16.mxu0 0
    %551 = vmatpush1.bf16.msra.mxu0 0
    %552 = vmatprep.subr.bf16.mxu0 0
    %553 = vmatpush1.bf16.msra.mxu0 0
    %554 = vmatprep.subr.bf16.mxu0 0
    %555 = vmatpush1.bf16.msra.mxu0 0
    %556 = vmatprep.subr.bf16.mxu0 0
    %557 = vmatpush1.bf16.msra.mxu0 0
    %558 = vmatprep.subr.bf16.mxu0 0
    %559 = vmatpush1.bf16.msra.mxu0 0
    %560 = vmatprep.subr.bf16.mxu0 0
    %561 = vmatpush1.bf16.msra.mxu0 0
    %562 = vmatprep.subr.bf16.mxu0 %v158
    %563 = vmatpush1.bf16.msra.mxu0 %v155
    %564 = vmatprep.subr.bf16.mxu0 0
    %565 = vmatpush2.bf16.msra.mxu0 0
    %566 = vmatprep.subr.bf16.mxu0 0
    %567 = vmatpush2.bf16.msra.mxu0 0
    %568 = vmatprep.subr.bf16.mxu0 0
    %569 = vmatpush2.bf16.msra.mxu0 0
    %570 = vmatprep.subr.bf16.mxu0 0
    %571 = vmatpush2.bf16.msra.mxu0 0
    %572 = vmatprep.subr.bf16.mxu0 0
    %573 = vmatpush2.bf16.msra.mxu0 0
    %574 = vmatprep.subr.bf16.mxu0 0
    %575 = vmatpush2.bf16.msra.mxu0 0
    %576 = vmatprep.subr.bf16.mxu0 0
    %577 = vmatpush2.bf16.msra.mxu0 0
    %578 = vmatprep.subr.bf16.mxu0 0
    %579 = vmatpush2.bf16.msra.mxu0 0
    %580 = vmatprep.mubr.bf16.mxu0 0
    %581 = vmatmul.mubr.bf16.gmra.mxu0 %v500
    %v582 = vpop.f32.mrf.mxu0
    %v583 = vadd.f32 %v271, %v582
    %v584 = vpop.f32.mrf.mxu0
    %v585 = vadd.f32 %v273, %v584
    %v586 = vpop.f32.mrf.mxu0
    %v587 = vadd.f32 %v275, %v586
    %v588 = vpop.f32.mrf.mxu0
    %v589 = vadd.f32 %v277, %v588
    %590 = vdwg.mxu0
    %591 = vmatprep.subr.bf16.mxu0 0
    %592 = vmatpush1.bf16.msra.mxu0 0
    %593 = vmatprep.subr.bf16.mxu0 0
    %594 = vmatpush1.bf16.msra.mxu0 0
    %595 = vmatprep.subr.bf16.mxu0 0
    %596 = vmatpush1.bf16.msra.mxu0 0
    %597 = vmatprep.subr.bf16.mxu0 0
    %598 = vmatpush1.bf16.msra.mxu0 0
    %599 = vmatprep.subr.bf16.mxu0 0
    %600 = vmatpush1.bf16.msra.mxu0 0
    %601 = vmatprep.subr.bf16.mxu0 0
    %602 = vmatpush1.bf16.msra.mxu0 0
    %603 = vmatprep.subr.bf16.mxu0 0
    %604 = vmatpush1.bf16.msra.mxu0 0
    %605 = vmatprep.subr.bf16.mxu0 %v164
    %606 = vmatpush1.bf16.msra.mxu0 %v161
    %607 = vmatprep.subr.bf16.mxu0 0
    %608 = vmatpush2.bf16.msra.mxu0 0
    %609 = vmatprep.subr.bf16.mxu0 0
    %610 = vmatpush2.bf16.msra.mxu0 0
    %611 = vmatprep.subr.bf16.mxu0 0
    %612 = vmatpush2.bf16.msra.mxu0 0
    %613 = vmatprep.subr.bf16.mxu0 0
    %614 = vmatpush2.bf16.msra.mxu0 0
    %615 = vmatprep.subr.bf16.mxu0 0
    %616 = vmatpush2.bf16.msra.mxu0 0
    %617 = vmatprep.subr.bf16.mxu0 0
    %618 = vmatpush2.bf16.msra.mxu0 0
    %619 = vmatprep.subr.bf16.mxu0 0
    %620 = vmatpush2.bf16.msra.mxu0 0
    %621 = vmatprep.subr.bf16.mxu0 0
    %622 = vmatpush2.bf16.msra.mxu0 0
    %623 = vmatprep.mubr.bf16.mxu0 0
    %624 = vmatmul.mubr.bf16.gmra.mxu0 %v500
    %v625 = vpop.f32.mrf.mxu0
    %v626 = vadd.f32 %v314, %v625
    %v627 = vpop.f32.mrf.mxu0
    %v628 = vadd.f32 %v316, %v627
    %v629 = vpop.f32.mrf.mxu0
    %v630 = vadd.f32 %v318, %v629
    %v631 = vpop.f32.mrf.mxu0
    %v632 = vadd.f32 %v320, %v631
    %633 = vdwg.mxu0
    %634 = vmatprep.subr.bf16.mxu0 0
    %635 = vmatpush1.bf16.msra.mxu0 0
    %636 = vmatprep.subr.bf16.mxu0 0
    %637 = vmatpush1.bf16.msra.mxu0 0
    %638 = vmatprep.subr.bf16.mxu0 0
    %639 = vmatpush1.bf16.msra.mxu0 0
    %640 = vmatprep.subr.bf16.mxu0 0
    %641 = vmatpush1.bf16.msra.mxu0 0
    %642 = vmatprep.subr.bf16.mxu0 0
    %643 = vmatpush1.bf16.msra.mxu0 0
    %644 = vmatprep.subr.bf16.mxu0 0
    %645 = vmatpush1.bf16.msra.mxu0 0
    %646 = vmatprep.subr.bf16.mxu0 0
    %647 = vmatpush1.bf16.msra.mxu0 0
    %648 = vmatprep.subr.bf16.mxu0 %v170
    %649 = vmatpush1.bf16.msra.mxu0 %v167
    %650 = vmatprep.subr.bf16.mxu0 0
    %651 = vmatpush2.bf16.msra.mxu0 0
    %652 = vmatprep.subr.bf16.mxu0 0
    %653 = vmatpush2.bf16.msra.mxu0 0
    %654 = vmatprep.subr.bf16.mxu0 0
    %655 = vmatpush2.bf16.msra.mxu0 0
    %656 = vmatprep.subr.bf16.mxu0 0
    %657 = vmatpush2.bf16.msra.mxu0 0
    %658 = vmatprep.subr.bf16.mxu0 0
    %659 = vmatpush2.bf16.msra.mxu0 0
    %660 = vmatprep.subr.bf16.mxu0 0
    %661 = vmatpush2.bf16.msra.mxu0 0
    %662 = vmatprep.subr.bf16.mxu0 0
    %663 = vmatpush2.bf16.msra.mxu0 0
    %664 = vmatprep.subr.bf16.mxu0 0
    %665 = vmatpush2.bf16.msra.mxu0 0
    %666 = vmatprep.mubr.bf16.mxu0 0
    %667 = vmatmul.mubr.bf16.gmra.mxu0 %v500
    %v668 = vpop.f32.mrf.mxu0
    %v669 = vadd.f32 %v357, %v668
    %v670 = vpop.f32.mrf.mxu0
    %v671 = vadd.f32 %v359, %v670
    %v672 = vpop.f32.mrf.mxu0
    %v673 = vadd.f32 %v361, %v672
    %v674 = vpop.f32.mrf.mxu0
    %v675 = vadd.f32 %v363, %v674
    %676 = vdwg.mxu0
    %677 = vmatprep.subr.bf16.mxu0 0
    %678 = vmatpush1.bf16.msra.mxu0 0
    %679 = vmatprep.subr.bf16.mxu0 0
    %680 = vmatpush1.bf16.msra.mxu0 0
    %681 = vmatprep.subr.bf16.mxu0 0
    %682 = vmatpush1.bf16.msra.mxu0 0
    %683 = vmatprep.subr.bf16.mxu0 0
    %684 = vmatpush1.bf16.msra.mxu0 0
    %685 = vmatprep.subr.bf16.mxu0 0
    %686 = vmatpush1.bf16.msra.mxu0 0
    %687 = vmatprep.subr.bf16.mxu0 0
    %688 = vmatpush1.bf16.msra.mxu0 0
    %689 = vmatprep.subr.bf16.mxu0 0
    %690 = vmatpush1.bf16.msra.mxu0 0
    %691 = vmatprep.subr.bf16.mxu0 %v176
    %692 = vmatpush1.bf16.msra.mxu0 %v173
    %693 = vmatprep.subr.bf16.mxu0 0
    %694 = vmatpush2.bf16.msra.mxu0 0
    %695 = vmatprep.subr.bf16.mxu0 0
    %696 = vmatpush2.bf16.msra.mxu0 0
    %697 = vmatprep.subr.bf16.mxu0 0
    %698 = vmatpush2.bf16.msra.mxu0 0
    %699 = vmatprep.subr.bf16.mxu0 0
    %700 = vmatpush2.bf16.msra.mxu0 0
    %701 = vmatprep.subr.bf16.mxu0 0
    %702 = vmatpush2.bf16.msra.mxu0 0
    %703 = vmatprep.subr.bf16.mxu0 0
    %704 = vmatpush2.bf16.msra.mxu0 0
    %705 = vmatprep.subr.bf16.mxu0 0
    %706 = vmatpush2.bf16.msra.mxu0 0
    %707 = vmatprep.subr.bf16.mxu0 0
    %708 = vmatpush2.bf16.msra.mxu0 0
    %709 = vmatprep.mubr.bf16.mxu0 0
    %710 = vmatmul.mubr.bf16.gmra.mxu0 %v500
    %v711 = vpop.f32.mrf.mxu0
    %v712 = vadd.f32 %v400, %v711
    %v713 = vpop.f32.mrf.mxu0
    %v714 = vadd.f32 %v402, %v713
    %v715 = vpop.f32.mrf.mxu0
    %v716 = vadd.f32 %v404, %v715
    %v717 = vpop.f32.mrf.mxu0
    %v718 = vadd.f32 %v406, %v717
    %719 = vdwg.mxu0
    %720 = vmatprep.subr.bf16.mxu0 0
    %721 = vmatpush1.bf16.msra.mxu0 0
    %722 = vmatprep.subr.bf16.mxu0 0
    %723 = vmatpush1.bf16.msra.mxu0 0
    %724 = vmatprep.subr.bf16.mxu0 0
    %725 = vmatpush1.bf16.msra.mxu0 0
    %726 = vmatprep.subr.bf16.mxu0 0
    %727 = vmatpush1.bf16.msra.mxu0 0
    %728 = vmatprep.subr.bf16.mxu0 0
    %729 = vmatpush1.bf16.msra.mxu0 0
    %730 = vmatprep.subr.bf16.mxu0 0
    %731 = vmatpush1.bf16.msra.mxu0 0
    %732 = vmatprep.subr.bf16.mxu0 0
    %733 = vmatpush1.bf16.msra.mxu0 0
    %734 = vmatprep.subr.bf16.mxu0 %v182
    %735 = vmatpush1.bf16.msra.mxu0 %v179
    %736 = vmatprep.subr.bf16.mxu0 0
    %737 = vmatpush2.bf16.msra.mxu0 0
    %738 = vmatprep.subr.bf16.mxu0 0
    %739 = vmatpush2.bf16.msra.mxu0 0
    %740 = vmatprep.subr.bf16.mxu0 0
    %741 = vmatpush2.bf16.msra.mxu0 0
    %742 = vmatprep.subr.bf16.mxu0 0
    %743 = vmatpush2.bf16.msra.mxu0 0
    %744 = vmatprep.subr.bf16.mxu0 0
    %745 = vmatpush2.bf16.msra.mxu0 0
    %746 = vmatprep.subr.bf16.mxu0 0
    %747 = vmatpush2.bf16.msra.mxu0 0
    %748 = vmatprep.subr.bf16.mxu0 0
    %749 = vmatpush2.bf16.msra.mxu0 0
    %750 = vmatprep.subr.bf16.mxu0 0
    %751 = vmatpush2.bf16.msra.mxu0 0
    %752 = vmatprep.mubr.bf16.mxu0 0
    %753 = vmatmul.mubr.bf16.gmra.mxu0 %v500
    %v754 = vpop.f32.mrf.mxu0
    %v755 = vadd.f32 %v443, %v754
    %v756 = vpop.f32.mrf.mxu0
    %v757 = vadd.f32 %v445, %v756
    %v758 = vpop.f32.mrf.mxu0
    %v759 = vadd.f32 %v447, %v758
    %v760 = vpop.f32.mrf.mxu0
    %v761 = vadd.f32 %v449, %v760
    %762 = vdwg.mxu0
    %763 = vmatprep.subr.bf16.mxu0 0
    %764 = vmatpush1.bf16.msra.mxu0 0
    %765 = vmatprep.subr.bf16.mxu0 0
    %766 = vmatpush1.bf16.msra.mxu0 0
    %767 = vmatprep.subr.bf16.mxu0 0
    %768 = vmatpush1.bf16.msra.mxu0 0
    %769 = vmatprep.subr.bf16.mxu0 0
    %770 = vmatpush1.bf16.msra.mxu0 0
    %771 = vmatprep.subr.bf16.mxu0 0
    %772 = vmatpush1.bf16.msra.mxu0 0
    %773 = vmatprep.subr.bf16.mxu0 0
    %774 = vmatpush1.bf16.msra.mxu0 0
    %775 = vmatprep.subr.bf16.mxu0 0
    %776 = vmatpush1.bf16.msra.mxu0 0
    %777 = vmatprep.subr.bf16.mxu0 %v188
    %778 = vmatpush1.bf16.msra.mxu0 %v185
    %779 = vmatprep.subr.bf16.mxu0 0
    %780 = vmatpush2.bf16.msra.mxu0 0
    %781 = vmatprep.subr.bf16.mxu0 0
    %782 = vmatpush2.bf16.msra.mxu0 0
    %783 = vmatprep.subr.bf16.mxu0 0
    %784 = vmatpush2.bf16.msra.mxu0 0
    %785 = vmatprep.subr.bf16.mxu0 0
    %786 = vmatpush2.bf16.msra.mxu0 0
    %787 = vmatprep.subr.bf16.mxu0 0
    %788 = vmatpush2.bf16.msra.mxu0 0
    %789 = vmatprep.subr.bf16.mxu0 0
    %790 = vmatpush2.bf16.msra.mxu0 0
    %791 = vmatprep.subr.bf16.mxu0 0
    %792 = vmatpush2.bf16.msra.mxu0 0
    %793 = vmatprep.subr.bf16.mxu0 0
    %794 = vmatpush2.bf16.msra.mxu0 0
    %795 = vmatprep.mubr.bf16.mxu0 0
    %796 = vmatmul.mubr.bf16.gmra.mxu0 %v500
    %v797 = vpop.f32.mrf.mxu0
    %v798 = vadd.f32 %v486, %v797
    %v799 = vpop.f32.mrf.mxu0
    %v800 = vadd.f32 %v488, %v799
    %v801 = vpop.f32.mrf.mxu0
    %v802 = vadd.f32 %v490, %v801
    %v803 = vpop.f32.mrf.mxu0
    %v804 = vadd.f32 %v492, %v803
    %805 = vdwg.mxu0
    %s806 = scalar_lea.vmem %s2, 16
    %v807 = vld [vmem:[%s806] sm:$0xf]
    %v808 = vld [vmem:[%s806 + $0x4] sm:$0xf]
    %v811 = vunpack.c.l.b16 %v807
    %v812 = vunpack.c.l.b16 %v808
    %v813 = vpack.c.b16 %v812, %v811
    %v814 = vcombine.high %v144, %v144
    %v816 = vsel %vm146, %v813, 0
    %v819 = vsel %vm150, %v814, 0
    %821 = vmatprep.subr.bf16.mxu0 0
    %822 = vmatpush1.bf16.msra.mxu0 0
    %823 = vmatprep.subr.bf16.mxu0 0
    %824 = vmatpush1.bf16.msra.mxu0 0
    %825 = vmatprep.subr.bf16.mxu0 0
    %826 = vmatpush1.bf16.msra.mxu0 0
    %827 = vmatprep.subr.bf16.mxu0 0
    %828 = vmatpush1.bf16.msra.mxu0 0
    %829 = vmatprep.subr.bf16.mxu0 0
    %830 = vmatpush1.bf16.msra.mxu0 0
    %831 = vmatprep.subr.bf16.mxu0 0
    %832 = vmatpush1.bf16.msra.mxu0 0
    %833 = vmatprep.subr.bf16.mxu0 0
    %834 = vmatpush1.bf16.msra.mxu0 0
    %835 = vmatprep.subr.bf16.mxu0 %v158
    %836 = vmatpush1.bf16.msra.mxu0 %v155
    %837 = vmatprep.subr.bf16.mxu0 0
    %838 = vmatpush2.bf16.msra.mxu0 0
    %839 = vmatprep.subr.bf16.mxu0 0
    %840 = vmatpush2.bf16.msra.mxu0 0
    %841 = vmatprep.subr.bf16.mxu0 0
    %842 = vmatpush2.bf16.msra.mxu0 0
    %843 = vmatprep.subr.bf16.mxu0 0
    %844 = vmatpush2.bf16.msra.mxu0 0
    %845 = vmatprep.subr.bf16.mxu0 0
    %846 = vmatpush2.bf16.msra.mxu0 0
    %847 = vmatprep.subr.bf16.mxu0 0
    %848 = vmatpush2.bf16.msra.mxu0 0
    %849 = vmatprep.subr.bf16.mxu0 0
    %850 = vmatpush2.bf16.msra.mxu0 0
    %851 = vmatprep.subr.bf16.mxu0 0
    %852 = vmatpush2.bf16.msra.mxu0 0
    %853 = vmatprep.mubr.bf16.mxu0 0
    %854 = vmatmul.mubr.bf16.gmra.mxu0 %v816
    %v855 = vpop.f32.mrf.mxu0
    %v856 = vadd.f32 0.0, %v855
    %v857 = vpop.f32.mrf.mxu0
    %v858 = vadd.f32 0.0, %v857
    %v859 = vpop.f32.mrf.mxu0
    %v860 = vadd.f32 0.0, %v859
    %v861 = vpop.f32.mrf.mxu0
    %v862 = vadd.f32 0.0, %v861
    %863 = vdwg.mxu0
    %864 = vmatprep.subr.bf16.mxu0 0
    %865 = vmatpush1.bf16.msra.mxu0 0
    %866 = vmatprep.subr.bf16.mxu0 0
    %867 = vmatpush1.bf16.msra.mxu0 0
    %868 = vmatprep.subr.bf16.mxu0 0
    %869 = vmatpush1.bf16.msra.mxu0 0
    %870 = vmatprep.subr.bf16.mxu0 0
    %871 = vmatpush1.bf16.msra.mxu0 0
    %872 = vmatprep.subr.bf16.mxu0 0
    %873 = vmatpush1.bf16.msra.mxu0 0
    %874 = vmatprep.subr.bf16.mxu0 0
    %875 = vmatpush1.bf16.msra.mxu0 0
    %876 = vmatprep.subr.bf16.mxu0 0
    %877 = vmatpush1.bf16.msra.mxu0 0
    %878 = vmatprep.subr.bf16.mxu0 %v164
    %879 = vmatpush1.bf16.msra.mxu0 %v161
    %880 = vmatprep.subr.bf16.mxu0 0
    %881 = vmatpush2.bf16.msra.mxu0 0
    %882 = vmatprep.subr.bf16.mxu0 0
    %883 = vmatpush2.bf16.msra.mxu0 0
    %884 = vmatprep.subr.bf16.mxu0 0
    %885 = vmatpush2.bf16.msra.mxu0 0
    %886 = vmatprep.subr.bf16.mxu0 0
    %887 = vmatpush2.bf16.msra.mxu0 0
    %888 = vmatprep.subr.bf16.mxu0 0
    %889 = vmatpush2.bf16.msra.mxu0 0
    %890 = vmatprep.subr.bf16.mxu0 0
    %891 = vmatpush2.bf16.msra.mxu0 0
    %892 = vmatprep.subr.bf16.mxu0 0
    %893 = vmatpush2.bf16.msra.mxu0 0
    %894 = vmatprep.subr.bf16.mxu0 0
    %895 = vmatpush2.bf16.msra.mxu0 0
    %896 = vmatprep.mubr.bf16.mxu0 0
    %897 = vmatmul.mubr.bf16.gmra.mxu0 %v816
    %v898 = vpop.f32.mrf.mxu0
    %v899 = vadd.f32 0.0, %v898
    %v900 = vpop.f32.mrf.mxu0
    %v901 = vadd.f32 0.0, %v900
    %v902 = vpop.f32.mrf.mxu0
    %v903 = vadd.f32 0.0, %v902
    %v904 = vpop.f32.mrf.mxu0
    %v905 = vadd.f32 0.0, %v904
    %906 = vdwg.mxu0
    %907 = vmatprep.subr.bf16.mxu0 0
    %908 = vmatpush1.bf16.msra.mxu0 0
    %909 = vmatprep.subr.bf16.mxu0 0
    %910 = vmatpush1.bf16.msra.mxu0 0
    %911 = vmatprep.subr.bf16.mxu0 0
    %912 = vmatpush1.bf16.msra.mxu0 0
    %913 = vmatprep.subr.bf16.mxu0 0
    %914 = vmatpush1.bf16.msra.mxu0 0
    %915 = vmatprep.subr.bf16.mxu0 0
    %916 = vmatpush1.bf16.msra.mxu0 0
    %917 = vmatprep.subr.bf16.mxu0 0
    %918 = vmatpush1.bf16.msra.mxu0 0
    %919 = vmatprep.subr.bf16.mxu0 0
    %920 = vmatpush1.bf16.msra.mxu0 0
    %921 = vmatprep.subr.bf16.mxu0 %v170
    %922 = vmatpush1.bf16.msra.mxu0 %v167
    %923 = vmatprep.subr.bf16.mxu0 0
    %924 = vmatpush2.bf16.msra.mxu0 0
    %925 = vmatprep.subr.bf16.mxu0 0
    %926 = vmatpush2.bf16.msra.mxu0 0
    %927 = vmatprep.subr.bf16.mxu0 0
    %928 = vmatpush2.bf16.msra.mxu0 0
    %929 = vmatprep.subr.bf16.mxu0 0
    %930 = vmatpush2.bf16.msra.mxu0 0
    %931 = vmatprep.subr.bf16.mxu0 0
    %932 = vmatpush2.bf16.msra.mxu0 0
    %933 = vmatprep.subr.bf16.mxu0 0
    %934 = vmatpush2.bf16.msra.mxu0 0
    %935 = vmatprep.subr.bf16.mxu0 0
    %936 = vmatpush2.bf16.msra.mxu0 0
    %937 = vmatprep.subr.bf16.mxu0 0
    %938 = vmatpush2.bf16.msra.mxu0 0
    %939 = vmatprep.mubr.bf16.mxu0 0
    %940 = vmatmul.mubr.bf16.gmra.mxu0 %v816
    %v941 = vpop.f32.mrf.mxu0
    %v942 = vadd.f32 0.0, %v941
    %v943 = vpop.f32.mrf.mxu0
    %v944 = vadd.f32 0.0, %v943
    %v945 = vpop.f32.mrf.mxu0
    %v946 = vadd.f32 0.0, %v945
    %v947 = vpop.f32.mrf.mxu0
    %v948 = vadd.f32 0.0, %v947
    %949 = vdwg.mxu0
    %950 = vmatprep.subr.bf16.mxu0 0
    %951 = vmatpush1.bf16.msra.mxu0 0
    %952 = vmatprep.subr.bf16.mxu0 0
    %953 = vmatpush1.bf16.msra.mxu0 0
    %954 = vmatprep.subr.bf16.mxu0 0
    %955 = vmatpush1.bf16.msra.mxu0 0
    %956 = vmatprep.subr.bf16.mxu0 0
    %957 = vmatpush1.bf16.msra.mxu0 0
    %958 = vmatprep.subr.bf16.mxu0 0
    %959 = vmatpush1.bf16.msra.mxu0 0
    %960 = vmatprep.subr.bf16.mxu0 0
    %961 = vmatpush1.bf16.msra.mxu0 0
    %962 = vmatprep.subr.bf16.mxu0 0
    %963 = vmatpush1.bf16.msra.mxu0 0
    %964 = vmatprep.subr.bf16.mxu0 %v176
    %965 = vmatpush1.bf16.msra.mxu0 %v173
    %966 = vmatprep.subr.bf16.mxu0 0
    %967 = vmatpush2.bf16.msra.mxu0 0
    %968 = vmatprep.subr.bf16.mxu0 0
    %969 = vmatpush2.bf16.msra.mxu0 0
    %970 = vmatprep.subr.bf16.mxu0 0
    %971 = vmatpush2.bf16.msra.mxu0 0
    %972 = vmatprep.subr.bf16.mxu0 0
    %973 = vmatpush2.bf16.msra.mxu0 0
    %974 = vmatprep.subr.bf16.mxu0 0
    %975 = vmatpush2.bf16.msra.mxu0 0
    %976 = vmatprep.subr.bf16.mxu0 0
    %977 = vmatpush2.bf16.msra.mxu0 0
    %978 = vmatprep.subr.bf16.mxu0 0
    %979 = vmatpush2.bf16.msra.mxu0 0
    %980 = vmatprep.subr.bf16.mxu0 0
    %981 = vmatpush2.bf16.msra.mxu0 0
    %982 = vmatprep.mubr.bf16.mxu0 0
    %983 = vmatmul.mubr.bf16.gmra.mxu0 %v816
    %v984 = vpop.f32.mrf.mxu0
    %v985 = vadd.f32 0.0, %v984
    %v986 = vpop.f32.mrf.mxu0
    %v987 = vadd.f32 0.0, %v986
    %v988 = vpop.f32.mrf.mxu0
    %v989 = vadd.f32 0.0, %v988
    %v990 = vpop.f32.mrf.mxu0
    %v991 = vadd.f32 0.0, %v990
    %992 = vdwg.mxu0
    %993 = vmatprep.subr.bf16.mxu0 0
    %994 = vmatpush1.bf16.msra.mxu0 0
    %995 = vmatprep.subr.bf16.mxu0 0
    %996 = vmatpush1.bf16.msra.mxu0 0
    %997 = vmatprep.subr.bf16.mxu0 0
    %998 = vmatpush1.bf16.msra.mxu0 0
    %999 = vmatprep.subr.bf16.mxu0 0
    %1000 = vmatpush1.bf16.msra.mxu0 0
    %1001 = vmatprep.subr.bf16.mxu0 0
    %1002 = vmatpush1.bf16.msra.mxu0 0
    %1003 = vmatprep.subr.bf16.mxu0 0
    %1004 = vmatpush1.bf16.msra.mxu0 0
    %1005 = vmatprep.subr.bf16.mxu0 0
    %1006 = vmatpush1.bf16.msra.mxu0 0
    %1007 = vmatprep.subr.bf16.mxu0 %v182
    %1008 = vmatpush1.bf16.msra.mxu0 %v179
    %1009 = vmatprep.subr.bf16.mxu0 0
    %1010 = vmatpush2.bf16.msra.mxu0 0
    %1011 = vmatprep.subr.bf16.mxu0 0
    %1012 = vmatpush2.bf16.msra.mxu0 0
    %1013 = vmatprep.subr.bf16.mxu0 0
    %1014 = vmatpush2.bf16.msra.mxu0 0
    %1015 = vmatprep.subr.bf16.mxu0 0
    %1016 = vmatpush2.bf16.msra.mxu0 0
    %1017 = vmatprep.subr.bf16.mxu0 0
    %1018 = vmatpush2.bf16.msra.mxu0 0
    %1019 = vmatprep.subr.bf16.mxu0 0
    %1020 = vmatpush2.bf16.msra.mxu0 0
    %1021 = vmatprep.subr.bf16.mxu0 0
    %1022 = vmatpush2.bf16.msra.mxu0 0
    %1023 = vmatprep.subr.bf16.mxu0 0
    %1024 = vmatpush2.bf16.msra.mxu0 0
    %1025 = vmatprep.mubr.bf16.mxu0 0
    %1026 = vmatmul.mubr.bf16.gmra.mxu0 %v816
    %v1027 = vpop.f32.mrf.mxu0
    %v1028 = vadd.f32 0.0, %v1027
    %v1029 = vpop.f32.mrf.mxu0
    %v1030 = vadd.f32 0.0, %v1029
    %v1031 = vpop.f32.mrf.mxu0
    %v1032 = vadd.f32 0.0, %v1031
    %v1033 = vpop.f32.mrf.mxu0
    %v1034 = vadd.f32 0.0, %v1033
    %1035 = vdwg.mxu0
    %1036 = vmatprep.subr.bf16.mxu0 0
    %1037 = vmatpush1.bf16.msra.mxu0 0
    %1038 = vmatprep.subr.bf16.mxu0 0
    %1039 = vmatpush1.bf16.msra.mxu0 0
    %1040 = vmatprep.subr.bf16.mxu0 0
    %1041 = vmatpush1.bf16.msra.mxu0 0
    %1042 = vmatprep.subr.bf16.mxu0 0
    %1043 = vmatpush1.bf16.msra.mxu0 0
    %1044 = vmatprep.subr.bf16.mxu0 0
    %1045 = vmatpush1.bf16.msra.mxu0 0
    %1046 = vmatprep.subr.bf16.mxu0 0
    %1047 = vmatpush1.bf16.msra.mxu0 0
    %1048 = vmatprep.subr.bf16.mxu0 0
    %1049 = vmatpush1.bf16.msra.mxu0 0
    %1050 = vmatprep.subr.bf16.mxu0 %v188
    %1051 = vmatpush1.bf16.msra.mxu0 %v185
    %1052 = vmatprep.subr.bf16.mxu0 0
    %1053 = vmatpush2.bf16.msra.mxu0 0
    %1054 = vmatprep.subr.bf16.mxu0 0
    %1055 = vmatpush2.bf16.msra.mxu0 0
    %1056 = vmatprep.subr.bf16.mxu0 0
    %1057 = vmatpush2.bf16.msra.mxu0 0
    %1058 = vmatprep.subr.bf16.mxu0 0
    %1059 = vmatpush2.bf16.msra.mxu0 0
    %1060 = vmatprep.subr.bf16.mxu0 0
    %1061 = vmatpush2.bf16.msra.mxu0 0
    %1062 = vmatprep.subr.bf16.mxu0 0
    %1063 = vmatpush2.bf16.msra.mxu0 0
    %1064 = vmatprep.subr.bf16.mxu0 0
    %1065 = vmatpush2.bf16.msra.mxu0 0
    %1066 = vmatprep.subr.bf16.mxu0 0
    %1067 = vmatpush2.bf16.msra.mxu0 0
    %1068 = vmatprep.mubr.bf16.mxu0 0
    %1069 = vmatmul.mubr.bf16.gmra.mxu0 %v816
    %v1070 = vpop.f32.mrf.mxu0
    %v1071 = vadd.f32 0.0, %v1070
    %v1072 = vpop.f32.mrf.mxu0
    %v1073 = vadd.f32 0.0, %v1072
    %v1074 = vpop.f32.mrf.mxu0
    %v1075 = vadd.f32 0.0, %v1074
    %v1076 = vpop.f32.mrf.mxu0
    %v1077 = vadd.f32 0.0, %v1076
    %1078 = vdwg.mxu0
    %1079 = vmatprep.subr.bf16.mxu0 0
    %1080 = vmatpush1.bf16.msra.mxu0 0
    %1081 = vmatprep.subr.bf16.mxu0 0
    %1082 = vmatpush1.bf16.msra.mxu0 0
    %1083 = vmatprep.subr.bf16.mxu0 0
    %1084 = vmatpush1.bf16.msra.mxu0 0
    %1085 = vmatprep.subr.bf16.mxu0 0
    %1086 = vmatpush1.bf16.msra.mxu0 0
    %1087 = vmatprep.subr.bf16.mxu0 0
    %1088 = vmatpush1.bf16.msra.mxu0 0
    %1089 = vmatprep.subr.bf16.mxu0 0
    %1090 = vmatpush1.bf16.msra.mxu0 0
    %1091 = vmatprep.subr.bf16.mxu0 0
    %1092 = vmatpush1.bf16.msra.mxu0 0
    %1093 = vmatprep.subr.bf16.mxu0 %v819
    %1094 = vmatpush1.bf16.msra.mxu0 %v191
    %1095 = vmatprep.subr.bf16.mxu0 0
    %1096 = vmatpush2.bf16.msra.mxu0 0
    %1097 = vmatprep.subr.bf16.mxu0 0
    %1098 = vmatpush2.bf16.msra.mxu0 0
    %1099 = vmatprep.subr.bf16.mxu0 0
    %1100 = vmatpush2.bf16.msra.mxu0 0
    %1101 = vmatprep.subr.bf16.mxu0 0
    %1102 = vmatpush2.bf16.msra.mxu0 0
    %1103 = vmatprep.subr.bf16.mxu0 0
    %1104 = vmatpush2.bf16.msra.mxu0 0
    %1105 = vmatprep.subr.bf16.mxu0 0
    %1106 = vmatpush2.bf16.msra.mxu0 0
    %1107 = vmatprep.subr.bf16.mxu0 0
    %1108 = vmatpush2.bf16.msra.mxu0 0
    %1109 = vmatprep.subr.bf16.mxu0 0
    %1110 = vmatpush2.bf16.msra.mxu0 0
    %1111 = vmatprep.mubr.bf16.mxu0 0
    %1112 = vmatmul.mubr.bf16.gmra.mxu0 %v816
    %v1113 = vpop.f32.mrf.mxu0
    %v1114 = vadd.f32 0.0, %v1113
    %v1115 = vpop.f32.mrf.mxu0
    %v1116 = vadd.f32 0.0, %v1115
    %v1117 = vpop.f32.mrf.mxu0
    %v1118 = vadd.f32 0.0, %v1117
    %v1119 = vpop.f32.mrf.mxu0
    %v1120 = vadd.f32 0.0, %v1119
    %1121 = vdwg.mxu0
    %v1122 = vadd.f32 %v540, %v856
    %v1123 = vadd.f32 %v542, %v858
    %v1124 = vadd.f32 %v583, %v899
    %v1125 = vadd.f32 %v585, %v901
    %v1126 = vadd.f32 %v626, %v942
    %v1127 = vadd.f32 %v628, %v944
    %v1128 = vadd.f32 %v669, %v985
    %v1129 = vadd.f32 %v671, %v987
    %v1130 = vadd.f32 %v712, %v1028
    %v1131 = vadd.f32 %v714, %v1030
    %v1132 = vadd.f32 %v755, %v1071
    %v1133 = vadd.f32 %v757, %v1073
    %v1134 = vadd.f32 %v798, %v1114
    %v1135 = vadd.f32 %v800, %v1116
    %v1136 = vadd.f32 %v544, %v860
    %v1137 = vadd.f32 %v546, %v862
    %v1138 = vadd.f32 %v587, %v903
    %v1139 = vadd.f32 %v589, %v905
    %v1140 = vadd.f32 %v630, %v946
    %v1141 = vadd.f32 %v632, %v948
    %v1142 = vadd.f32 %v673, %v989
    %v1143 = vadd.f32 %v675, %v991
    %v1144 = vadd.f32 %v716, %v1032
    %v1145 = vadd.f32 %v718, %v1034
    %v1146 = vadd.f32 %v759, %v1075
    %v1147 = vadd.f32 %v761, %v1077
    %v1148 = vadd.f32 %v802, %v1118
    %v1149 = vadd.f32 %v804, %v1120
    %v1150 = vadd.f32 %v1122, %v1123
    %v1151 = vadd.f32 %v1150, %v1124
    %v1152 = vadd.f32 %v1151, %v1125
    %v1153 = vadd.f32 %v1152, %v1126
    %v1154 = vadd.f32 %v1153, %v1127
    %v1155 = vadd.f32 %v1154, %v1128
    %v1156 = vadd.f32 %v1155, %v1129
    %v1157 = vadd.f32 %v1156, %v1130
    %v1158 = vadd.f32 %v1157, %v1131
    %v1159 = vadd.f32 %v1158, %v1132
    %v1160 = vadd.f32 %v1159, %v1133
    %v1161 = vadd.f32 %v1160, %v1134
    %v1162 = vadd.f32 %v1161, %v1135
    %1163 = vadd.xlane.f32.xlu0 %v1162
    %v1164 = vpop.xlane.xlu0 %1163
    %v1165 = vadd.f32 %v1136, %v1137
    %v1166 = vadd.f32 %v1165, %v1138
    %v1167 = vadd.f32 %v1166, %v1139
    %v1168 = vadd.f32 %v1167, %v1140
    %v1169 = vadd.f32 %v1168, %v1141
    %v1170 = vadd.f32 %v1169, %v1142
    %v1171 = vadd.f32 %v1170, %v1143
    %v1172 = vadd.f32 %v1171, %v1144
    %v1173 = vadd.f32 %v1172, %v1145
    %v1174 = vadd.f32 %v1173, %v1146
    %v1175 = vadd.f32 %v1174, %v1147
    %v1176 = vadd.f32 %v1175, %v1148
    %v1177 = vadd.f32 %v1176, %v1149
    %1178 = vadd.xlane.f32.xlu0 %v1177
    %v1179 = vpop.xlane.xlu0 %1178
    %v1180 = vmul.f32 %v1164, 0.035714287
    %v1181 = vmul.f32 %v1179, 0.035714287
    %v1182 = vmul.f32 %v1122, %v1122
    %v1183 = vmul.f32 %v1123, %v1123
    %v1184 = vmul.f32 %v1124, %v1124
    %v1185 = vmul.f32 %v1125, %v1125
    %v1186 = vmul.f32 %v1126, %v1126
    %v1187 = vmul.f32 %v1127, %v1127
    %v1188 = vmul.f32 %v1128, %v1128
    %v1189 = vmul.f32 %v1129, %v1129
    %v1190 = vmul.f32 %v1130, %v1130
    %v1191 = vmul.f32 %v1131, %v1131
    %v1192 = vmul.f32 %v1132, %v1132
    %v1193 = vmul.f32 %v1133, %v1133
    %v1194 = vmul.f32 %v1134, %v1134
    %v1195 = vmul.f32 %v1135, %v1135
    %v1196 = vmul.f32 %v1136, %v1136
    %v1197 = vmul.f32 %v1137, %v1137
    %v1198 = vmul.f32 %v1138, %v1138
    %v1199 = vmul.f32 %v1139, %v1139
    %v1200 = vmul.f32 %v1140, %v1140
    %v1201 = vmul.f32 %v1141, %v1141
    %v1202 = vmul.f32 %v1142, %v1142
    %v1203 = vmul.f32 %v1143, %v1143
    %v1204 = vmul.f32 %v1144, %v1144
    %v1205 = vmul.f32 %v1145, %v1145
    %v1206 = vmul.f32 %v1146, %v1146
    %v1207 = vmul.f32 %v1147, %v1147
    %v1208 = vmul.f32 %v1148, %v1148
    %v1209 = vmul.f32 %v1149, %v1149
    %v1210 = vadd.f32 %v1182, %v1183
    %v1211 = vadd.f32 %v1210, %v1184
    %v1212 = vadd.f32 %v1211, %v1185
    %v1213 = vadd.f32 %v1212, %v1186
    %v1214 = vadd.f32 %v1213, %v1187
    %v1215 = vadd.f32 %v1214, %v1188
    %v1216 = vadd.f32 %v1215, %v1189
    %v1217 = vadd.f32 %v1216, %v1190
    %v1218 = vadd.f32 %v1217, %v1191
    %v1219 = vadd.f32 %v1218, %v1192
    %v1220 = vadd.f32 %v1219, %v1193
    %v1221 = vadd.f32 %v1220, %v1194
    %v1222 = vadd.f32 %v1221, %v1195
    %1223 = vadd.xlane.f32.xlu0 %v1222
    %v1224 = vpop.xlane.xlu0 %1223
    %v1225 = vadd.f32 %v1196, %v1197
    %v1226 = vadd.f32 %v1225, %v1198
    %v1227 = vadd.f32 %v1226, %v1199
    %v1228 = vadd.f32 %v1227, %v1200
    %v1229 = vadd.f32 %v1228, %v1201
    %v1230 = vadd.f32 %v1229, %v1202
    %v1231 = vadd.f32 %v1230, %v1203
    %v1232 = vadd.f32 %v1231, %v1204
    %v1233 = vadd.f32 %v1232, %v1205
    %v1234 = vadd.f32 %v1233, %v1206
    %v1235 = vadd.f32 %v1234, %v1207
    %v1236 = vadd.f32 %v1235, %v1208
    %v1237 = vadd.f32 %v1236, %v1209
    %1238 = vadd.xlane.f32.xlu0 %v1237
    %v1239 = vpop.xlane.xlu0 %1238
    %v1240 = vmul.f32 %v1224, 0.035714287
    %v1241 = vmul.f32 %v1239, 0.035714287
    %v1242 = vmul.f32 %v1180, %v1180
    %v1243 = vmul.f32 %v1181, %v1181
    %v1244 = vsub.f32 %v1240, %v1242
    %v1245 = vsub.f32 %v1241, %v1243
    %v1246 = vmax.f32 %v1244, 0.0
    %v1247 = vmax.f32 %v1245, 0.0
    %v1248 = vadd.f32 %v1246, 1e-05
    %v1249 = vadd.f32 %v1247, 1e-05
    %v1250 = vrsqrt.pop %v1248
    %v1251 = vrsqrt.pop %v1249
    %v1252 = vmul.f32 %v61, %v1250
    %v1253 = vmul.f32 %v62, %v1251
    %1255 = vset.pattern.permute.xlu0 0
    %1256 = vperm.xlu0 %1255, %v1252
    %v1257 = vpop.permute.xlu0 %1256
    %1260 = vset.pattern.permute.xlu0 0
    %1261 = vperm.xlu0 %1260, %v1253
    %v1262 = vpop.permute.xlu0 %1261
    %v1264 = vmul.f32 %v1122, %v1257
    %v1265 = vmul.f32 %v1123, %v1257
    %v1266 = vmul.f32 %v1124, %v1257
    %v1267 = vmul.f32 %v1125, %v1257
    %v1268 = vmul.f32 %v1126, %v1257
    %v1269 = vmul.f32 %v1127, %v1257
    %v1270 = vmul.f32 %v1128, %v1257
    %v1271 = vmul.f32 %v1129, %v1257
    %v1272 = vmul.f32 %v1130, %v1257
    %v1273 = vmul.f32 %v1131, %v1257
    %v1274 = vmul.f32 %v1132, %v1257
    %v1275 = vmul.f32 %v1133, %v1257
    %v1276 = vmul.f32 %v1134, %v1257
    %v1277 = vmul.f32 %v1135, %v1257
    %v1278 = vmul.f32 %v1136, %v1262
    %v1279 = vmul.f32 %v1137, %v1262
    %v1280 = vmul.f32 %v1138, %v1262
    %v1281 = vmul.f32 %v1139, %v1262
    %v1282 = vmul.f32 %v1140, %v1262
    %v1283 = vmul.f32 %v1141, %v1262
    %v1284 = vmul.f32 %v1142, %v1262
    %v1285 = vmul.f32 %v1143, %v1262
    %v1286 = vmul.f32 %v1144, %v1262
    %v1287 = vmul.f32 %v1145, %v1262
    %v1288 = vmul.f32 %v1146, %v1262
    %v1289 = vmul.f32 %v1147, %v1262
    %v1290 = vmul.f32 %v1148, %v1262
    %v1291 = vmul.f32 %v1149, %v1262
    %v1292 = vmul.f32 %v1180, %v1252
    %v1293 = vmul.f32 %v1181, %v1253
    %v1294 = vsub.f32 %v63, %v1292
    %v1295 = vsub.f32 %v64, %v1293
    %1297 = vset.pattern.permute.xlu0 0
    %1298 = vperm.xlu0 %1297, %v1294
    %v1299 = vpop.permute.xlu0 %1298
    %1302 = vset.pattern.permute.xlu0 0
    %1303 = vperm.xlu0 %1302, %v1295
    %v1304 = vpop.permute.xlu0 %1303
    %v1306 = vadd.f32 %v1264, %v1299
    %v1307 = vadd.f32 %v1265, %v1299
    %v1308 = vadd.f32 %v1266, %v1299
    %v1309 = vadd.f32 %v1267, %v1299
    %v1310 = vadd.f32 %v1268, %v1299
    %v1311 = vadd.f32 %v1269, %v1299
    %v1312 = vadd.f32 %v1270, %v1299
    %v1313 = vadd.f32 %v1271, %v1299
    %v1314 = vadd.f32 %v1272, %v1299
    %v1315 = vadd.f32 %v1273, %v1299
    %v1316 = vadd.f32 %v1274, %v1299
    %v1317 = vadd.f32 %v1275, %v1299
    %v1318 = vadd.f32 %v1276, %v1299
    %v1319 = vadd.f32 %v1277, %v1299
    %v1320 = vadd.f32 %v1278, %v1304
    %v1321 = vadd.f32 %v1279, %v1304
    %v1322 = vadd.f32 %v1280, %v1304
    %v1323 = vadd.f32 %v1281, %v1304
    %v1324 = vadd.f32 %v1282, %v1304
    %v1325 = vadd.f32 %v1283, %v1304
    %v1326 = vadd.f32 %v1284, %v1304
    %v1327 = vadd.f32 %v1285, %v1304
    %v1328 = vadd.f32 %v1286, %v1304
    %v1329 = vadd.f32 %v1287, %v1304
    %v1330 = vadd.f32 %v1288, %v1304
    %v1331 = vadd.f32 %v1289, %v1304
    %v1332 = vadd.f32 %v1290, %v1304
    %v1333 = vadd.f32 %v1291, %v1304
    %vm1334 = vcmp.ge.f32.partialorder %v1306, 0.0
    %vm1335 = vcmp.ge.f32.partialorder %v1307, 0.0
    %vm1336 = vcmp.ge.f32.partialorder %v1308, 0.0
    %vm1337 = vcmp.ge.f32.partialorder %v1309, 0.0
    %vm1338 = vcmp.ge.f32.partialorder %v1310, 0.0
    %vm1339 = vcmp.ge.f32.partialorder %v1311, 0.0
    %vm1340 = vcmp.ge.f32.partialorder %v1312, 0.0
    %vm1341 = vcmp.ge.f32.partialorder %v1313, 0.0
    %vm1342 = vcmp.ge.f32.partialorder %v1314, 0.0
    %vm1343 = vcmp.ge.f32.partialorder %v1315, 0.0
    %vm1344 = vcmp.ge.f32.partialorder %v1316, 0.0
    %vm1345 = vcmp.ge.f32.partialorder %v1317, 0.0
    %vm1346 = vcmp.ge.f32.partialorder %v1318, 0.0
    %vm1347 = vcmp.ge.f32.partialorder %v1319, 0.0
    %vm1348 = vcmp.ge.f32.partialorder %v1320, 0.0
    %vm1349 = vcmp.ge.f32.partialorder %v1321, 0.0
    %vm1350 = vcmp.ge.f32.partialorder %v1322, 0.0
    %vm1351 = vcmp.ge.f32.partialorder %v1323, 0.0
    %vm1352 = vcmp.ge.f32.partialorder %v1324, 0.0
    %vm1353 = vcmp.ge.f32.partialorder %v1325, 0.0
    %vm1354 = vcmp.ge.f32.partialorder %v1326, 0.0
    %vm1355 = vcmp.ge.f32.partialorder %v1327, 0.0
    %vm1356 = vcmp.ge.f32.partialorder %v1328, 0.0
    %vm1357 = vcmp.ge.f32.partialorder %v1329, 0.0
    %vm1358 = vcmp.ge.f32.partialorder %v1330, 0.0
    %vm1359 = vcmp.ge.f32.partialorder %v1331, 0.0
    %vm1360 = vcmp.ge.f32.partialorder %v1332, 0.0
    %vm1361 = vcmp.ge.f32.partialorder %v1333, 0.0
    %v1362 = vmul.f32 %v1306, 0.01
    %v1363 = vmul.f32 %v1307, 0.01
    %v1364 = vmul.f32 %v1308, 0.01
    %v1365 = vmul.f32 %v1309, 0.01
    %v1366 = vmul.f32 %v1310, 0.01
    %v1367 = vmul.f32 %v1311, 0.01
    %v1368 = vmul.f32 %v1312, 0.01
    %v1369 = vmul.f32 %v1313, 0.01
    %v1370 = vmul.f32 %v1314, 0.01
    %v1371 = vmul.f32 %v1315, 0.01
    %v1372 = vmul.f32 %v1316, 0.01
    %v1373 = vmul.f32 %v1317, 0.01
    %v1374 = vmul.f32 %v1318, 0.01
    %v1375 = vmul.f32 %v1319, 0.01
    %v1376 = vmul.f32 %v1320, 0.01
    %v1377 = vmul.f32 %v1321, 0.01
    %v1378 = vmul.f32 %v1322, 0.01
    %v1379 = vmul.f32 %v1323, 0.01
    %v1380 = vmul.f32 %v1324, 0.01
    %v1381 = vmul.f32 %v1325, 0.01
    %v1382 = vmul.f32 %v1326, 0.01
    %v1383 = vmul.f32 %v1327, 0.01
    %v1384 = vmul.f32 %v1328, 0.01
    %v1385 = vmul.f32 %v1329, 0.01
    %v1386 = vmul.f32 %v1330, 0.01
    %v1387 = vmul.f32 %v1331, 0.01
    %v1388 = vmul.f32 %v1332, 0.01
    %v1389 = vmul.f32 %v1333, 0.01
    %v1390 = vsel %vm1334, %v1306, %v1362
    %v1391 = vsel %vm1335, %v1307, %v1363
    %v1392 = vsel %vm1336, %v1308, %v1364
    %v1393 = vsel %vm1337, %v1309, %v1365
    %v1394 = vsel %vm1338, %v1310, %v1366
    %v1395 = vsel %vm1339, %v1311, %v1367
    %v1396 = vsel %vm1340, %v1312, %v1368
    %v1397 = vsel %vm1341, %v1313, %v1369
    %v1398 = vsel %vm1342, %v1314, %v1370
    %v1399 = vsel %vm1343, %v1315, %v1371
    %v1400 = vsel %vm1344, %v1316, %v1372
    %v1401 = vsel %vm1345, %v1317, %v1373
    %v1402 = vsel %vm1346, %v1318, %v1374
    %v1403 = vsel %vm1347, %v1319, %v1375
    %v1404 = vsel %vm1348, %v1320, %v1376
    %v1405 = vsel %vm1349, %v1321, %v1377
    %v1406 = vsel %vm1350, %v1322, %v1378
    %v1407 = vsel %vm1351, %v1323, %v1379
    %v1408 = vsel %vm1352, %v1324, %v1380
    %v1409 = vsel %vm1353, %v1325, %v1381
    %v1410 = vsel %vm1354, %v1326, %v1382
    %v1411 = vsel %vm1355, %v1327, %v1383
    %v1412 = vsel %vm1356, %v1328, %v1384
    %v1413 = vsel %vm1357, %v1329, %v1385
    %v1414 = vsel %vm1358, %v1330, %v1386
    %v1415 = vsel %vm1359, %v1331, %v1387
    %v1416 = vsel %vm1360, %v1332, %v1388
    %v1417 = vsel %vm1361, %v1333, %v1389
    %v1420 = vlaneseq
    %v1421 = vshrl.u32 %v1420, 7
    %v1422 = vsub.s32 0, %v1421
    %v1423 = vrot.slane %v55, %v1422
    %v1424 = vlaneseq
    %v1425 = vshrl.u32 %v1424, 7
    %v1426 = vsub.s32 1, %v1425
    %v1427 = vrot.slane %v55, %v1426
    %v1428 = vlaneseq
    %v1429 = vshrl.u32 %v1428, 7
    %v1430 = vsub.s32 2, %v1429
    %v1431 = vrot.slane %v55, %v1430
    %v1432 = vlaneseq
    %v1433 = vshrl.u32 %v1432, 7
    %v1434 = vsub.s32 3, %v1433
    %v1435 = vrot.slane %v55, %v1434
    %v1436 = vlaneseq
    %v1437 = vshrl.u32 %v1436, 7
    %v1438 = vsub.s32 4, %v1437
    %v1439 = vrot.slane %v55, %v1438
    %v1440 = vlaneseq
    %v1441 = vshrl.u32 %v1440, 7
    %v1442 = vsub.s32 5, %v1441
    %v1443 = vrot.slane %v55, %v1442
    %v1444 = vlaneseq
    %v1445 = vshrl.u32 %v1444, 7
    %v1446 = vsub.s32 6, %v1445
    %v1447 = vrot.slane %v55, %v1446
    %v1448 = vlaneseq
    %v1449 = vshrl.u32 %v1448, 7
    %v1450 = vsub.s32 7, %v1449
    %v1451 = vrot.slane %v55, %v1450
    %v1452 = vlaneseq
    %v1453 = vshrl.u32 %v1452, 7
    %v1454 = vsub.s32 0, %v1453
    %v1455 = vrot.slane %v56, %v1454
    %v1456 = vlaneseq
    %v1457 = vshrl.u32 %v1456, 7
    %v1458 = vsub.s32 1, %v1457
    %v1459 = vrot.slane %v56, %v1458
    %v1460 = vlaneseq
    %v1461 = vshrl.u32 %v1460, 7
    %v1462 = vsub.s32 2, %v1461
    %v1463 = vrot.slane %v56, %v1462
    %v1464 = vlaneseq
    %v1465 = vshrl.u32 %v1464, 7
    %v1466 = vsub.s32 3, %v1465
    %v1467 = vrot.slane %v56, %v1466
    %v1468 = vlaneseq
    %v1469 = vshrl.u32 %v1468, 7
    %v1470 = vsub.s32 4, %v1469
    %v1471 = vrot.slane %v56, %v1470
    %v1472 = vlaneseq
    %v1473 = vshrl.u32 %v1472, 7
    %v1474 = vsub.s32 5, %v1473
    %v1475 = vrot.slane %v56, %v1474
    %v1490 = vmul.f32 %v1390, %v1423
    %v1491 = vmul.f32 %v1391, %v1427
    %v1492 = vmul.f32 %v1392, %v1431
    %v1493 = vmul.f32 %v1393, %v1435
    %v1494 = vmul.f32 %v1394, %v1439
    %v1495 = vmul.f32 %v1395, %v1443
    %v1496 = vmul.f32 %v1396, %v1447
    %v1497 = vmul.f32 %v1397, %v1451
    %v1498 = vmul.f32 %v1398, %v1455
    %v1499 = vmul.f32 %v1399, %v1459
    %v1500 = vmul.f32 %v1400, %v1463
    %v1501 = vmul.f32 %v1401, %v1467
    %v1502 = vmul.f32 %v1402, %v1471
    %v1503 = vmul.f32 %v1403, %v1475
    %v1504 = vmul.f32 %v1404, %v1423
    %v1505 = vmul.f32 %v1405, %v1427
    %v1506 = vmul.f32 %v1406, %v1431
    %v1507 = vmul.f32 %v1407, %v1435
    %v1508 = vmul.f32 %v1408, %v1439
    %v1509 = vmul.f32 %v1409, %v1443
    %v1510 = vmul.f32 %v1410, %v1447
    %v1511 = vmul.f32 %v1411, %v1451
    %v1512 = vmul.f32 %v1412, %v1455
    %v1513 = vmul.f32 %v1413, %v1459
    %v1514 = vmul.f32 %v1414, %v1463
    %v1515 = vmul.f32 %v1415, %v1467
    %v1516 = vmul.f32 %v1416, %v1471
    %v1517 = vmul.f32 %v1417, %v1475
    %v1518 = vpack.c.bf16 %v1504, %v1490
    %v1519 = vpack.c.bf16 %v1505, %v1491
    %v1520 = vpack.c.bf16 %v1506, %v1492
    %v1521 = vpack.c.bf16 %v1507, %v1493
    %v1522 = vpack.c.bf16 %v1508, %v1494
    %v1523 = vpack.c.bf16 %v1509, %v1495
    %v1524 = vpack.c.bf16 %v1510, %v1496
    %v1525 = vpack.c.bf16 %v1511, %v1497
    %v1526 = vpack.c.bf16 %v1512, %v1498
    %v1527 = vpack.c.bf16 %v1513, %v1499
    %v1528 = vpack.c.bf16 %v1514, %v1500
    %v1529 = vpack.c.bf16 %v1515, %v1501
    %v1530 = vpack.c.bf16 %v1516, %v1502
    %v1531 = vpack.c.bf16 %v1517, %v1503
    %v1532 = vld [vmem:[%s6] sm:$0xff]
    %v1533 = vld [vmem:[%s6 + $0x8] sm:$0xff]
    %v1534 = vld [vmem:[%s7] sm:$0xff]
    %v1535 = vld [vmem:[%s7 + $0x8] sm:$0xff]
    %v1536 = vld [vmem:[%s5] sm:$0xf]
    %v1537 = vld [vmem:[%s5 + $0x4] sm:$0xf]
    %s1538 = scalar_lea.vmem %s5, 8
    %v1539 = vld [vmem:[%s1538] sm:$0xf]
    %v1540 = vld [vmem:[%s1538 + $0x4] sm:$0xf]
    %v1543 = vunpack.c.l.b16 %v1539
    %v1544 = vunpack.c.l.b16 %v1540
    %v1545 = vpack.c.b16 %v1544, %v1543
    %vm1546 = vcmask 130048
    %v1548 = vsel %vm1546, %v1545, 0
    %1550 = vmatprep.subr.bf16.mxu0 0
    %1551 = vmatpush1.bf16.msra.mxu0 0
    %1552 = vmatprep.subr.bf16.mxu0 0
    %1553 = vmatpush1.bf16.msra.mxu0 0
    %1554 = vmatprep.subr.bf16.mxu0 0
    %1555 = vmatpush1.bf16.msra.mxu0 0
    %1556 = vmatprep.subr.bf16.mxu0 0
    %1557 = vmatpush1.bf16.msra.mxu0 0
    %1558 = vmatprep.subr.bf16.mxu0 0
    %1559 = vmatpush1.bf16.msra.mxu0 0
    %1560 = vmatprep.subr.bf16.mxu0 0
    %1561 = vmatpush1.bf16.msra.mxu0 0
    %1562 = vmatprep.subr.bf16.mxu0 0
    %1563 = vmatpush1.bf16.msra.mxu0 0
    %1564 = vmatprep.subr.bf16.mxu0 %v1520
    %1565 = vmatpush1.bf16.msra.mxu0 %v1519
    %1566 = vmatprep.subr.bf16.mxu0 0
    %1567 = vmatpush2.bf16.msra.mxu0 0
    %1568 = vmatprep.subr.bf16.mxu0 0
    %1569 = vmatpush2.bf16.msra.mxu0 0
    %1570 = vmatprep.subr.bf16.mxu0 0
    %1571 = vmatpush2.bf16.msra.mxu0 0
    %1572 = vmatprep.subr.bf16.mxu0 0
    %1573 = vmatpush2.bf16.msra.mxu0 0
    %1574 = vmatprep.subr.bf16.mxu0 0
    %1575 = vmatpush2.bf16.msra.mxu0 0
    %1576 = vmatprep.subr.bf16.mxu0 0
    %1577 = vmatpush2.bf16.msra.mxu0 0
    %1578 = vmatprep.subr.bf16.mxu0 0
    %1579 = vmatpush2.bf16.msra.mxu0 0
    %1580 = vmatprep.subr.bf16.mxu0 0
    %1581 = vmatpush2.bf16.msra.mxu0 0
    %1582 = vmatprep.mubr.bf16.mxu0 0
    %1583 = vmatmul.mubr.bf16.gmra.mxu0 %v1548
    %v1584 = vpop.f32.mrf.mxu0
    %v1585 = vadd.f32 0.0, %v1584
    %v1586 = vpop.f32.mrf.mxu0
    %v1587 = vadd.f32 0.0, %v1586
    %v1588 = vpop.f32.mrf.mxu0
    %v1589 = vadd.f32 0.0, %v1588
    %v1590 = vpop.f32.mrf.mxu0
    %v1591 = vadd.f32 0.0, %v1590
    %1592 = vdwg.mxu0
    %1593 = vmatprep.subr.bf16.mxu0 0
    %1594 = vmatpush1.bf16.msra.mxu0 0
    %1595 = vmatprep.subr.bf16.mxu0 0
    %1596 = vmatpush1.bf16.msra.mxu0 0
    %1597 = vmatprep.subr.bf16.mxu0 0
    %1598 = vmatpush1.bf16.msra.mxu0 0
    %1599 = vmatprep.subr.bf16.mxu0 0
    %1600 = vmatpush1.bf16.msra.mxu0 0
    %1601 = vmatprep.subr.bf16.mxu0 0
    %1602 = vmatpush1.bf16.msra.mxu0 0
    %1603 = vmatprep.subr.bf16.mxu0 0
    %1604 = vmatpush1.bf16.msra.mxu0 0
    %1605 = vmatprep.subr.bf16.mxu0 0
    %1606 = vmatpush1.bf16.msra.mxu0 0
    %1607 = vmatprep.subr.bf16.mxu0 %v1522
    %1608 = vmatpush1.bf16.msra.mxu0 %v1521
    %1609 = vmatprep.subr.bf16.mxu0 0
    %1610 = vmatpush2.bf16.msra.mxu0 0
    %1611 = vmatprep.subr.bf16.mxu0 0
    %1612 = vmatpush2.bf16.msra.mxu0 0
    %1613 = vmatprep.subr.bf16.mxu0 0
    %1614 = vmatpush2.bf16.msra.mxu0 0
    %1615 = vmatprep.subr.bf16.mxu0 0
    %1616 = vmatpush2.bf16.msra.mxu0 0
    %1617 = vmatprep.subr.bf16.mxu0 0
    %1618 = vmatpush2.bf16.msra.mxu0 0
    %1619 = vmatprep.subr.bf16.mxu0 0
    %1620 = vmatpush2.bf16.msra.mxu0 0
    %1621 = vmatprep.subr.bf16.mxu0 0
    %1622 = vmatpush2.bf16.msra.mxu0 0
    %1623 = vmatprep.subr.bf16.mxu0 0
    %1624 = vmatpush2.bf16.msra.mxu0 0
    %1625 = vmatprep.mubr.bf16.mxu0 0
    %1626 = vmatmul.mubr.bf16.gmra.mxu0 %v1548
    %v1627 = vpop.f32.mrf.mxu0
    %v1628 = vadd.f32 0.0, %v1627
    %v1629 = vpop.f32.mrf.mxu0
    %v1630 = vadd.f32 0.0, %v1629
    %v1631 = vpop.f32.mrf.mxu0
    %v1632 = vadd.f32 0.0, %v1631
    %v1633 = vpop.f32.mrf.mxu0
    %v1634 = vadd.f32 0.0, %v1633
    %1635 = vdwg.mxu0
    %1636 = vmatprep.subr.bf16.mxu0 0
    %1637 = vmatpush1.bf16.msra.mxu0 0
    %1638 = vmatprep.subr.bf16.mxu0 0
    %1639 = vmatpush1.bf16.msra.mxu0 0
    %1640 = vmatprep.subr.bf16.mxu0 0
    %1641 = vmatpush1.bf16.msra.mxu0 0
    %1642 = vmatprep.subr.bf16.mxu0 0
    %1643 = vmatpush1.bf16.msra.mxu0 0
    %1644 = vmatprep.subr.bf16.mxu0 0
    %1645 = vmatpush1.bf16.msra.mxu0 0
    %1646 = vmatprep.subr.bf16.mxu0 0
    %1647 = vmatpush1.bf16.msra.mxu0 0
    %1648 = vmatprep.subr.bf16.mxu0 0
    %1649 = vmatpush1.bf16.msra.mxu0 0
    %1650 = vmatprep.subr.bf16.mxu0 %v1524
    %1651 = vmatpush1.bf16.msra.mxu0 %v1523
    %1652 = vmatprep.subr.bf16.mxu0 0
    %1653 = vmatpush2.bf16.msra.mxu0 0
    %1654 = vmatprep.subr.bf16.mxu0 0
    %1655 = vmatpush2.bf16.msra.mxu0 0
    %1656 = vmatprep.subr.bf16.mxu0 0
    %1657 = vmatpush2.bf16.msra.mxu0 0
    %1658 = vmatprep.subr.bf16.mxu0 0
    %1659 = vmatpush2.bf16.msra.mxu0 0
    %1660 = vmatprep.subr.bf16.mxu0 0
    %1661 = vmatpush2.bf16.msra.mxu0 0
    %1662 = vmatprep.subr.bf16.mxu0 0
    %1663 = vmatpush2.bf16.msra.mxu0 0
    %1664 = vmatprep.subr.bf16.mxu0 0
    %1665 = vmatpush2.bf16.msra.mxu0 0
    %1666 = vmatprep.subr.bf16.mxu0 0
    %1667 = vmatpush2.bf16.msra.mxu0 0
    %1668 = vmatprep.mubr.bf16.mxu0 0
    %1669 = vmatmul.mubr.bf16.gmra.mxu0 %v1548
    %v1670 = vpop.f32.mrf.mxu0
    %v1671 = vadd.f32 0.0, %v1670
    %v1672 = vpop.f32.mrf.mxu0
    %v1673 = vadd.f32 0.0, %v1672
    %v1674 = vpop.f32.mrf.mxu0
    %v1675 = vadd.f32 0.0, %v1674
    %v1676 = vpop.f32.mrf.mxu0
    %v1677 = vadd.f32 0.0, %v1676
    %1678 = vdwg.mxu0
    %1679 = vmatprep.subr.bf16.mxu0 0
    %1680 = vmatpush1.bf16.msra.mxu0 0
    %1681 = vmatprep.subr.bf16.mxu0 0
    %1682 = vmatpush1.bf16.msra.mxu0 0
    %1683 = vmatprep.subr.bf16.mxu0 0
    %1684 = vmatpush1.bf16.msra.mxu0 0
    %1685 = vmatprep.subr.bf16.mxu0 0
    %1686 = vmatpush1.bf16.msra.mxu0 0
    %1687 = vmatprep.subr.bf16.mxu0 0
    %1688 = vmatpush1.bf16.msra.mxu0 0
    %1689 = vmatprep.subr.bf16.mxu0 0
    %1690 = vmatpush1.bf16.msra.mxu0 0
    %1691 = vmatprep.subr.bf16.mxu0 0
    %1692 = vmatpush1.bf16.msra.mxu0 0
    %1693 = vmatprep.subr.bf16.mxu0 %v1526
    %1694 = vmatpush1.bf16.msra.mxu0 %v1525
    %1695 = vmatprep.subr.bf16.mxu0 0
    %1696 = vmatpush2.bf16.msra.mxu0 0
    %1697 = vmatprep.subr.bf16.mxu0 0
    %1698 = vmatpush2.bf16.msra.mxu0 0
    %1699 = vmatprep.subr.bf16.mxu0 0
    %1700 = vmatpush2.bf16.msra.mxu0 0
    %1701 = vmatprep.subr.bf16.mxu0 0
    %1702 = vmatpush2.bf16.msra.mxu0 0
    %1703 = vmatprep.subr.bf16.mxu0 0
    %1704 = vmatpush2.bf16.msra.mxu0 0
    %1705 = vmatprep.subr.bf16.mxu0 0
    %1706 = vmatpush2.bf16.msra.mxu0 0
    %1707 = vmatprep.subr.bf16.mxu0 0
    %1708 = vmatpush2.bf16.msra.mxu0 0
    %1709 = vmatprep.subr.bf16.mxu0 0
    %1710 = vmatpush2.bf16.msra.mxu0 0
    %1711 = vmatprep.mubr.bf16.mxu0 0
    %1712 = vmatmul.mubr.bf16.gmra.mxu0 %v1548
    %v1713 = vpop.f32.mrf.mxu0
    %v1714 = vadd.f32 0.0, %v1713
    %v1715 = vpop.f32.mrf.mxu0
    %v1716 = vadd.f32 0.0, %v1715
    %v1717 = vpop.f32.mrf.mxu0
    %v1718 = vadd.f32 0.0, %v1717
    %v1719 = vpop.f32.mrf.mxu0
    %v1720 = vadd.f32 0.0, %v1719
    %1721 = vdwg.mxu0
    %1722 = vmatprep.subr.bf16.mxu0 0
    %1723 = vmatpush1.bf16.msra.mxu0 0
    %1724 = vmatprep.subr.bf16.mxu0 0
    %1725 = vmatpush1.bf16.msra.mxu0 0
    %1726 = vmatprep.subr.bf16.mxu0 0
    %1727 = vmatpush1.bf16.msra.mxu0 0
    %1728 = vmatprep.subr.bf16.mxu0 0
    %1729 = vmatpush1.bf16.msra.mxu0 0
    %1730 = vmatprep.subr.bf16.mxu0 0
    %1731 = vmatpush1.bf16.msra.mxu0 0
    %1732 = vmatprep.subr.bf16.mxu0 0
    %1733 = vmatpush1.bf16.msra.mxu0 0
    %1734 = vmatprep.subr.bf16.mxu0 0
    %1735 = vmatpush1.bf16.msra.mxu0 0
    %1736 = vmatprep.subr.bf16.mxu0 %v1528
    %1737 = vmatpush1.bf16.msra.mxu0 %v1527
    %1738 = vmatprep.subr.bf16.mxu0 0
    %1739 = vmatpush2.bf16.msra.mxu0 0
    %1740 = vmatprep.subr.bf16.mxu0 0
    %1741 = vmatpush2.bf16.msra.mxu0 0
    %1742 = vmatprep.subr.bf16.mxu0 0
    %1743 = vmatpush2.bf16.msra.mxu0 0
    %1744 = vmatprep.subr.bf16.mxu0 0
    %1745 = vmatpush2.bf16.msra.mxu0 0
    %1746 = vmatprep.subr.bf16.mxu0 0
    %1747 = vmatpush2.bf16.msra.mxu0 0
    %1748 = vmatprep.subr.bf16.mxu0 0
    %1749 = vmatpush2.bf16.msra.mxu0 0
    %1750 = vmatprep.subr.bf16.mxu0 0
    %1751 = vmatpush2.bf16.msra.mxu0 0
    %1752 = vmatprep.subr.bf16.mxu0 0
    %1753 = vmatpush2.bf16.msra.mxu0 0
    %1754 = vmatprep.mubr.bf16.mxu0 0
    %1755 = vmatmul.mubr.bf16.gmra.mxu0 %v1548
    %v1756 = vpop.f32.mrf.mxu0
    %v1757 = vadd.f32 0.0, %v1756
    %v1758 = vpop.f32.mrf.mxu0
    %v1759 = vadd.f32 0.0, %v1758
    %v1760 = vpop.f32.mrf.mxu0
    %v1761 = vadd.f32 0.0, %v1760
    %v1762 = vpop.f32.mrf.mxu0
    %v1763 = vadd.f32 0.0, %v1762
    %1764 = vdwg.mxu0
    %1765 = vmatprep.subr.bf16.mxu0 0
    %1766 = vmatpush1.bf16.msra.mxu0 0
    %1767 = vmatprep.subr.bf16.mxu0 0
    %1768 = vmatpush1.bf16.msra.mxu0 0
    %1769 = vmatprep.subr.bf16.mxu0 0
    %1770 = vmatpush1.bf16.msra.mxu0 0
    %1771 = vmatprep.subr.bf16.mxu0 0
    %1772 = vmatpush1.bf16.msra.mxu0 0
    %1773 = vmatprep.subr.bf16.mxu0 0
    %1774 = vmatpush1.bf16.msra.mxu0 0
    %1775 = vmatprep.subr.bf16.mxu0 0
    %1776 = vmatpush1.bf16.msra.mxu0 0
    %1777 = vmatprep.subr.bf16.mxu0 0
    %1778 = vmatpush1.bf16.msra.mxu0 0
    %1779 = vmatprep.subr.bf16.mxu0 %v1530
    %1780 = vmatpush1.bf16.msra.mxu0 %v1529
    %1781 = vmatprep.subr.bf16.mxu0 0
    %1782 = vmatpush2.bf16.msra.mxu0 0
    %1783 = vmatprep.subr.bf16.mxu0 0
    %1784 = vmatpush2.bf16.msra.mxu0 0
    %1785 = vmatprep.subr.bf16.mxu0 0
    %1786 = vmatpush2.bf16.msra.mxu0 0
    %1787 = vmatprep.subr.bf16.mxu0 0
    %1788 = vmatpush2.bf16.msra.mxu0 0
    %1789 = vmatprep.subr.bf16.mxu0 0
    %1790 = vmatpush2.bf16.msra.mxu0 0
    %1791 = vmatprep.subr.bf16.mxu0 0
    %1792 = vmatpush2.bf16.msra.mxu0 0
    %1793 = vmatprep.subr.bf16.mxu0 0
    %1794 = vmatpush2.bf16.msra.mxu0 0
    %1795 = vmatprep.subr.bf16.mxu0 0
    %1796 = vmatpush2.bf16.msra.mxu0 0
    %1797 = vmatprep.mubr.bf16.mxu0 0
    %1798 = vmatmul.mubr.bf16.gmra.mxu0 %v1548
    %v1799 = vpop.f32.mrf.mxu0
    %v1800 = vadd.f32 0.0, %v1799
    %v1801 = vpop.f32.mrf.mxu0
    %v1802 = vadd.f32 0.0, %v1801
    %v1803 = vpop.f32.mrf.mxu0
    %v1804 = vadd.f32 0.0, %v1803
    %v1805 = vpop.f32.mrf.mxu0
    %v1806 = vadd.f32 0.0, %v1805
    %1807 = vdwg.mxu0
    %v1810 = vunpack.c.l.b16 %v1536
    %v1811 = vunpack.c.l.b16 %v1537
    %v1812 = vpack.c.b16 %v1811, %v1810
    %v1814 = vsel %vm1546, %v1812, 0
    %1816 = vmatprep.subr.bf16.mxu0 0
    %1817 = vmatpush1.bf16.msra.mxu0 0
    %1818 = vmatprep.subr.bf16.mxu0 0
    %1819 = vmatpush1.bf16.msra.mxu0 0
    %1820 = vmatprep.subr.bf16.mxu0 0
    %1821 = vmatpush1.bf16.msra.mxu0 0
    %1822 = vmatprep.subr.bf16.mxu0 0
    %1823 = vmatpush1.bf16.msra.mxu0 0
    %1824 = vmatprep.subr.bf16.mxu0 0
    %1825 = vmatpush1.bf16.msra.mxu0 0
    %1826 = vmatprep.subr.bf16.mxu0 0
    %1827 = vmatpush1.bf16.msra.mxu0 0
    %1828 = vmatprep.subr.bf16.mxu0 0
    %1829 = vmatpush1.bf16.msra.mxu0 0
    %1830 = vmatprep.subr.bf16.mxu0 %v1519
    %1831 = vmatpush1.bf16.msra.mxu0 %v1518
    %1832 = vmatprep.subr.bf16.mxu0 0
    %1833 = vmatpush2.bf16.msra.mxu0 0
    %1834 = vmatprep.subr.bf16.mxu0 0
    %1835 = vmatpush2.bf16.msra.mxu0 0
    %1836 = vmatprep.subr.bf16.mxu0 0
    %1837 = vmatpush2.bf16.msra.mxu0 0
    %1838 = vmatprep.subr.bf16.mxu0 0
    %1839 = vmatpush2.bf16.msra.mxu0 0
    %1840 = vmatprep.subr.bf16.mxu0 0
    %1841 = vmatpush2.bf16.msra.mxu0 0
    %1842 = vmatprep.subr.bf16.mxu0 0
    %1843 = vmatpush2.bf16.msra.mxu0 0
    %1844 = vmatprep.subr.bf16.mxu0 0
    %1845 = vmatpush2.bf16.msra.mxu0 0
    %1846 = vmatprep.subr.bf16.mxu0 0
    %1847 = vmatpush2.bf16.msra.mxu0 0
    %1848 = vmatprep.mubr.bf16.mxu0 0
    %1849 = vmatmul.mubr.bf16.gmra.mxu0 %v1814
    %v1850 = vpop.f32.mrf.mxu0
    %v1851 = vadd.f32 %v1585, %v1850
    %v1852 = vpop.f32.mrf.mxu0
    %v1853 = vadd.f32 %v1587, %v1852
    %v1854 = vpop.f32.mrf.mxu0
    %v1855 = vadd.f32 %v1589, %v1854
    %v1856 = vpop.f32.mrf.mxu0
    %v1857 = vadd.f32 %v1591, %v1856
    %1858 = vdwg.mxu0
    %1859 = vmatprep.subr.bf16.mxu0 0
    %1860 = vmatpush1.bf16.msra.mxu0 0
    %1861 = vmatprep.subr.bf16.mxu0 0
    %1862 = vmatpush1.bf16.msra.mxu0 0
    %1863 = vmatprep.subr.bf16.mxu0 0
    %1864 = vmatpush1.bf16.msra.mxu0 0
    %1865 = vmatprep.subr.bf16.mxu0 0
    %1866 = vmatpush1.bf16.msra.mxu0 0
    %1867 = vmatprep.subr.bf16.mxu0 0
    %1868 = vmatpush1.bf16.msra.mxu0 0
    %1869 = vmatprep.subr.bf16.mxu0 0
    %1870 = vmatpush1.bf16.msra.mxu0 0
    %1871 = vmatprep.subr.bf16.mxu0 0
    %1872 = vmatpush1.bf16.msra.mxu0 0
    %1873 = vmatprep.subr.bf16.mxu0 %v1521
    %1874 = vmatpush1.bf16.msra.mxu0 %v1520
    %1875 = vmatprep.subr.bf16.mxu0 0
    %1876 = vmatpush2.bf16.msra.mxu0 0
    %1877 = vmatprep.subr.bf16.mxu0 0
    %1878 = vmatpush2.bf16.msra.mxu0 0
    %1879 = vmatprep.subr.bf16.mxu0 0
    %1880 = vmatpush2.bf16.msra.mxu0 0
    %1881 = vmatprep.subr.bf16.mxu0 0
    %1882 = vmatpush2.bf16.msra.mxu0 0
    %1883 = vmatprep.subr.bf16.mxu0 0
    %1884 = vmatpush2.bf16.msra.mxu0 0
    %1885 = vmatprep.subr.bf16.mxu0 0
    %1886 = vmatpush2.bf16.msra.mxu0 0
    %1887 = vmatprep.subr.bf16.mxu0 0
    %1888 = vmatpush2.bf16.msra.mxu0 0
    %1889 = vmatprep.subr.bf16.mxu0 0
    %1890 = vmatpush2.bf16.msra.mxu0 0
    %1891 = vmatprep.mubr.bf16.mxu0 0
    %1892 = vmatmul.mubr.bf16.gmra.mxu0 %v1814
    %v1893 = vpop.f32.mrf.mxu0
    %v1894 = vadd.f32 %v1628, %v1893
    %v1895 = vpop.f32.mrf.mxu0
    %v1896 = vadd.f32 %v1630, %v1895
    %v1897 = vpop.f32.mrf.mxu0
    %v1898 = vadd.f32 %v1632, %v1897
    %v1899 = vpop.f32.mrf.mxu0
    %v1900 = vadd.f32 %v1634, %v1899
    %1901 = vdwg.mxu0
    %1902 = vmatprep.subr.bf16.mxu0 0
    %1903 = vmatpush1.bf16.msra.mxu0 0
    %1904 = vmatprep.subr.bf16.mxu0 0
    %1905 = vmatpush1.bf16.msra.mxu0 0
    %1906 = vmatprep.subr.bf16.mxu0 0
    %1907 = vmatpush1.bf16.msra.mxu0 0
    %1908 = vmatprep.subr.bf16.mxu0 0
    %1909 = vmatpush1.bf16.msra.mxu0 0
    %1910 = vmatprep.subr.bf16.mxu0 0
    %1911 = vmatpush1.bf16.msra.mxu0 0
    %1912 = vmatprep.subr.bf16.mxu0 0
    %1913 = vmatpush1.bf16.msra.mxu0 0
    %1914 = vmatprep.subr.bf16.mxu0 0
    %1915 = vmatpush1.bf16.msra.mxu0 0
    %1916 = vmatprep.subr.bf16.mxu0 %v1523
    %1917 = vmatpush1.bf16.msra.mxu0 %v1522
    %1918 = vmatprep.subr.bf16.mxu0 0
    %1919 = vmatpush2.bf16.msra.mxu0 0
    %1920 = vmatprep.subr.bf16.mxu0 0
    %1921 = vmatpush2.bf16.msra.mxu0 0
    %1922 = vmatprep.subr.bf16.mxu0 0
    %1923 = vmatpush2.bf16.msra.mxu0 0
    %1924 = vmatprep.subr.bf16.mxu0 0
    %1925 = vmatpush2.bf16.msra.mxu0 0
    %1926 = vmatprep.subr.bf16.mxu0 0
    %1927 = vmatpush2.bf16.msra.mxu0 0
    %1928 = vmatprep.subr.bf16.mxu0 0
    %1929 = vmatpush2.bf16.msra.mxu0 0
    %1930 = vmatprep.subr.bf16.mxu0 0
    %1931 = vmatpush2.bf16.msra.mxu0 0
    %1932 = vmatprep.subr.bf16.mxu0 0
    %1933 = vmatpush2.bf16.msra.mxu0 0
    %1934 = vmatprep.mubr.bf16.mxu0 0
    %1935 = vmatmul.mubr.bf16.gmra.mxu0 %v1814
    %v1936 = vpop.f32.mrf.mxu0
    %v1937 = vadd.f32 %v1671, %v1936
    %v1938 = vpop.f32.mrf.mxu0
    %v1939 = vadd.f32 %v1673, %v1938
    %v1940 = vpop.f32.mrf.mxu0
    %v1941 = vadd.f32 %v1675, %v1940
    %v1942 = vpop.f32.mrf.mxu0
    %v1943 = vadd.f32 %v1677, %v1942
    %1944 = vdwg.mxu0
    %1945 = vmatprep.subr.bf16.mxu0 0
    %1946 = vmatpush1.bf16.msra.mxu0 0
    %1947 = vmatprep.subr.bf16.mxu0 0
    %1948 = vmatpush1.bf16.msra.mxu0 0
    %1949 = vmatprep.subr.bf16.mxu0 0
    %1950 = vmatpush1.bf16.msra.mxu0 0
    %1951 = vmatprep.subr.bf16.mxu0 0
    %1952 = vmatpush1.bf16.msra.mxu0 0
    %1953 = vmatprep.subr.bf16.mxu0 0
    %1954 = vmatpush1.bf16.msra.mxu0 0
    %1955 = vmatprep.subr.bf16.mxu0 0
    %1956 = vmatpush1.bf16.msra.mxu0 0
    %1957 = vmatprep.subr.bf16.mxu0 0
    %1958 = vmatpush1.bf16.msra.mxu0 0
    %1959 = vmatprep.subr.bf16.mxu0 %v1525
    %1960 = vmatpush1.bf16.msra.mxu0 %v1524
    %1961 = vmatprep.subr.bf16.mxu0 0
    %1962 = vmatpush2.bf16.msra.mxu0 0
    %1963 = vmatprep.subr.bf16.mxu0 0
    %1964 = vmatpush2.bf16.msra.mxu0 0
    %1965 = vmatprep.subr.bf16.mxu0 0
    %1966 = vmatpush2.bf16.msra.mxu0 0
    %1967 = vmatprep.subr.bf16.mxu0 0
    %1968 = vmatpush2.bf16.msra.mxu0 0
    %1969 = vmatprep.subr.bf16.mxu0 0
    %1970 = vmatpush2.bf16.msra.mxu0 0
    %1971 = vmatprep.subr.bf16.mxu0 0
    %1972 = vmatpush2.bf16.msra.mxu0 0
    %1973 = vmatprep.subr.bf16.mxu0 0
    %1974 = vmatpush2.bf16.msra.mxu0 0
    %1975 = vmatprep.subr.bf16.mxu0 0
    %1976 = vmatpush2.bf16.msra.mxu0 0
    %1977 = vmatprep.mubr.bf16.mxu0 0
    %1978 = vmatmul.mubr.bf16.gmra.mxu0 %v1814
    %v1979 = vpop.f32.mrf.mxu0
    %v1980 = vadd.f32 %v1714, %v1979
    %v1981 = vpop.f32.mrf.mxu0
    %v1982 = vadd.f32 %v1716, %v1981
    %v1983 = vpop.f32.mrf.mxu0
    %v1984 = vadd.f32 %v1718, %v1983
    %v1985 = vpop.f32.mrf.mxu0
    %v1986 = vadd.f32 %v1720, %v1985
    %1987 = vdwg.mxu0
    %1988 = vmatprep.subr.bf16.mxu0 0
    %1989 = vmatpush1.bf16.msra.mxu0 0
    %1990 = vmatprep.subr.bf16.mxu0 0
    %1991 = vmatpush1.bf16.msra.mxu0 0
    %1992 = vmatprep.subr.bf16.mxu0 0
    %1993 = vmatpush1.bf16.msra.mxu0 0
    %1994 = vmatprep.subr.bf16.mxu0 0
    %1995 = vmatpush1.bf16.msra.mxu0 0
    %1996 = vmatprep.subr.bf16.mxu0 0
    %1997 = vmatpush1.bf16.msra.mxu0 0
    %1998 = vmatprep.subr.bf16.mxu0 0
    %1999 = vmatpush1.bf16.msra.mxu0 0
    %2000 = vmatprep.subr.bf16.mxu0 0
    %2001 = vmatpush1.bf16.msra.mxu0 0
    %2002 = vmatprep.subr.bf16.mxu0 %v1527
    %2003 = vmatpush1.bf16.msra.mxu0 %v1526
    %2004 = vmatprep.subr.bf16.mxu0 0
    %2005 = vmatpush2.bf16.msra.mxu0 0
    %2006 = vmatprep.subr.bf16.mxu0 0
    %2007 = vmatpush2.bf16.msra.mxu0 0
    %2008 = vmatprep.subr.bf16.mxu0 0
    %2009 = vmatpush2.bf16.msra.mxu0 0
    %2010 = vmatprep.subr.bf16.mxu0 0
    %2011 = vmatpush2.bf16.msra.mxu0 0
    %2012 = vmatprep.subr.bf16.mxu0 0
    %2013 = vmatpush2.bf16.msra.mxu0 0
    %2014 = vmatprep.subr.bf16.mxu0 0
    %2015 = vmatpush2.bf16.msra.mxu0 0
    %2016 = vmatprep.subr.bf16.mxu0 0
    %2017 = vmatpush2.bf16.msra.mxu0 0
    %2018 = vmatprep.subr.bf16.mxu0 0
    %2019 = vmatpush2.bf16.msra.mxu0 0
    %2020 = vmatprep.mubr.bf16.mxu0 0
    %2021 = vmatmul.mubr.bf16.gmra.mxu0 %v1814
    %v2022 = vpop.f32.mrf.mxu0
    %v2023 = vadd.f32 %v1757, %v2022
    %v2024 = vpop.f32.mrf.mxu0
    %v2025 = vadd.f32 %v1759, %v2024
    %v2026 = vpop.f32.mrf.mxu0
    %v2027 = vadd.f32 %v1761, %v2026
    %v2028 = vpop.f32.mrf.mxu0
    %v2029 = vadd.f32 %v1763, %v2028
    %2030 = vdwg.mxu0
    %2031 = vmatprep.subr.bf16.mxu0 0
    %2032 = vmatpush1.bf16.msra.mxu0 0
    %2033 = vmatprep.subr.bf16.mxu0 0
    %2034 = vmatpush1.bf16.msra.mxu0 0
    %2035 = vmatprep.subr.bf16.mxu0 0
    %2036 = vmatpush1.bf16.msra.mxu0 0
    %2037 = vmatprep.subr.bf16.mxu0 0
    %2038 = vmatpush1.bf16.msra.mxu0 0
    %2039 = vmatprep.subr.bf16.mxu0 0
    %2040 = vmatpush1.bf16.msra.mxu0 0
    %2041 = vmatprep.subr.bf16.mxu0 0
    %2042 = vmatpush1.bf16.msra.mxu0 0
    %2043 = vmatprep.subr.bf16.mxu0 0
    %2044 = vmatpush1.bf16.msra.mxu0 0
    %2045 = vmatprep.subr.bf16.mxu0 %v1529
    %2046 = vmatpush1.bf16.msra.mxu0 %v1528
    %2047 = vmatprep.subr.bf16.mxu0 0
    %2048 = vmatpush2.bf16.msra.mxu0 0
    %2049 = vmatprep.subr.bf16.mxu0 0
    %2050 = vmatpush2.bf16.msra.mxu0 0
    %2051 = vmatprep.subr.bf16.mxu0 0
    %2052 = vmatpush2.bf16.msra.mxu0 0
    %2053 = vmatprep.subr.bf16.mxu0 0
    %2054 = vmatpush2.bf16.msra.mxu0 0
    %2055 = vmatprep.subr.bf16.mxu0 0
    %2056 = vmatpush2.bf16.msra.mxu0 0
    %2057 = vmatprep.subr.bf16.mxu0 0
    %2058 = vmatpush2.bf16.msra.mxu0 0
    %2059 = vmatprep.subr.bf16.mxu0 0
    %2060 = vmatpush2.bf16.msra.mxu0 0
    %2061 = vmatprep.subr.bf16.mxu0 0
    %2062 = vmatpush2.bf16.msra.mxu0 0
    %2063 = vmatprep.mubr.bf16.mxu0 0
    %2064 = vmatmul.mubr.bf16.gmra.mxu0 %v1814
    %v2065 = vpop.f32.mrf.mxu0
    %v2066 = vadd.f32 %v1800, %v2065
    %v2067 = vpop.f32.mrf.mxu0
    %v2068 = vadd.f32 %v1802, %v2067
    %v2069 = vpop.f32.mrf.mxu0
    %v2070 = vadd.f32 %v1804, %v2069
    %v2071 = vpop.f32.mrf.mxu0
    %v2072 = vadd.f32 %v1806, %v2071
    %2073 = vdwg.mxu0
    %s2074 = scalar_lea.vmem %s5, 16
    %v2075 = vld [vmem:[%s2074] sm:$0xf]
    %v2076 = vld [vmem:[%s2074 + $0x4] sm:$0xf]
    %v2079 = vunpack.c.l.b16 %v2075
    %v2080 = vunpack.c.l.b16 %v2076
    %v2081 = vpack.c.b16 %v2080, %v2079
    %v2083 = vsel %vm1546, %v2081, 0
    %2085 = vmatprep.subr.bf16.mxu0 0
    %2086 = vmatpush1.bf16.msra.mxu0 0
    %2087 = vmatprep.subr.bf16.mxu0 0
    %2088 = vmatpush1.bf16.msra.mxu0 0
    %2089 = vmatprep.subr.bf16.mxu0 0
    %2090 = vmatpush1.bf16.msra.mxu0 0
    %2091 = vmatprep.subr.bf16.mxu0 0
    %2092 = vmatpush1.bf16.msra.mxu0 0
    %2093 = vmatprep.subr.bf16.mxu0 0
    %2094 = vmatpush1.bf16.msra.mxu0 0
    %2095 = vmatprep.subr.bf16.mxu0 0
    %2096 = vmatpush1.bf16.msra.mxu0 0
    %2097 = vmatprep.subr.bf16.mxu0 0
    %2098 = vmatpush1.bf16.msra.mxu0 0
    %2099 = vmatprep.subr.bf16.mxu0 %v1521
    %2100 = vmatpush1.bf16.msra.mxu0 %v1520
    %2101 = vmatprep.subr.bf16.mxu0 0
    %2102 = vmatpush2.bf16.msra.mxu0 0
    %2103 = vmatprep.subr.bf16.mxu0 0
    %2104 = vmatpush2.bf16.msra.mxu0 0
    %2105 = vmatprep.subr.bf16.mxu0 0
    %2106 = vmatpush2.bf16.msra.mxu0 0
    %2107 = vmatprep.subr.bf16.mxu0 0
    %2108 = vmatpush2.bf16.msra.mxu0 0
    %2109 = vmatprep.subr.bf16.mxu0 0
    %2110 = vmatpush2.bf16.msra.mxu0 0
    %2111 = vmatprep.subr.bf16.mxu0 0
    %2112 = vmatpush2.bf16.msra.mxu0 0
    %2113 = vmatprep.subr.bf16.mxu0 0
    %2114 = vmatpush2.bf16.msra.mxu0 0
    %2115 = vmatprep.subr.bf16.mxu0 0
    %2116 = vmatpush2.bf16.msra.mxu0 0
    %2117 = vmatprep.mubr.bf16.mxu0 0
    %2118 = vmatmul.mubr.bf16.gmra.mxu0 %v2083
    %v2119 = vpop.f32.mrf.mxu0
    %v2120 = vadd.f32 0.0, %v2119
    %v2121 = vpop.f32.mrf.mxu0
    %v2122 = vadd.f32 0.0, %v2121
    %v2123 = vpop.f32.mrf.mxu0
    %v2124 = vadd.f32 0.0, %v2123
    %v2125 = vpop.f32.mrf.mxu0
    %v2126 = vadd.f32 0.0, %v2125
    %2127 = vdwg.mxu0
    %2128 = vmatprep.subr.bf16.mxu0 0
    %2129 = vmatpush1.bf16.msra.mxu0 0
    %2130 = vmatprep.subr.bf16.mxu0 0
    %2131 = vmatpush1.bf16.msra.mxu0 0
    %2132 = vmatprep.subr.bf16.mxu0 0
    %2133 = vmatpush1.bf16.msra.mxu0 0
    %2134 = vmatprep.subr.bf16.mxu0 0
    %2135 = vmatpush1.bf16.msra.mxu0 0
    %2136 = vmatprep.subr.bf16.mxu0 0
    %2137 = vmatpush1.bf16.msra.mxu0 0
    %2138 = vmatprep.subr.bf16.mxu0 0
    %2139 = vmatpush1.bf16.msra.mxu0 0
    %2140 = vmatprep.subr.bf16.mxu0 0
    %2141 = vmatpush1.bf16.msra.mxu0 0
    %2142 = vmatprep.subr.bf16.mxu0 %v1523
    %2143 = vmatpush1.bf16.msra.mxu0 %v1522
    %2144 = vmatprep.subr.bf16.mxu0 0
    %2145 = vmatpush2.bf16.msra.mxu0 0
    %2146 = vmatprep.subr.bf16.mxu0 0
    %2147 = vmatpush2.bf16.msra.mxu0 0
    %2148 = vmatprep.subr.bf16.mxu0 0
    %2149 = vmatpush2.bf16.msra.mxu0 0
    %2150 = vmatprep.subr.bf16.mxu0 0
    %2151 = vmatpush2.bf16.msra.mxu0 0
    %2152 = vmatprep.subr.bf16.mxu0 0
    %2153 = vmatpush2.bf16.msra.mxu0 0
    %2154 = vmatprep.subr.bf16.mxu0 0
    %2155 = vmatpush2.bf16.msra.mxu0 0
    %2156 = vmatprep.subr.bf16.mxu0 0
    %2157 = vmatpush2.bf16.msra.mxu0 0
    %2158 = vmatprep.subr.bf16.mxu0 0
    %2159 = vmatpush2.bf16.msra.mxu0 0
    %2160 = vmatprep.mubr.bf16.mxu0 0
    %2161 = vmatmul.mubr.bf16.gmra.mxu0 %v2083
    %v2162 = vpop.f32.mrf.mxu0
    %v2163 = vadd.f32 0.0, %v2162
    %v2164 = vpop.f32.mrf.mxu0
    %v2165 = vadd.f32 0.0, %v2164
    %v2166 = vpop.f32.mrf.mxu0
    %v2167 = vadd.f32 0.0, %v2166
    %v2168 = vpop.f32.mrf.mxu0
    %v2169 = vadd.f32 0.0, %v2168
    %2170 = vdwg.mxu0
    %2171 = vmatprep.subr.bf16.mxu0 0
    %2172 = vmatpush1.bf16.msra.mxu0 0
    %2173 = vmatprep.subr.bf16.mxu0 0
    %2174 = vmatpush1.bf16.msra.mxu0 0
    %2175 = vmatprep.subr.bf16.mxu0 0
    %2176 = vmatpush1.bf16.msra.mxu0 0
    %2177 = vmatprep.subr.bf16.mxu0 0
    %2178 = vmatpush1.bf16.msra.mxu0 0
    %2179 = vmatprep.subr.bf16.mxu0 0
    %2180 = vmatpush1.bf16.msra.mxu0 0
    %2181 = vmatprep.subr.bf16.mxu0 0
    %2182 = vmatpush1.bf16.msra.mxu0 0
    %2183 = vmatprep.subr.bf16.mxu0 0
    %2184 = vmatpush1.bf16.msra.mxu0 0
    %2185 = vmatprep.subr.bf16.mxu0 %v1525
    %2186 = vmatpush1.bf16.msra.mxu0 %v1524
    %2187 = vmatprep.subr.bf16.mxu0 0
    %2188 = vmatpush2.bf16.msra.mxu0 0
    %2189 = vmatprep.subr.bf16.mxu0 0
    %2190 = vmatpush2.bf16.msra.mxu0 0
    %2191 = vmatprep.subr.bf16.mxu0 0
    %2192 = vmatpush2.bf16.msra.mxu0 0
    %2193 = vmatprep.subr.bf16.mxu0 0
    %2194 = vmatpush2.bf16.msra.mxu0 0
    %2195 = vmatprep.subr.bf16.mxu0 0
    %2196 = vmatpush2.bf16.msra.mxu0 0
    %2197 = vmatprep.subr.bf16.mxu0 0
    %2198 = vmatpush2.bf16.msra.mxu0 0
    %2199 = vmatprep.subr.bf16.mxu0 0
    %2200 = vmatpush2.bf16.msra.mxu0 0
    %2201 = vmatprep.subr.bf16.mxu0 0
    %2202 = vmatpush2.bf16.msra.mxu0 0
    %2203 = vmatprep.mubr.bf16.mxu0 0
    %2204 = vmatmul.mubr.bf16.gmra.mxu0 %v2083
    %v2205 = vpop.f32.mrf.mxu0
    %v2206 = vadd.f32 0.0, %v2205
    %v2207 = vpop.f32.mrf.mxu0
    %v2208 = vadd.f32 0.0, %v2207
    %v2209 = vpop.f32.mrf.mxu0
    %v2210 = vadd.f32 0.0, %v2209
    %v2211 = vpop.f32.mrf.mxu0
    %v2212 = vadd.f32 0.0, %v2211
    %2213 = vdwg.mxu0
    %2214 = vmatprep.subr.bf16.mxu0 0
    %2215 = vmatpush1.bf16.msra.mxu0 0
    %2216 = vmatprep.subr.bf16.mxu0 0
    %2217 = vmatpush1.bf16.msra.mxu0 0
    %2218 = vmatprep.subr.bf16.mxu0 0
    %2219 = vmatpush1.bf16.msra.mxu0 0
    %2220 = vmatprep.subr.bf16.mxu0 0
    %2221 = vmatpush1.bf16.msra.mxu0 0
    %2222 = vmatprep.subr.bf16.mxu0 0
    %2223 = vmatpush1.bf16.msra.mxu0 0
    %2224 = vmatprep.subr.bf16.mxu0 0
    %2225 = vmatpush1.bf16.msra.mxu0 0
    %2226 = vmatprep.subr.bf16.mxu0 0
    %2227 = vmatpush1.bf16.msra.mxu0 0
    %2228 = vmatprep.subr.bf16.mxu0 %v1527
    %2229 = vmatpush1.bf16.msra.mxu0 %v1526
    %2230 = vmatprep.subr.bf16.mxu0 0
    %2231 = vmatpush2.bf16.msra.mxu0 0
    %2232 = vmatprep.subr.bf16.mxu0 0
    %2233 = vmatpush2.bf16.msra.mxu0 0
    %2234 = vmatprep.subr.bf16.mxu0 0
    %2235 = vmatpush2.bf16.msra.mxu0 0
    %2236 = vmatprep.subr.bf16.mxu0 0
    %2237 = vmatpush2.bf16.msra.mxu0 0
    %2238 = vmatprep.subr.bf16.mxu0 0
    %2239 = vmatpush2.bf16.msra.mxu0 0
    %2240 = vmatprep.subr.bf16.mxu0 0
    %2241 = vmatpush2.bf16.msra.mxu0 0
    %2242 = vmatprep.subr.bf16.mxu0 0
    %2243 = vmatpush2.bf16.msra.mxu0 0
    %2244 = vmatprep.subr.bf16.mxu0 0
    %2245 = vmatpush2.bf16.msra.mxu0 0
    %2246 = vmatprep.mubr.bf16.mxu0 0
    %2247 = vmatmul.mubr.bf16.gmra.mxu0 %v2083
    %v2248 = vpop.f32.mrf.mxu0
    %v2249 = vadd.f32 0.0, %v2248
    %v2250 = vpop.f32.mrf.mxu0
    %v2251 = vadd.f32 0.0, %v2250
    %v2252 = vpop.f32.mrf.mxu0
    %v2253 = vadd.f32 0.0, %v2252
    %v2254 = vpop.f32.mrf.mxu0
    %v2255 = vadd.f32 0.0, %v2254
    %2256 = vdwg.mxu0
    %2257 = vmatprep.subr.bf16.mxu0 0
    %2258 = vmatpush1.bf16.msra.mxu0 0
    %2259 = vmatprep.subr.bf16.mxu0 0
    %2260 = vmatpush1.bf16.msra.mxu0 0
    %2261 = vmatprep.subr.bf16.mxu0 0
    %2262 = vmatpush1.bf16.msra.mxu0 0
    %2263 = vmatprep.subr.bf16.mxu0 0
    %2264 = vmatpush1.bf16.msra.mxu0 0
    %2265 = vmatprep.subr.bf16.mxu0 0
    %2266 = vmatpush1.bf16.msra.mxu0 0
    %2267 = vmatprep.subr.bf16.mxu0 0
    %2268 = vmatpush1.bf16.msra.mxu0 0
    %2269 = vmatprep.subr.bf16.mxu0 0
    %2270 = vmatpush1.bf16.msra.mxu0 0
    %2271 = vmatprep.subr.bf16.mxu0 %v1529
    %2272 = vmatpush1.bf16.msra.mxu0 %v1528
    %2273 = vmatprep.subr.bf16.mxu0 0
    %2274 = vmatpush2.bf16.msra.mxu0 0
    %2275 = vmatprep.subr.bf16.mxu0 0
    %2276 = vmatpush2.bf16.msra.mxu0 0
    %2277 = vmatprep.subr.bf16.mxu0 0
    %2278 = vmatpush2.bf16.msra.mxu0 0
    %2279 = vmatprep.subr.bf16.mxu0 0
    %2280 = vmatpush2.bf16.msra.mxu0 0
    %2281 = vmatprep.subr.bf16.mxu0 0
    %2282 = vmatpush2.bf16.msra.mxu0 0
    %2283 = vmatprep.subr.bf16.mxu0 0
    %2284 = vmatpush2.bf16.msra.mxu0 0
    %2285 = vmatprep.subr.bf16.mxu0 0
    %2286 = vmatpush2.bf16.msra.mxu0 0
    %2287 = vmatprep.subr.bf16.mxu0 0
    %2288 = vmatpush2.bf16.msra.mxu0 0
    %2289 = vmatprep.mubr.bf16.mxu0 0
    %2290 = vmatmul.mubr.bf16.gmra.mxu0 %v2083
    %v2291 = vpop.f32.mrf.mxu0
    %v2292 = vadd.f32 0.0, %v2291
    %v2293 = vpop.f32.mrf.mxu0
    %v2294 = vadd.f32 0.0, %v2293
    %v2295 = vpop.f32.mrf.mxu0
    %v2296 = vadd.f32 0.0, %v2295
    %v2297 = vpop.f32.mrf.mxu0
    %v2298 = vadd.f32 0.0, %v2297
    %2299 = vdwg.mxu0
    %2300 = vmatprep.subr.bf16.mxu0 0
    %2301 = vmatpush1.bf16.msra.mxu0 0
    %2302 = vmatprep.subr.bf16.mxu0 0
    %2303 = vmatpush1.bf16.msra.mxu0 0
    %2304 = vmatprep.subr.bf16.mxu0 0
    %2305 = vmatpush1.bf16.msra.mxu0 0
    %2306 = vmatprep.subr.bf16.mxu0 0
    %2307 = vmatpush1.bf16.msra.mxu0 0
    %2308 = vmatprep.subr.bf16.mxu0 0
    %2309 = vmatpush1.bf16.msra.mxu0 0
    %2310 = vmatprep.subr.bf16.mxu0 0
    %2311 = vmatpush1.bf16.msra.mxu0 0
    %2312 = vmatprep.subr.bf16.mxu0 0
    %2313 = vmatpush1.bf16.msra.mxu0 0
    %2314 = vmatprep.subr.bf16.mxu0 %v1531
    %2315 = vmatpush1.bf16.msra.mxu0 %v1530
    %2316 = vmatprep.subr.bf16.mxu0 0
    %2317 = vmatpush2.bf16.msra.mxu0 0
    %2318 = vmatprep.subr.bf16.mxu0 0
    %2319 = vmatpush2.bf16.msra.mxu0 0
    %2320 = vmatprep.subr.bf16.mxu0 0
    %2321 = vmatpush2.bf16.msra.mxu0 0
    %2322 = vmatprep.subr.bf16.mxu0 0
    %2323 = vmatpush2.bf16.msra.mxu0 0
    %2324 = vmatprep.subr.bf16.mxu0 0
    %2325 = vmatpush2.bf16.msra.mxu0 0
    %2326 = vmatprep.subr.bf16.mxu0 0
    %2327 = vmatpush2.bf16.msra.mxu0 0
    %2328 = vmatprep.subr.bf16.mxu0 0
    %2329 = vmatpush2.bf16.msra.mxu0 0
    %2330 = vmatprep.subr.bf16.mxu0 0
    %2331 = vmatpush2.bf16.msra.mxu0 0
    %2332 = vmatprep.mubr.bf16.mxu0 0
    %2333 = vmatmul.mubr.bf16.gmra.mxu0 %v2083
    %v2334 = vpop.f32.mrf.mxu0
    %v2335 = vadd.f32 0.0, %v2334
    %v2336 = vpop.f32.mrf.mxu0
    %v2337 = vadd.f32 0.0, %v2336
    %v2338 = vpop.f32.mrf.mxu0
    %v2339 = vadd.f32 0.0, %v2338
    %v2340 = vpop.f32.mrf.mxu0
    %v2341 = vadd.f32 0.0, %v2340
    %2342 = vdwg.mxu0
    %v2343 = vadd.f32 %v1851, %v2120
    %v2344 = vadd.f32 %v1853, %v2122
    %v2345 = vadd.f32 %v1894, %v2163
    %v2346 = vadd.f32 %v1896, %v2165
    %v2347 = vadd.f32 %v1937, %v2206
    %v2348 = vadd.f32 %v1939, %v2208
    %v2349 = vadd.f32 %v1980, %v2249
    %v2350 = vadd.f32 %v1982, %v2251
    %v2351 = vadd.f32 %v2023, %v2292
    %v2352 = vadd.f32 %v2025, %v2294
    %v2353 = vadd.f32 %v2066, %v2335
    %v2354 = vadd.f32 %v2068, %v2337
    %v2355 = vadd.f32 %v1855, %v2124
    %v2356 = vadd.f32 %v1857, %v2126
    %v2357 = vadd.f32 %v1898, %v2167
    %v2358 = vadd.f32 %v1900, %v2169
    %v2359 = vadd.f32 %v1941, %v2210
    %v2360 = vadd.f32 %v1943, %v2212
    %v2361 = vadd.f32 %v1984, %v2253
    %v2362 = vadd.f32 %v1986, %v2255
    %v2363 = vadd.f32 %v2027, %v2296
    %v2364 = vadd.f32 %v2029, %v2298
    %v2365 = vadd.f32 %v2070, %v2339
    %v2366 = vadd.f32 %v2072, %v2341
    %v2367 = vadd.f32 %v2343, %v2344
    %v2368 = vadd.f32 %v2367, %v2345
    %v2369 = vadd.f32 %v2368, %v2346
    %v2370 = vadd.f32 %v2369, %v2347
    %v2371 = vadd.f32 %v2370, %v2348
    %v2372 = vadd.f32 %v2371, %v2349
    %v2373 = vadd.f32 %v2372, %v2350
    %v2374 = vadd.f32 %v2373, %v2351
    %v2375 = vadd.f32 %v2374, %v2352
    %v2376 = vadd.f32 %v2375, %v2353
    %v2377 = vadd.f32 %v2376, %v2354
    %2378 = vadd.xlane.f32.xlu0 %v2377
    %v2379 = vpop.xlane.xlu0 %2378
    %v2380 = vadd.f32 %v2355, %v2356
    %v2381 = vadd.f32 %v2380, %v2357
    %v2382 = vadd.f32 %v2381, %v2358
    %v2383 = vadd.f32 %v2382, %v2359
    %v2384 = vadd.f32 %v2383, %v2360
    %v2385 = vadd.f32 %v2384, %v2361
    %v2386 = vadd.f32 %v2385, %v2362
    %v2387 = vadd.f32 %v2386, %v2363
    %v2388 = vadd.f32 %v2387, %v2364
    %v2389 = vadd.f32 %v2388, %v2365
    %v2390 = vadd.f32 %v2389, %v2366
    %2391 = vadd.xlane.f32.xlu0 %v2390
    %v2392 = vpop.xlane.xlu0 %2391
    %v2393 = vmul.f32 %v2379, 0.041666668
    %v2394 = vmul.f32 %v2392, 0.041666668
    %v2395 = vmul.f32 %v2343, %v2343
    %v2396 = vmul.f32 %v2344, %v2344
    %v2397 = vmul.f32 %v2345, %v2345
    %v2398 = vmul.f32 %v2346, %v2346
    %v2399 = vmul.f32 %v2347, %v2347
    %v2400 = vmul.f32 %v2348, %v2348
    %v2401 = vmul.f32 %v2349, %v2349
    %v2402 = vmul.f32 %v2350, %v2350
    %v2403 = vmul.f32 %v2351, %v2351
    %v2404 = vmul.f32 %v2352, %v2352
    %v2405 = vmul.f32 %v2353, %v2353
    %v2406 = vmul.f32 %v2354, %v2354
    %v2407 = vmul.f32 %v2355, %v2355
    %v2408 = vmul.f32 %v2356, %v2356
    %v2409 = vmul.f32 %v2357, %v2357
    %v2410 = vmul.f32 %v2358, %v2358
    %v2411 = vmul.f32 %v2359, %v2359
    %v2412 = vmul.f32 %v2360, %v2360
    %v2413 = vmul.f32 %v2361, %v2361
    %v2414 = vmul.f32 %v2362, %v2362
    %v2415 = vmul.f32 %v2363, %v2363
    %v2416 = vmul.f32 %v2364, %v2364
    %v2417 = vmul.f32 %v2365, %v2365
    %v2418 = vmul.f32 %v2366, %v2366
    %v2419 = vadd.f32 %v2395, %v2396
    %v2420 = vadd.f32 %v2419, %v2397
    %v2421 = vadd.f32 %v2420, %v2398
    %v2422 = vadd.f32 %v2421, %v2399
    %v2423 = vadd.f32 %v2422, %v2400
    %v2424 = vadd.f32 %v2423, %v2401
    %v2425 = vadd.f32 %v2424, %v2402
    %v2426 = vadd.f32 %v2425, %v2403
    %v2427 = vadd.f32 %v2426, %v2404
    %v2428 = vadd.f32 %v2427, %v2405
    %v2429 = vadd.f32 %v2428, %v2406
    %2430 = vadd.xlane.f32.xlu0 %v2429
    %v2431 = vpop.xlane.xlu0 %2430
    %v2432 = vadd.f32 %v2407, %v2408
    %v2433 = vadd.f32 %v2432, %v2409
    %v2434 = vadd.f32 %v2433, %v2410
    %v2435 = vadd.f32 %v2434, %v2411
    %v2436 = vadd.f32 %v2435, %v2412
    %v2437 = vadd.f32 %v2436, %v2413
    %v2438 = vadd.f32 %v2437, %v2414
    %v2439 = vadd.f32 %v2438, %v2415
    %v2440 = vadd.f32 %v2439, %v2416
    %v2441 = vadd.f32 %v2440, %v2417
    %v2442 = vadd.f32 %v2441, %v2418
    %2443 = vadd.xlane.f32.xlu0 %v2442
    %v2444 = vpop.xlane.xlu0 %2443
    %v2445 = vmul.f32 %v2431, 0.041666668
    %v2446 = vmul.f32 %v2444, 0.041666668
    %v2447 = vmul.f32 %v2393, %v2393
    %v2448 = vmul.f32 %v2394, %v2394
    %v2449 = vsub.f32 %v2445, %v2447
    %v2450 = vsub.f32 %v2446, %v2448
    %v2451 = vmax.f32 %v2449, 0.0
    %v2452 = vmax.f32 %v2450, 0.0
    %v2453 = vadd.f32 %v2451, 1e-05
    %v2454 = vadd.f32 %v2452, 1e-05
    %v2455 = vrsqrt.pop %v2453
    %v2456 = vrsqrt.pop %v2454
    %v2457 = vmul.f32 %v1532, %v2455
    %v2458 = vmul.f32 %v1533, %v2456
    %2460 = vset.pattern.permute.xlu0 0
    %2461 = vperm.xlu0 %2460, %v2457
    %v2462 = vpop.permute.xlu0 %2461
    %2465 = vset.pattern.permute.xlu0 0
    %2466 = vperm.xlu0 %2465, %v2458
    %v2467 = vpop.permute.xlu0 %2466
    %v2469 = vmul.f32 %v2343, %v2462
    %v2470 = vmul.f32 %v2344, %v2462
    %v2471 = vmul.f32 %v2345, %v2462
    %v2472 = vmul.f32 %v2346, %v2462
    %v2473 = vmul.f32 %v2347, %v2462
    %v2474 = vmul.f32 %v2348, %v2462
    %v2475 = vmul.f32 %v2349, %v2462
    %v2476 = vmul.f32 %v2350, %v2462
    %v2477 = vmul.f32 %v2351, %v2462
    %v2478 = vmul.f32 %v2352, %v2462
    %v2479 = vmul.f32 %v2353, %v2462
    %v2480 = vmul.f32 %v2354, %v2462
    %v2481 = vmul.f32 %v2355, %v2467
    %v2482 = vmul.f32 %v2356, %v2467
    %v2483 = vmul.f32 %v2357, %v2467
    %v2484 = vmul.f32 %v2358, %v2467
    %v2485 = vmul.f32 %v2359, %v2467
    %v2486 = vmul.f32 %v2360, %v2467
    %v2487 = vmul.f32 %v2361, %v2467
    %v2488 = vmul.f32 %v2362, %v2467
    %v2489 = vmul.f32 %v2363, %v2467
    %v2490 = vmul.f32 %v2364, %v2467
    %v2491 = vmul.f32 %v2365, %v2467
    %v2492 = vmul.f32 %v2366, %v2467
    %v2493 = vmul.f32 %v2393, %v2457
    %v2494 = vmul.f32 %v2394, %v2458
    %v2495 = vsub.f32 %v1534, %v2493
    %v2496 = vsub.f32 %v1535, %v2494
    %2498 = vset.pattern.permute.xlu0 0
    %2499 = vperm.xlu0 %2498, %v2495
    %v2500 = vpop.permute.xlu0 %2499
    %2503 = vset.pattern.permute.xlu0 0
    %2504 = vperm.xlu0 %2503, %v2496
    %v2505 = vpop.permute.xlu0 %2504
    %v2507 = vadd.f32 %v2469, %v2500
    %v2508 = vadd.f32 %v2470, %v2500
    %v2509 = vadd.f32 %v2471, %v2500
    %v2510 = vadd.f32 %v2472, %v2500
    %v2511 = vadd.f32 %v2473, %v2500
    %v2512 = vadd.f32 %v2474, %v2500
    %v2513 = vadd.f32 %v2475, %v2500
    %v2514 = vadd.f32 %v2476, %v2500
    %v2515 = vadd.f32 %v2477, %v2500
    %v2516 = vadd.f32 %v2478, %v2500
    %v2517 = vadd.f32 %v2479, %v2500
    %v2518 = vadd.f32 %v2480, %v2500
    %v2519 = vadd.f32 %v2481, %v2505
    %v2520 = vadd.f32 %v2482, %v2505
    %v2521 = vadd.f32 %v2483, %v2505
    %v2522 = vadd.f32 %v2484, %v2505
    %v2523 = vadd.f32 %v2485, %v2505
    %v2524 = vadd.f32 %v2486, %v2505
    %v2525 = vadd.f32 %v2487, %v2505
    %v2526 = vadd.f32 %v2488, %v2505
    %v2527 = vadd.f32 %v2489, %v2505
    %v2528 = vadd.f32 %v2490, %v2505
    %v2529 = vadd.f32 %v2491, %v2505
    %v2530 = vadd.f32 %v2492, %v2505
    %vm2531 = vcmp.ge.f32.partialorder %v2507, 0.0
    %vm2532 = vcmp.ge.f32.partialorder %v2508, 0.0
    %vm2533 = vcmp.ge.f32.partialorder %v2509, 0.0
    %vm2534 = vcmp.ge.f32.partialorder %v2510, 0.0
    %vm2535 = vcmp.ge.f32.partialorder %v2511, 0.0
    %vm2536 = vcmp.ge.f32.partialorder %v2512, 0.0
    %vm2537 = vcmp.ge.f32.partialorder %v2513, 0.0
    %vm2538 = vcmp.ge.f32.partialorder %v2514, 0.0
    %vm2539 = vcmp.ge.f32.partialorder %v2515, 0.0
    %vm2540 = vcmp.ge.f32.partialorder %v2516, 0.0
    %vm2541 = vcmp.ge.f32.partialorder %v2517, 0.0
    %vm2542 = vcmp.ge.f32.partialorder %v2518, 0.0
    %vm2543 = vcmp.ge.f32.partialorder %v2519, 0.0
    %vm2544 = vcmp.ge.f32.partialorder %v2520, 0.0
    %vm2545 = vcmp.ge.f32.partialorder %v2521, 0.0
    %vm2546 = vcmp.ge.f32.partialorder %v2522, 0.0
    %vm2547 = vcmp.ge.f32.partialorder %v2523, 0.0
    %vm2548 = vcmp.ge.f32.partialorder %v2524, 0.0
    %vm2549 = vcmp.ge.f32.partialorder %v2525, 0.0
    %vm2550 = vcmp.ge.f32.partialorder %v2526, 0.0
    %vm2551 = vcmp.ge.f32.partialorder %v2527, 0.0
    %vm2552 = vcmp.ge.f32.partialorder %v2528, 0.0
    %vm2553 = vcmp.ge.f32.partialorder %v2529, 0.0
    %vm2554 = vcmp.ge.f32.partialorder %v2530, 0.0
    %v2555 = vmul.f32 %v2507, 0.01
    %v2556 = vmul.f32 %v2508, 0.01
    %v2557 = vmul.f32 %v2509, 0.01
    %v2558 = vmul.f32 %v2510, 0.01
    %v2559 = vmul.f32 %v2511, 0.01
    %v2560 = vmul.f32 %v2512, 0.01
    %v2561 = vmul.f32 %v2513, 0.01
    %v2562 = vmul.f32 %v2514, 0.01
    %v2563 = vmul.f32 %v2515, 0.01
    %v2564 = vmul.f32 %v2516, 0.01
    %v2565 = vmul.f32 %v2517, 0.01
    %v2566 = vmul.f32 %v2518, 0.01
    %v2567 = vmul.f32 %v2519, 0.01
    %v2568 = vmul.f32 %v2520, 0.01
    %v2569 = vmul.f32 %v2521, 0.01
    %v2570 = vmul.f32 %v2522, 0.01
    %v2571 = vmul.f32 %v2523, 0.01
    %v2572 = vmul.f32 %v2524, 0.01
    %v2573 = vmul.f32 %v2525, 0.01
    %v2574 = vmul.f32 %v2526, 0.01
    %v2575 = vmul.f32 %v2527, 0.01
    %v2576 = vmul.f32 %v2528, 0.01
    %v2577 = vmul.f32 %v2529, 0.01
    %v2578 = vmul.f32 %v2530, 0.01
    %v2579 = vsel %vm2531, %v2507, %v2555
    %v2580 = vsel %vm2532, %v2508, %v2556
    %v2581 = vsel %vm2533, %v2509, %v2557
    %v2582 = vsel %vm2534, %v2510, %v2558
    %v2583 = vsel %vm2535, %v2511, %v2559
    %v2584 = vsel %vm2536, %v2512, %v2560
    %v2585 = vsel %vm2537, %v2513, %v2561
    %v2586 = vsel %vm2538, %v2514, %v2562
    %v2587 = vsel %vm2539, %v2515, %v2563
    %v2588 = vsel %vm2540, %v2516, %v2564
    %v2589 = vsel %vm2541, %v2517, %v2565
    %v2590 = vsel %vm2542, %v2518, %v2566
    %v2591 = vsel %vm2543, %v2519, %v2567
    %v2592 = vsel %vm2544, %v2520, %v2568
    %v2593 = vsel %vm2545, %v2521, %v2569
    %v2594 = vsel %vm2546, %v2522, %v2570
    %v2595 = vsel %vm2547, %v2523, %v2571
    %v2596 = vsel %vm2548, %v2524, %v2572
    %v2597 = vsel %vm2549, %v2525, %v2573
    %v2598 = vsel %vm2550, %v2526, %v2574
    %v2599 = vsel %vm2551, %v2527, %v2575
    %v2600 = vsel %vm2552, %v2528, %v2576
    %v2601 = vsel %vm2553, %v2529, %v2577
    %v2602 = vsel %vm2554, %v2530, %v2578
    %v2603 = vmul.f32 %v2579, %v1423
    %v2604 = vmul.f32 %v2580, %v1427
    %v2605 = vmul.f32 %v2581, %v1431
    %v2606 = vmul.f32 %v2582, %v1435
    %v2607 = vmul.f32 %v2583, %v1439
    %v2608 = vmul.f32 %v2584, %v1443
    %v2609 = vmul.f32 %v2585, %v1447
    %v2610 = vmul.f32 %v2586, %v1451
    %v2611 = vmul.f32 %v2587, %v1455
    %v2612 = vmul.f32 %v2588, %v1459
    %v2613 = vmul.f32 %v2589, %v1463
    %v2614 = vmul.f32 %v2590, %v1467
    %v2615 = vmul.f32 %v2591, %v1423
    %v2616 = vmul.f32 %v2592, %v1427
    %v2617 = vmul.f32 %v2593, %v1431
    %v2618 = vmul.f32 %v2594, %v1435
    %v2619 = vmul.f32 %v2595, %v1439
    %v2620 = vmul.f32 %v2596, %v1443
    %v2621 = vmul.f32 %v2597, %v1447
    %v2622 = vmul.f32 %v2598, %v1451
    %v2623 = vmul.f32 %v2599, %v1455
    %v2624 = vmul.f32 %v2600, %v1459
    %v2625 = vmul.f32 %v2601, %v1463
    %v2626 = vmul.f32 %v2602, %v1467
    %v2627 = vpack.c.bf16 %v2615, %v2603
    %v2628 = vpack.c.bf16 %v2616, %v2604
    %v2629 = vpack.c.bf16 %v2617, %v2605
    %v2630 = vpack.c.bf16 %v2618, %v2606
    %v2631 = vpack.c.bf16 %v2619, %v2607
    %v2632 = vpack.c.bf16 %v2620, %v2608
    %v2633 = vpack.c.bf16 %v2621, %v2609
    %v2634 = vpack.c.bf16 %v2622, %v2610
    %v2635 = vpack.c.bf16 %v2623, %v2611
    %v2636 = vpack.c.bf16 %v2624, %v2612
    %v2637 = vpack.c.bf16 %v2625, %v2613
    %v2638 = vpack.c.bf16 %v2626, %v2614
    %v2639 = vld [vmem:[%s9] sm:$0xff]
    %v2640 = vld [vmem:[%s9 + $0x8] sm:$0xff]
    %v2641 = vld [vmem:[%s9 + $0x10] sm:$0xff]
    %v2642 = vld [vmem:[%s9 + $0x18] sm:$0xff]
    %v2643 = vld [vmem:[%s10] sm:$0xff]
    %v2644 = vld [vmem:[%s10 + $0x8] sm:$0xff]
    %v2645 = vld [vmem:[%s10 + $0x10] sm:$0xff]
    %v2646 = vld [vmem:[%s10 + $0x18] sm:$0xff]
    %v2647 = vld [vmem:[%s8] sm:$0xf]
    %v2648 = vld [vmem:[%s8 + $0x4] sm:$0xf]
    %v2649 = vld [vmem:[%s8 + $0x8] sm:$0xf]
    %v2650 = vld [vmem:[%s8 + $0xc] sm:$0xf]
    %s2651 = scalar_lea.vmem %s8, 16
    %v2652 = vld [vmem:[%s2651] sm:$0xf]
    %v2653 = vld [vmem:[%s2651 + $0x4] sm:$0xf]
    %v2654 = vld [vmem:[%s2651 + $0x8] sm:$0xf]
    %v2655 = vld [vmem:[%s2651 + $0xc] sm:$0xf]
    %v2660 = vunpack.c.l.b16 %v2652
    %v2661 = vunpack.c.l.b16 %v2653
    %v2662 = vunpack.c.l.b16 %v2654
    %v2663 = vunpack.c.l.b16 %v2655
    %v2664 = vpack.c.b16 %v2661, %v2660
    %v2665 = vpack.c.b16 %v2663, %v2662
    %v2667 = vsel %vm1546, %v2664, 0
    %v2670 = vsel %vm1546, %v2665, 0
    %2672 = vmatprep.subr.bf16.mxu0 0
    %2673 = vmatpush1.bf16.msra.mxu0 0
    %2674 = vmatprep.subr.bf16.mxu0 0
    %2675 = vmatpush1.bf16.msra.mxu0 0
    %2676 = vmatprep.subr.bf16.mxu0 0
    %2677 = vmatpush1.bf16.msra.mxu0 0
    %2678 = vmatprep.subr.bf16.mxu0 0
    %2679 = vmatpush1.bf16.msra.mxu0 0
    %2680 = vmatprep.subr.bf16.mxu0 0
    %2681 = vmatpush1.bf16.msra.mxu0 0
    %2682 = vmatprep.subr.bf16.mxu0 0
    %2683 = vmatpush1.bf16.msra.mxu0 0
    %2684 = vmatprep.subr.bf16.mxu0 0
    %2685 = vmatpush1.bf16.msra.mxu0 0
    %2686 = vmatprep.subr.bf16.mxu0 %v2629
    %2687 = vmatpush1.bf16.msra.mxu0 %v2628
    %2688 = vmatprep.subr.bf16.mxu0 0
    %2689 = vmatpush2.bf16.msra.mxu0 0
    %2690 = vmatprep.subr.bf16.mxu0 0
    %2691 = vmatpush2.bf16.msra.mxu0 0
    %2692 = vmatprep.subr.bf16.mxu0 0
    %2693 = vmatpush2.bf16.msra.mxu0 0
    %2694 = vmatprep.subr.bf16.mxu0 0
    %2695 = vmatpush2.bf16.msra.mxu0 0
    %2696 = vmatprep.subr.bf16.mxu0 0
    %2697 = vmatpush2.bf16.msra.mxu0 0
    %2698 = vmatprep.subr.bf16.mxu0 0
    %2699 = vmatpush2.bf16.msra.mxu0 0
    %2700 = vmatprep.subr.bf16.mxu0 0
    %2701 = vmatpush2.bf16.msra.mxu0 0
    %2702 = vmatprep.subr.bf16.mxu0 0
    %2703 = vmatpush2.bf16.msra.mxu0 0
    %2704 = vmatprep.mubr.bf16.mxu0 0
    %2705 = vmatmul.mubr.bf16.gmra.mxu0 %v2667
    %v2706 = vpop.f32.mrf.mxu0
    %v2707 = vadd.f32 0.0, %v2706
    %v2708 = vpop.f32.mrf.mxu0
    %v2709 = vadd.f32 0.0, %v2708
    %v2710 = vpop.f32.mrf.mxu0
    %v2711 = vadd.f32 0.0, %v2710
    %v2712 = vpop.f32.mrf.mxu0
    %v2713 = vadd.f32 0.0, %v2712
    %2714 = vmatprep.mubr.bf16.mxu0 0
    %2715 = vmatmul.mubr.bf16.gmra.mxu0 %v2670
    %v2716 = vpop.f32.mrf.mxu0
    %v2717 = vadd.f32 0.0, %v2716
    %v2718 = vpop.f32.mrf.mxu0
    %v2719 = vadd.f32 0.0, %v2718
    %v2720 = vpop.f32.mrf.mxu0
    %v2721 = vadd.f32 0.0, %v2720
    %v2722 = vpop.f32.mrf.mxu0
    %v2723 = vadd.f32 0.0, %v2722
    %2724 = vdwg.mxu0
    %2725 = vmatprep.subr.bf16.mxu0 0
    %2726 = vmatpush1.bf16.msra.mxu0 0
    %2727 = vmatprep.subr.bf16.mxu0 0
    %2728 = vmatpush1.bf16.msra.mxu0 0
    %2729 = vmatprep.subr.bf16.mxu0 0
    %2730 = vmatpush1.bf16.msra.mxu0 0
    %2731 = vmatprep.subr.bf16.mxu0 0
    %2732 = vmatpush1.bf16.msra.mxu0 0
    %2733 = vmatprep.subr.bf16.mxu0 0
    %2734 = vmatpush1.bf16.msra.mxu0 0
    %2735 = vmatprep.subr.bf16.mxu0 0
    %2736 = vmatpush1.bf16.msra.mxu0 0
    %2737 = vmatprep.subr.bf16.mxu0 0
    %2738 = vmatpush1.bf16.msra.mxu0 0
    %2739 = vmatprep.subr.bf16.mxu0 %v2631
    %2740 = vmatpush1.bf16.msra.mxu0 %v2630
    %2741 = vmatprep.subr.bf16.mxu0 0
    %2742 = vmatpush2.bf16.msra.mxu0 0
    %2743 = vmatprep.subr.bf16.mxu0 0
    %2744 = vmatpush2.bf16.msra.mxu0 0
    %2745 = vmatprep.subr.bf16.mxu0 0
    %2746 = vmatpush2.bf16.msra.mxu0 0
    %2747 = vmatprep.subr.bf16.mxu0 0
    %2748 = vmatpush2.bf16.msra.mxu0 0
    %2749 = vmatprep.subr.bf16.mxu0 0
    %2750 = vmatpush2.bf16.msra.mxu0 0
    %2751 = vmatprep.subr.bf16.mxu0 0
    %2752 = vmatpush2.bf16.msra.mxu0 0
    %2753 = vmatprep.subr.bf16.mxu0 0
    %2754 = vmatpush2.bf16.msra.mxu0 0
    %2755 = vmatprep.subr.bf16.mxu0 0
    %2756 = vmatpush2.bf16.msra.mxu0 0
    %2757 = vmatprep.mubr.bf16.mxu0 0
    %2758 = vmatmul.mubr.bf16.gmra.mxu0 %v2667
    %v2759 = vpop.f32.mrf.mxu0
    %v2760 = vadd.f32 0.0, %v2759
    %v2761 = vpop.f32.mrf.mxu0
    %v2762 = vadd.f32 0.0, %v2761
    %v2763 = vpop.f32.mrf.mxu0
    %v2764 = vadd.f32 0.0, %v2763
    %v2765 = vpop.f32.mrf.mxu0
    %v2766 = vadd.f32 0.0, %v2765
    %2767 = vmatprep.mubr.bf16.mxu0 0
    %2768 = vmatmul.mubr.bf16.gmra.mxu0 %v2670
    %v2769 = vpop.f32.mrf.mxu0
    %v2770 = vadd.f32 0.0, %v2769
    %v2771 = vpop.f32.mrf.mxu0
    %v2772 = vadd.f32 0.0, %v2771
    %v2773 = vpop.f32.mrf.mxu0
    %v2774 = vadd.f32 0.0, %v2773
    %v2775 = vpop.f32.mrf.mxu0
    %v2776 = vadd.f32 0.0, %v2775
    %2777 = vdwg.mxu0
    %2778 = vmatprep.subr.bf16.mxu0 0
    %2779 = vmatpush1.bf16.msra.mxu0 0
    %2780 = vmatprep.subr.bf16.mxu0 0
    %2781 = vmatpush1.bf16.msra.mxu0 0
    %2782 = vmatprep.subr.bf16.mxu0 0
    %2783 = vmatpush1.bf16.msra.mxu0 0
    %2784 = vmatprep.subr.bf16.mxu0 0
    %2785 = vmatpush1.bf16.msra.mxu0 0
    %2786 = vmatprep.subr.bf16.mxu0 0
    %2787 = vmatpush1.bf16.msra.mxu0 0
    %2788 = vmatprep.subr.bf16.mxu0 0
    %2789 = vmatpush1.bf16.msra.mxu0 0
    %2790 = vmatprep.subr.bf16.mxu0 0
    %2791 = vmatpush1.bf16.msra.mxu0 0
    %2792 = vmatprep.subr.bf16.mxu0 %v2633
    %2793 = vmatpush1.bf16.msra.mxu0 %v2632
    %2794 = vmatprep.subr.bf16.mxu0 0
    %2795 = vmatpush2.bf16.msra.mxu0 0
    %2796 = vmatprep.subr.bf16.mxu0 0
    %2797 = vmatpush2.bf16.msra.mxu0 0
    %2798 = vmatprep.subr.bf16.mxu0 0
    %2799 = vmatpush2.bf16.msra.mxu0 0
    %2800 = vmatprep.subr.bf16.mxu0 0
    %2801 = vmatpush2.bf16.msra.mxu0 0
    %2802 = vmatprep.subr.bf16.mxu0 0
    %2803 = vmatpush2.bf16.msra.mxu0 0
    %2804 = vmatprep.subr.bf16.mxu0 0
    %2805 = vmatpush2.bf16.msra.mxu0 0
    %2806 = vmatprep.subr.bf16.mxu0 0
    %2807 = vmatpush2.bf16.msra.mxu0 0
    %2808 = vmatprep.subr.bf16.mxu0 0
    %2809 = vmatpush2.bf16.msra.mxu0 0
    %2810 = vmatprep.mubr.bf16.mxu0 0
    %2811 = vmatmul.mubr.bf16.gmra.mxu0 %v2667
    %v2812 = vpop.f32.mrf.mxu0
    %v2813 = vadd.f32 0.0, %v2812
    %v2814 = vpop.f32.mrf.mxu0
    %v2815 = vadd.f32 0.0, %v2814
    %v2816 = vpop.f32.mrf.mxu0
    %v2817 = vadd.f32 0.0, %v2816
    %v2818 = vpop.f32.mrf.mxu0
    %v2819 = vadd.f32 0.0, %v2818
    %2820 = vmatprep.mubr.bf16.mxu0 0
    %2821 = vmatmul.mubr.bf16.gmra.mxu0 %v2670
    %v2822 = vpop.f32.mrf.mxu0
    %v2823 = vadd.f32 0.0, %v2822
    %v2824 = vpop.f32.mrf.mxu0
    %v2825 = vadd.f32 0.0, %v2824
    %v2826 = vpop.f32.mrf.mxu0
    %v2827 = vadd.f32 0.0, %v2826
    %v2828 = vpop.f32.mrf.mxu0
    %v2829 = vadd.f32 0.0, %v2828
    %2830 = vdwg.mxu0
    %2831 = vmatprep.subr.bf16.mxu0 0
    %2832 = vmatpush1.bf16.msra.mxu0 0
    %2833 = vmatprep.subr.bf16.mxu0 0
    %2834 = vmatpush1.bf16.msra.mxu0 0
    %2835 = vmatprep.subr.bf16.mxu0 0
    %2836 = vmatpush1.bf16.msra.mxu0 0
    %2837 = vmatprep.subr.bf16.mxu0 0
    %2838 = vmatpush1.bf16.msra.mxu0 0
    %2839 = vmatprep.subr.bf16.mxu0 0
    %2840 = vmatpush1.bf16.msra.mxu0 0
    %2841 = vmatprep.subr.bf16.mxu0 0
    %2842 = vmatpush1.bf16.msra.mxu0 0
    %2843 = vmatprep.subr.bf16.mxu0 0
    %2844 = vmatpush1.bf16.msra.mxu0 0
    %2845 = vmatprep.subr.bf16.mxu0 %v2635
    %2846 = vmatpush1.bf16.msra.mxu0 %v2634
    %2847 = vmatprep.subr.bf16.mxu0 0
    %2848 = vmatpush2.bf16.msra.mxu0 0
    %2849 = vmatprep.subr.bf16.mxu0 0
    %2850 = vmatpush2.bf16.msra.mxu0 0
    %2851 = vmatprep.subr.bf16.mxu0 0
    %2852 = vmatpush2.bf16.msra.mxu0 0
    %2853 = vmatprep.subr.bf16.mxu0 0
    %2854 = vmatpush2.bf16.msra.mxu0 0
    %2855 = vmatprep.subr.bf16.mxu0 0
    %2856 = vmatpush2.bf16.msra.mxu0 0
    %2857 = vmatprep.subr.bf16.mxu0 0
    %2858 = vmatpush2.bf16.msra.mxu0 0
    %2859 = vmatprep.subr.bf16.mxu0 0
    %2860 = vmatpush2.bf16.msra.mxu0 0
    %2861 = vmatprep.subr.bf16.mxu0 0
    %2862 = vmatpush2.bf16.msra.mxu0 0
    %2863 = vmatprep.mubr.bf16.mxu0 0
    %2864 = vmatmul.mubr.bf16.gmra.mxu0 %v2667
    %v2865 = vpop.f32.mrf.mxu0
    %v2866 = vadd.f32 0.0, %v2865
    %v2867 = vpop.f32.mrf.mxu0
    %v2868 = vadd.f32 0.0, %v2867
    %v2869 = vpop.f32.mrf.mxu0
    %v2870 = vadd.f32 0.0, %v2869
    %v2871 = vpop.f32.mrf.mxu0
    %v2872 = vadd.f32 0.0, %v2871
    %2873 = vmatprep.mubr.bf16.mxu0 0
    %2874 = vmatmul.mubr.bf16.gmra.mxu0 %v2670
    %v2875 = vpop.f32.mrf.mxu0
    %v2876 = vadd.f32 0.0, %v2875
    %v2877 = vpop.f32.mrf.mxu0
    %v2878 = vadd.f32 0.0, %v2877
    %v2879 = vpop.f32.mrf.mxu0
    %v2880 = vadd.f32 0.0, %v2879
    %v2881 = vpop.f32.mrf.mxu0
    %v2882 = vadd.f32 0.0, %v2881
    %2883 = vdwg.mxu0
    %2884 = vmatprep.subr.bf16.mxu0 0
    %2885 = vmatpush1.bf16.msra.mxu0 0
    %2886 = vmatprep.subr.bf16.mxu0 0
    %2887 = vmatpush1.bf16.msra.mxu0 0
    %2888 = vmatprep.subr.bf16.mxu0 0
    %2889 = vmatpush1.bf16.msra.mxu0 0
    %2890 = vmatprep.subr.bf16.mxu0 0
    %2891 = vmatpush1.bf16.msra.mxu0 0
    %2892 = vmatprep.subr.bf16.mxu0 0
    %2893 = vmatpush1.bf16.msra.mxu0 0
    %2894 = vmatprep.subr.bf16.mxu0 0
    %2895 = vmatpush1.bf16.msra.mxu0 0
    %2896 = vmatprep.subr.bf16.mxu0 0
    %2897 = vmatpush1.bf16.msra.mxu0 0
    %2898 = vmatprep.subr.bf16.mxu0 %v2637
    %2899 = vmatpush1.bf16.msra.mxu0 %v2636
    %2900 = vmatprep.subr.bf16.mxu0 0
    %2901 = vmatpush2.bf16.msra.mxu0 0
    %2902 = vmatprep.subr.bf16.mxu0 0
    %2903 = vmatpush2.bf16.msra.mxu0 0
    %2904 = vmatprep.subr.bf16.mxu0 0
    %2905 = vmatpush2.bf16.msra.mxu0 0
    %2906 = vmatprep.subr.bf16.mxu0 0
    %2907 = vmatpush2.bf16.msra.mxu0 0
    %2908 = vmatprep.subr.bf16.mxu0 0
    %2909 = vmatpush2.bf16.msra.mxu0 0
    %2910 = vmatprep.subr.bf16.mxu0 0
    %2911 = vmatpush2.bf16.msra.mxu0 0
    %2912 = vmatprep.subr.bf16.mxu0 0
    %2913 = vmatpush2.bf16.msra.mxu0 0
    %2914 = vmatprep.subr.bf16.mxu0 0
    %2915 = vmatpush2.bf16.msra.mxu0 0
    %2916 = vmatprep.mubr.bf16.mxu0 0
    %2917 = vmatmul.mubr.bf16.gmra.mxu0 %v2667
    %v2918 = vpop.f32.mrf.mxu0
    %v2919 = vadd.f32 0.0, %v2918
    %v2920 = vpop.f32.mrf.mxu0
    %v2921 = vadd.f32 0.0, %v2920
    %v2922 = vpop.f32.mrf.mxu0
    %v2923 = vadd.f32 0.0, %v2922
    %v2924 = vpop.f32.mrf.mxu0
    %v2925 = vadd.f32 0.0, %v2924
    %2926 = vmatprep.mubr.bf16.mxu0 0
    %2927 = vmatmul.mubr.bf16.gmra.mxu0 %v2670
    %v2928 = vpop.f32.mrf.mxu0
    %v2929 = vadd.f32 0.0, %v2928
    %v2930 = vpop.f32.mrf.mxu0
    %v2931 = vadd.f32 0.0, %v2930
    %v2932 = vpop.f32.mrf.mxu0
    %v2933 = vadd.f32 0.0, %v2932
    %v2934 = vpop.f32.mrf.mxu0
    %v2935 = vadd.f32 0.0, %v2934
    %2936 = vdwg.mxu0
    %v2941 = vunpack.c.l.b16 %v2647
    %v2942 = vunpack.c.l.b16 %v2648
    %v2943 = vunpack.c.l.b16 %v2649
    %v2944 = vunpack.c.l.b16 %v2650
    %v2945 = vpack.c.b16 %v2942, %v2941
    %v2946 = vpack.c.b16 %v2944, %v2943
    %v2948 = vsel %vm1546, %v2945, 0
    %v2951 = vsel %vm1546, %v2946, 0
    %2953 = vmatprep.subr.bf16.mxu0 0
    %2954 = vmatpush1.bf16.msra.mxu0 0
    %2955 = vmatprep.subr.bf16.mxu0 0
    %2956 = vmatpush1.bf16.msra.mxu0 0
    %2957 = vmatprep.subr.bf16.mxu0 0
    %2958 = vmatpush1.bf16.msra.mxu0 0
    %2959 = vmatprep.subr.bf16.mxu0 0
    %2960 = vmatpush1.bf16.msra.mxu0 0
    %2961 = vmatprep.subr.bf16.mxu0 0
    %2962 = vmatpush1.bf16.msra.mxu0 0
    %2963 = vmatprep.subr.bf16.mxu0 0
    %2964 = vmatpush1.bf16.msra.mxu0 0
    %2965 = vmatprep.subr.bf16.mxu0 0
    %2966 = vmatpush1.bf16.msra.mxu0 0
    %2967 = vmatprep.subr.bf16.mxu0 %v2628
    %2968 = vmatpush1.bf16.msra.mxu0 %v2627
    %2969 = vmatprep.subr.bf16.mxu0 0
    %2970 = vmatpush2.bf16.msra.mxu0 0
    %2971 = vmatprep.subr.bf16.mxu0 0
    %2972 = vmatpush2.bf16.msra.mxu0 0
    %2973 = vmatprep.subr.bf16.mxu0 0
    %2974 = vmatpush2.bf16.msra.mxu0 0
    %2975 = vmatprep.subr.bf16.mxu0 0
    %2976 = vmatpush2.bf16.msra.mxu0 0
    %2977 = vmatprep.subr.bf16.mxu0 0
    %2978 = vmatpush2.bf16.msra.mxu0 0
    %2979 = vmatprep.subr.bf16.mxu0 0
    %2980 = vmatpush2.bf16.msra.mxu0 0
    %2981 = vmatprep.subr.bf16.mxu0 0
    %2982 = vmatpush2.bf16.msra.mxu0 0
    %2983 = vmatprep.subr.bf16.mxu0 0
    %2984 = vmatpush2.bf16.msra.mxu0 0
    %2985 = vmatprep.mubr.bf16.mxu0 0
    %2986 = vmatmul.mubr.bf16.gmra.mxu0 %v2948
    %v2987 = vpop.f32.mrf.mxu0
    %v2988 = vadd.f32 %v2707, %v2987
    %v2989 = vpop.f32.mrf.mxu0
    %v2990 = vadd.f32 %v2709, %v2989
    %v2991 = vpop.f32.mrf.mxu0
    %v2992 = vadd.f32 %v2711, %v2991
    %v2993 = vpop.f32.mrf.mxu0
    %v2994 = vadd.f32 %v2713, %v2993
    %2995 = vmatprep.mubr.bf16.mxu0 0
    %2996 = vmatmul.mubr.bf16.gmra.mxu0 %v2951
    %v2997 = vpop.f32.mrf.mxu0
    %v2998 = vadd.f32 %v2717, %v2997
    %v2999 = vpop.f32.mrf.mxu0
    %v3000 = vadd.f32 %v2719, %v2999
    %v3001 = vpop.f32.mrf.mxu0
    %v3002 = vadd.f32 %v2721, %v3001
    %v3003 = vpop.f32.mrf.mxu0
    %v3004 = vadd.f32 %v2723, %v3003
    %3005 = vdwg.mxu0
    %3006 = vmatprep.subr.bf16.mxu0 0
    %3007 = vmatpush1.bf16.msra.mxu0 0
    %3008 = vmatprep.subr.bf16.mxu0 0
    %3009 = vmatpush1.bf16.msra.mxu0 0
    %3010 = vmatprep.subr.bf16.mxu0 0
    %3011 = vmatpush1.bf16.msra.mxu0 0
    %3012 = vmatprep.subr.bf16.mxu0 0
    %3013 = vmatpush1.bf16.msra.mxu0 0
    %3014 = vmatprep.subr.bf16.mxu0 0
    %3015 = vmatpush1.bf16.msra.mxu0 0
    %3016 = vmatprep.subr.bf16.mxu0 0
    %3017 = vmatpush1.bf16.msra.mxu0 0
    %3018 = vmatprep.subr.bf16.mxu0 0
    %3019 = vmatpush1.bf16.msra.mxu0 0
    %3020 = vmatprep.subr.bf16.mxu0 %v2630
    %3021 = vmatpush1.bf16.msra.mxu0 %v2629
    %3022 = vmatprep.subr.bf16.mxu0 0
    %3023 = vmatpush2.bf16.msra.mxu0 0
    %3024 = vmatprep.subr.bf16.mxu0 0
    %3025 = vmatpush2.bf16.msra.mxu0 0
    %3026 = vmatprep.subr.bf16.mxu0 0
    %3027 = vmatpush2.bf16.msra.mxu0 0
    %3028 = vmatprep.subr.bf16.mxu0 0
    %3029 = vmatpush2.bf16.msra.mxu0 0
    %3030 = vmatprep.subr.bf16.mxu0 0
    %3031 = vmatpush2.bf16.msra.mxu0 0
    %3032 = vmatprep.subr.bf16.mxu0 0
    %3033 = vmatpush2.bf16.msra.mxu0 0
    %3034 = vmatprep.subr.bf16.mxu0 0
    %3035 = vmatpush2.bf16.msra.mxu0 0
    %3036 = vmatprep.subr.bf16.mxu0 0
    %3037 = vmatpush2.bf16.msra.mxu0 0
    %3038 = vmatprep.mubr.bf16.mxu0 0
    %3039 = vmatmul.mubr.bf16.gmra.mxu0 %v2948
    %v3040 = vpop.f32.mrf.mxu0
    %v3041 = vadd.f32 %v2760, %v3040
    %v3042 = vpop.f32.mrf.mxu0
    %v3043 = vadd.f32 %v2762, %v3042
    %v3044 = vpop.f32.mrf.mxu0
    %v3045 = vadd.f32 %v2764, %v3044
    %v3046 = vpop.f32.mrf.mxu0
    %v3047 = vadd.f32 %v2766, %v3046
    %3048 = vmatprep.mubr.bf16.mxu0 0
    %3049 = vmatmul.mubr.bf16.gmra.mxu0 %v2951
    %v3050 = vpop.f32.mrf.mxu0
    %v3051 = vadd.f32 %v2770, %v3050
    %v3052 = vpop.f32.mrf.mxu0
    %v3053 = vadd.f32 %v2772, %v3052
    %v3054 = vpop.f32.mrf.mxu0
    %v3055 = vadd.f32 %v2774, %v3054
    %v3056 = vpop.f32.mrf.mxu0
    %v3057 = vadd.f32 %v2776, %v3056
    %3058 = vdwg.mxu0
    %3059 = vmatprep.subr.bf16.mxu0 0
    %3060 = vmatpush1.bf16.msra.mxu0 0
    %3061 = vmatprep.subr.bf16.mxu0 0
    %3062 = vmatpush1.bf16.msra.mxu0 0
    %3063 = vmatprep.subr.bf16.mxu0 0
    %3064 = vmatpush1.bf16.msra.mxu0 0
    %3065 = vmatprep.subr.bf16.mxu0 0
    %3066 = vmatpush1.bf16.msra.mxu0 0
    %3067 = vmatprep.subr.bf16.mxu0 0
    %3068 = vmatpush1.bf16.msra.mxu0 0
    %3069 = vmatprep.subr.bf16.mxu0 0
    %3070 = vmatpush1.bf16.msra.mxu0 0
    %3071 = vmatprep.subr.bf16.mxu0 0
    %3072 = vmatpush1.bf16.msra.mxu0 0
    %3073 = vmatprep.subr.bf16.mxu0 %v2632
    %3074 = vmatpush1.bf16.msra.mxu0 %v2631
    %3075 = vmatprep.subr.bf16.mxu0 0
    %3076 = vmatpush2.bf16.msra.mxu0 0
    %3077 = vmatprep.subr.bf16.mxu0 0
    %3078 = vmatpush2.bf16.msra.mxu0 0
    %3079 = vmatprep.subr.bf16.mxu0 0
    %3080 = vmatpush2.bf16.msra.mxu0 0
    %3081 = vmatprep.subr.bf16.mxu0 0
    %3082 = vmatpush2.bf16.msra.mxu0 0
    %3083 = vmatprep.subr.bf16.mxu0 0
    %3084 = vmatpush2.bf16.msra.mxu0 0
    %3085 = vmatprep.subr.bf16.mxu0 0
    %3086 = vmatpush2.bf16.msra.mxu0 0
    %3087 = vmatprep.subr.bf16.mxu0 0
    %3088 = vmatpush2.bf16.msra.mxu0 0
    %3089 = vmatprep.subr.bf16.mxu0 0
    %3090 = vmatpush2.bf16.msra.mxu0 0
    %3091 = vmatprep.mubr.bf16.mxu0 0
    %3092 = vmatmul.mubr.bf16.gmra.mxu0 %v2948
    %v3093 = vpop.f32.mrf.mxu0
    %v3094 = vadd.f32 %v2813, %v3093
    %v3095 = vpop.f32.mrf.mxu0
    %v3096 = vadd.f32 %v2815, %v3095
    %v3097 = vpop.f32.mrf.mxu0
    %v3098 = vadd.f32 %v2817, %v3097
    %v3099 = vpop.f32.mrf.mxu0
    %v3100 = vadd.f32 %v2819, %v3099
    %3101 = vmatprep.mubr.bf16.mxu0 0
    %3102 = vmatmul.mubr.bf16.gmra.mxu0 %v2951
    %v3103 = vpop.f32.mrf.mxu0
    %v3104 = vadd.f32 %v2823, %v3103
    %v3105 = vpop.f32.mrf.mxu0
    %v3106 = vadd.f32 %v2825, %v3105
    %v3107 = vpop.f32.mrf.mxu0
    %v3108 = vadd.f32 %v2827, %v3107
    %v3109 = vpop.f32.mrf.mxu0
    %v3110 = vadd.f32 %v2829, %v3109
    %3111 = vdwg.mxu0
    %3112 = vmatprep.subr.bf16.mxu0 0
    %3113 = vmatpush1.bf16.msra.mxu0 0
    %3114 = vmatprep.subr.bf16.mxu0 0
    %3115 = vmatpush1.bf16.msra.mxu0 0
    %3116 = vmatprep.subr.bf16.mxu0 0
    %3117 = vmatpush1.bf16.msra.mxu0 0
    %3118 = vmatprep.subr.bf16.mxu0 0
    %3119 = vmatpush1.bf16.msra.mxu0 0
    %3120 = vmatprep.subr.bf16.mxu0 0
    %3121 = vmatpush1.bf16.msra.mxu0 0
    %3122 = vmatprep.subr.bf16.mxu0 0
    %3123 = vmatpush1.bf16.msra.mxu0 0
    %3124 = vmatprep.subr.bf16.mxu0 0
    %3125 = vmatpush1.bf16.msra.mxu0 0
    %3126 = vmatprep.subr.bf16.mxu0 %v2634
    %3127 = vmatpush1.bf16.msra.mxu0 %v2633
    %3128 = vmatprep.subr.bf16.mxu0 0
    %3129 = vmatpush2.bf16.msra.mxu0 0
    %3130 = vmatprep.subr.bf16.mxu0 0
    %3131 = vmatpush2.bf16.msra.mxu0 0
    %3132 = vmatprep.subr.bf16.mxu0 0
    %3133 = vmatpush2.bf16.msra.mxu0 0
    %3134 = vmatprep.subr.bf16.mxu0 0
    %3135 = vmatpush2.bf16.msra.mxu0 0
    %3136 = vmatprep.subr.bf16.mxu0 0
    %3137 = vmatpush2.bf16.msra.mxu0 0
    %3138 = vmatprep.subr.bf16.mxu0 0
    %3139 = vmatpush2.bf16.msra.mxu0 0
    %3140 = vmatprep.subr.bf16.mxu0 0
    %3141 = vmatpush2.bf16.msra.mxu0 0
    %3142 = vmatprep.subr.bf16.mxu0 0
    %3143 = vmatpush2.bf16.msra.mxu0 0
    %3144 = vmatprep.mubr.bf16.mxu0 0
    %3145 = vmatmul.mubr.bf16.gmra.mxu0 %v2948
    %v3146 = vpop.f32.mrf.mxu0
    %v3147 = vadd.f32 %v2866, %v3146
    %v3148 = vpop.f32.mrf.mxu0
    %v3149 = vadd.f32 %v2868, %v3148
    %v3150 = vpop.f32.mrf.mxu0
    %v3151 = vadd.f32 %v2870, %v3150
    %v3152 = vpop.f32.mrf.mxu0
    %v3153 = vadd.f32 %v2872, %v3152
    %3154 = vmatprep.mubr.bf16.mxu0 0
    %3155 = vmatmul.mubr.bf16.gmra.mxu0 %v2951
    %v3156 = vpop.f32.mrf.mxu0
    %v3157 = vadd.f32 %v2876, %v3156
    %v3158 = vpop.f32.mrf.mxu0
    %v3159 = vadd.f32 %v2878, %v3158
    %v3160 = vpop.f32.mrf.mxu0
    %v3161 = vadd.f32 %v2880, %v3160
    %v3162 = vpop.f32.mrf.mxu0
    %v3163 = vadd.f32 %v2882, %v3162
    %3164 = vdwg.mxu0
    %3165 = vmatprep.subr.bf16.mxu0 0
    %3166 = vmatpush1.bf16.msra.mxu0 0
    %3167 = vmatprep.subr.bf16.mxu0 0
    %3168 = vmatpush1.bf16.msra.mxu0 0
    %3169 = vmatprep.subr.bf16.mxu0 0
    %3170 = vmatpush1.bf16.msra.mxu0 0
    %3171 = vmatprep.subr.bf16.mxu0 0
    %3172 = vmatpush1.bf16.msra.mxu0 0
    %3173 = vmatprep.subr.bf16.mxu0 0
    %3174 = vmatpush1.bf16.msra.mxu0 0
    %3175 = vmatprep.subr.bf16.mxu0 0
    %3176 = vmatpush1.bf16.msra.mxu0 0
    %3177 = vmatprep.subr.bf16.mxu0 0
    %3178 = vmatpush1.bf16.msra.mxu0 0
    %3179 = vmatprep.subr.bf16.mxu0 %v2636
    %3180 = vmatpush1.bf16.msra.mxu0 %v2635
    %3181 = vmatprep.subr.bf16.mxu0 0
    %3182 = vmatpush2.bf16.msra.mxu0 0
    %3183 = vmatprep.subr.bf16.mxu0 0
    %3184 = vmatpush2.bf16.msra.mxu0 0
    %3185 = vmatprep.subr.bf16.mxu0 0
    %3186 = vmatpush2.bf16.msra.mxu0 0
    %3187 = vmatprep.subr.bf16.mxu0 0
    %3188 = vmatpush2.bf16.msra.mxu0 0
    %3189 = vmatprep.subr.bf16.mxu0 0
    %3190 = vmatpush2.bf16.msra.mxu0 0
    %3191 = vmatprep.subr.bf16.mxu0 0
    %3192 = vmatpush2.bf16.msra.mxu0 0
    %3193 = vmatprep.subr.bf16.mxu0 0
    %3194 = vmatpush2.bf16.msra.mxu0 0
    %3195 = vmatprep.subr.bf16.mxu0 0
    %3196 = vmatpush2.bf16.msra.mxu0 0
    %3197 = vmatprep.mubr.bf16.mxu0 0
    %3198 = vmatmul.mubr.bf16.gmra.mxu0 %v2948
    %v3199 = vpop.f32.mrf.mxu0
    %v3200 = vadd.f32 %v2919, %v3199
    %v3201 = vpop.f32.mrf.mxu0
    %v3202 = vadd.f32 %v2921, %v3201
    %v3203 = vpop.f32.mrf.mxu0
    %v3204 = vadd.f32 %v2923, %v3203
    %v3205 = vpop.f32.mrf.mxu0
    %v3206 = vadd.f32 %v2925, %v3205
    %3207 = vmatprep.mubr.bf16.mxu0 0
    %3208 = vmatmul.mubr.bf16.gmra.mxu0 %v2951
    %v3209 = vpop.f32.mrf.mxu0
    %v3210 = vadd.f32 %v2929, %v3209
    %v3211 = vpop.f32.mrf.mxu0
    %v3212 = vadd.f32 %v2931, %v3211
    %v3213 = vpop.f32.mrf.mxu0
    %v3214 = vadd.f32 %v2933, %v3213
    %v3215 = vpop.f32.mrf.mxu0
    %v3216 = vadd.f32 %v2935, %v3215
    %3217 = vdwg.mxu0
    %s3218 = scalar_lea.vmem %s8, 32
    %v3219 = vld [vmem:[%s3218] sm:$0xf]
    %v3220 = vld [vmem:[%s3218 + $0x4] sm:$0xf]
    %v3221 = vld [vmem:[%s3218 + $0x8] sm:$0xf]
    %v3222 = vld [vmem:[%s3218 + $0xc] sm:$0xf]
    %v3227 = vunpack.c.l.b16 %v3219
    %v3228 = vunpack.c.l.b16 %v3220
    %v3229 = vunpack.c.l.b16 %v3221
    %v3230 = vunpack.c.l.b16 %v3222
    %v3231 = vpack.c.b16 %v3228, %v3227
    %v3232 = vpack.c.b16 %v3230, %v3229
    %v3234 = vsel %vm1546, %v3231, 0
    %v3237 = vsel %vm1546, %v3232, 0
    %3239 = vmatprep.subr.bf16.mxu0 0
    %3240 = vmatpush1.bf16.msra.mxu0 0
    %3241 = vmatprep.subr.bf16.mxu0 0
    %3242 = vmatpush1.bf16.msra.mxu0 0
    %3243 = vmatprep.subr.bf16.mxu0 0
    %3244 = vmatpush1.bf16.msra.mxu0 0
    %3245 = vmatprep.subr.bf16.mxu0 0
    %3246 = vmatpush1.bf16.msra.mxu0 0
    %3247 = vmatprep.subr.bf16.mxu0 0
    %3248 = vmatpush1.bf16.msra.mxu0 0
    %3249 = vmatprep.subr.bf16.mxu0 0
    %3250 = vmatpush1.bf16.msra.mxu0 0
    %3251 = vmatprep.subr.bf16.mxu0 0
    %3252 = vmatpush1.bf16.msra.mxu0 0
    %3253 = vmatprep.subr.bf16.mxu0 %v2630
    %3254 = vmatpush1.bf16.msra.mxu0 %v2629
    %3255 = vmatprep.subr.bf16.mxu0 0
    %3256 = vmatpush2.bf16.msra.mxu0 0
    %3257 = vmatprep.subr.bf16.mxu0 0
    %3258 = vmatpush2.bf16.msra.mxu0 0
    %3259 = vmatprep.subr.bf16.mxu0 0
    %3260 = vmatpush2.bf16.msra.mxu0 0
    %3261 = vmatprep.subr.bf16.mxu0 0
    %3262 = vmatpush2.bf16.msra.mxu0 0
    %3263 = vmatprep.subr.bf16.mxu0 0
    %3264 = vmatpush2.bf16.msra.mxu0 0
    %3265 = vmatprep.subr.bf16.mxu0 0
    %3266 = vmatpush2.bf16.msra.mxu0 0
    %3267 = vmatprep.subr.bf16.mxu0 0
    %3268 = vmatpush2.bf16.msra.mxu0 0
    %3269 = vmatprep.subr.bf16.mxu0 0
    %3270 = vmatpush2.bf16.msra.mxu0 0
    %3271 = vmatprep.mubr.bf16.mxu0 0
    %3272 = vmatmul.mubr.bf16.gmra.mxu0 %v3234
    %v3273 = vpop.f32.mrf.mxu0
    %v3274 = vadd.f32 0.0, %v3273
    %v3275 = vpop.f32.mrf.mxu0
    %v3276 = vadd.f32 0.0, %v3275
    %v3277 = vpop.f32.mrf.mxu0
    %v3278 = vadd.f32 0.0, %v3277
    %v3279 = vpop.f32.mrf.mxu0
    %v3280 = vadd.f32 0.0, %v3279
    %3281 = vmatprep.mubr.bf16.mxu0 0
    %3282 = vmatmul.mubr.bf16.gmra.mxu0 %v3237
    %v3283 = vpop.f32.mrf.mxu0
    %v3284 = vadd.f32 0.0, %v3283
    %v3285 = vpop.f32.mrf.mxu0
    %v3286 = vadd.f32 0.0, %v3285
    %v3287 = vpop.f32.mrf.mxu0
    %v3288 = vadd.f32 0.0, %v3287
    %v3289 = vpop.f32.mrf.mxu0
    %v3290 = vadd.f32 0.0, %v3289
    %3291 = vdwg.mxu0
    %3292 = vmatprep.subr.bf16.mxu0 0
    %3293 = vmatpush1.bf16.msra.mxu0 0
    %3294 = vmatprep.subr.bf16.mxu0 0
    %3295 = vmatpush1.bf16.msra.mxu0 0
    %3296 = vmatprep.subr.bf16.mxu0 0
    %3297 = vmatpush1.bf16.msra.mxu0 0
    %3298 = vmatprep.subr.bf16.mxu0 0
    %3299 = vmatpush1.bf16.msra.mxu0 0
    %3300 = vmatprep.subr.bf16.mxu0 0
    %3301 = vmatpush1.bf16.msra.mxu0 0
    %3302 = vmatprep.subr.bf16.mxu0 0
    %3303 = vmatpush1.bf16.msra.mxu0 0
    %3304 = vmatprep.subr.bf16.mxu0 0
    %3305 = vmatpush1.bf16.msra.mxu0 0
    %3306 = vmatprep.subr.bf16.mxu0 %v2632
    %3307 = vmatpush1.bf16.msra.mxu0 %v2631
    %3308 = vmatprep.subr.bf16.mxu0 0
    %3309 = vmatpush2.bf16.msra.mxu0 0
    %3310 = vmatprep.subr.bf16.mxu0 0
    %3311 = vmatpush2.bf16.msra.mxu0 0
    %3312 = vmatprep.subr.bf16.mxu0 0
    %3313 = vmatpush2.bf16.msra.mxu0 0
    %3314 = vmatprep.subr.bf16.mxu0 0
    %3315 = vmatpush2.bf16.msra.mxu0 0
    %3316 = vmatprep.subr.bf16.mxu0 0
    %3317 = vmatpush2.bf16.msra.mxu0 0
    %3318 = vmatprep.subr.bf16.mxu0 0
    %3319 = vmatpush2.bf16.msra.mxu0 0
    %3320 = vmatprep.subr.bf16.mxu0 0
    %3321 = vmatpush2.bf16.msra.mxu0 0
    %3322 = vmatprep.subr.bf16.mxu0 0
    %3323 = vmatpush2.bf16.msra.mxu0 0
    %3324 = vmatprep.mubr.bf16.mxu0 0
    %3325 = vmatmul.mubr.bf16.gmra.mxu0 %v3234
    %v3326 = vpop.f32.mrf.mxu0
    %v3327 = vadd.f32 0.0, %v3326
    %v3328 = vpop.f32.mrf.mxu0
    %v3329 = vadd.f32 0.0, %v3328
    %v3330 = vpop.f32.mrf.mxu0
    %v3331 = vadd.f32 0.0, %v3330
    %v3332 = vpop.f32.mrf.mxu0
    %v3333 = vadd.f32 0.0, %v3332
    %3334 = vmatprep.mubr.bf16.mxu0 0
    %3335 = vmatmul.mubr.bf16.gmra.mxu0 %v3237
    %v3336 = vpop.f32.mrf.mxu0
    %v3337 = vadd.f32 0.0, %v3336
    %v3338 = vpop.f32.mrf.mxu0
    %v3339 = vadd.f32 0.0, %v3338
    %v3340 = vpop.f32.mrf.mxu0
    %v3341 = vadd.f32 0.0, %v3340
    %v3342 = vpop.f32.mrf.mxu0
    %v3343 = vadd.f32 0.0, %v3342
    %3344 = vdwg.mxu0
    %3345 = vmatprep.subr.bf16.mxu0 0
    %3346 = vmatpush1.bf16.msra.mxu0 0
    %3347 = vmatprep.subr.bf16.mxu0 0
    %3348 = vmatpush1.bf16.msra.mxu0 0
    %3349 = vmatprep.subr.bf16.mxu0 0
    %3350 = vmatpush1.bf16.msra.mxu0 0
    %3351 = vmatprep.subr.bf16.mxu0 0
    %3352 = vmatpush1.bf16.msra.mxu0 0
    %3353 = vmatprep.subr.bf16.mxu0 0
    %3354 = vmatpush1.bf16.msra.mxu0 0
    %3355 = vmatprep.subr.bf16.mxu0 0
    %3356 = vmatpush1.bf16.msra.mxu0 0
    %3357 = vmatprep.subr.bf16.mxu0 0
    %3358 = vmatpush1.bf16.msra.mxu0 0
    %3359 = vmatprep.subr.bf16.mxu0 %v2634
    %3360 = vmatpush1.bf16.msra.mxu0 %v2633
    %3361 = vmatprep.subr.bf16.mxu0 0
    %3362 = vmatpush2.bf16.msra.mxu0 0
    %3363 = vmatprep.subr.bf16.mxu0 0
    %3364 = vmatpush2.bf16.msra.mxu0 0
    %3365 = vmatprep.subr.bf16.mxu0 0
    %3366 = vmatpush2.bf16.msra.mxu0 0
    %3367 = vmatprep.subr.bf16.mxu0 0
    %3368 = vmatpush2.bf16.msra.mxu0 0
    %3369 = vmatprep.subr.bf16.mxu0 0
    %3370 = vmatpush2.bf16.msra.mxu0 0
    %3371 = vmatprep.subr.bf16.mxu0 0
    %3372 = vmatpush2.bf16.msra.mxu0 0
    %3373 = vmatprep.subr.bf16.mxu0 0
    %3374 = vmatpush2.bf16.msra.mxu0 0
    %3375 = vmatprep.subr.bf16.mxu0 0
    %3376 = vmatpush2.bf16.msra.mxu0 0
    %3377 = vmatprep.mubr.bf16.mxu0 0
    %3378 = vmatmul.mubr.bf16.gmra.mxu0 %v3234
    %v3379 = vpop.f32.mrf.mxu0
    %v3380 = vadd.f32 0.0, %v3379
    %v3381 = vpop.f32.mrf.mxu0
    %v3382 = vadd.f32 0.0, %v3381
    %v3383 = vpop.f32.mrf.mxu0
    %v3384 = vadd.f32 0.0, %v3383
    %v3385 = vpop.f32.mrf.mxu0
    %v3386 = vadd.f32 0.0, %v3385
    %3387 = vmatprep.mubr.bf16.mxu0 0
    %3388 = vmatmul.mubr.bf16.gmra.mxu0 %v3237
    %v3389 = vpop.f32.mrf.mxu0
    %v3390 = vadd.f32 0.0, %v3389
    %v3391 = vpop.f32.mrf.mxu0
    %v3392 = vadd.f32 0.0, %v3391
    %v3393 = vpop.f32.mrf.mxu0
    %v3394 = vadd.f32 0.0, %v3393
    %v3395 = vpop.f32.mrf.mxu0
    %v3396 = vadd.f32 0.0, %v3395
    %3397 = vdwg.mxu0
    %3398 = vmatprep.subr.bf16.mxu0 0
    %3399 = vmatpush1.bf16.msra.mxu0 0
    %3400 = vmatprep.subr.bf16.mxu0 0
    %3401 = vmatpush1.bf16.msra.mxu0 0
    %3402 = vmatprep.subr.bf16.mxu0 0
    %3403 = vmatpush1.bf16.msra.mxu0 0
    %3404 = vmatprep.subr.bf16.mxu0 0
    %3405 = vmatpush1.bf16.msra.mxu0 0
    %3406 = vmatprep.subr.bf16.mxu0 0
    %3407 = vmatpush1.bf16.msra.mxu0 0
    %3408 = vmatprep.subr.bf16.mxu0 0
    %3409 = vmatpush1.bf16.msra.mxu0 0
    %3410 = vmatprep.subr.bf16.mxu0 0
    %3411 = vmatpush1.bf16.msra.mxu0 0
    %3412 = vmatprep.subr.bf16.mxu0 %v2636
    %3413 = vmatpush1.bf16.msra.mxu0 %v2635
    %3414 = vmatprep.subr.bf16.mxu0 0
    %3415 = vmatpush2.bf16.msra.mxu0 0
    %3416 = vmatprep.subr.bf16.mxu0 0
    %3417 = vmatpush2.bf16.msra.mxu0 0
    %3418 = vmatprep.subr.bf16.mxu0 0
    %3419 = vmatpush2.bf16.msra.mxu0 0
    %3420 = vmatprep.subr.bf16.mxu0 0
    %3421 = vmatpush2.bf16.msra.mxu0 0
    %3422 = vmatprep.subr.bf16.mxu0 0
    %3423 = vmatpush2.bf16.msra.mxu0 0
    %3424 = vmatprep.subr.bf16.mxu0 0
    %3425 = vmatpush2.bf16.msra.mxu0 0
    %3426 = vmatprep.subr.bf16.mxu0 0
    %3427 = vmatpush2.bf16.msra.mxu0 0
    %3428 = vmatprep.subr.bf16.mxu0 0
    %3429 = vmatpush2.bf16.msra.mxu0 0
    %3430 = vmatprep.mubr.bf16.mxu0 0
    %3431 = vmatmul.mubr.bf16.gmra.mxu0 %v3234
    %v3432 = vpop.f32.mrf.mxu0
    %v3433 = vadd.f32 0.0, %v3432
    %v3434 = vpop.f32.mrf.mxu0
    %v3435 = vadd.f32 0.0, %v3434
    %v3436 = vpop.f32.mrf.mxu0
    %v3437 = vadd.f32 0.0, %v3436
    %v3438 = vpop.f32.mrf.mxu0
    %v3439 = vadd.f32 0.0, %v3438
    %3440 = vmatprep.mubr.bf16.mxu0 0
    %3441 = vmatmul.mubr.bf16.gmra.mxu0 %v3237
    %v3442 = vpop.f32.mrf.mxu0
    %v3443 = vadd.f32 0.0, %v3442
    %v3444 = vpop.f32.mrf.mxu0
    %v3445 = vadd.f32 0.0, %v3444
    %v3446 = vpop.f32.mrf.mxu0
    %v3447 = vadd.f32 0.0, %v3446
    %v3448 = vpop.f32.mrf.mxu0
    %v3449 = vadd.f32 0.0, %v3448
    %3450 = vdwg.mxu0
    %3451 = vmatprep.subr.bf16.mxu0 0
    %3452 = vmatpush1.bf16.msra.mxu0 0
    %3453 = vmatprep.subr.bf16.mxu0 0
    %3454 = vmatpush1.bf16.msra.mxu0 0
    %3455 = vmatprep.subr.bf16.mxu0 0
    %3456 = vmatpush1.bf16.msra.mxu0 0
    %3457 = vmatprep.subr.bf16.mxu0 0
    %3458 = vmatpush1.bf16.msra.mxu0 0
    %3459 = vmatprep.subr.bf16.mxu0 0
    %3460 = vmatpush1.bf16.msra.mxu0 0
    %3461 = vmatprep.subr.bf16.mxu0 0
    %3462 = vmatpush1.bf16.msra.mxu0 0
    %3463 = vmatprep.subr.bf16.mxu0 0
    %3464 = vmatpush1.bf16.msra.mxu0 0
    %3465 = vmatprep.subr.bf16.mxu0 %v2638
    %3466 = vmatpush1.bf16.msra.mxu0 %v2637
    %3467 = vmatprep.subr.bf16.mxu0 0
    %3468 = vmatpush2.bf16.msra.mxu0 0
    %3469 = vmatprep.subr.bf16.mxu0 0
    %3470 = vmatpush2.bf16.msra.mxu0 0
    %3471 = vmatprep.subr.bf16.mxu0 0
    %3472 = vmatpush2.bf16.msra.mxu0 0
    %3473 = vmatprep.subr.bf16.mxu0 0
    %3474 = vmatpush2.bf16.msra.mxu0 0
    %3475 = vmatprep.subr.bf16.mxu0 0
    %3476 = vmatpush2.bf16.msra.mxu0 0
    %3477 = vmatprep.subr.bf16.mxu0 0
    %3478 = vmatpush2.bf16.msra.mxu0 0
    %3479 = vmatprep.subr.bf16.mxu0 0
    %3480 = vmatpush2.bf16.msra.mxu0 0
    %3481 = vmatprep.subr.bf16.mxu0 0
    %3482 = vmatpush2.bf16.msra.mxu0 0
    %3483 = vmatprep.mubr.bf16.mxu0 0
    %3484 = vmatmul.mubr.bf16.gmra.mxu0 %v3234
    %v3485 = vpop.f32.mrf.mxu0
    %v3486 = vadd.f32 0.0, %v3485
    %v3487 = vpop.f32.mrf.mxu0
    %v3488 = vadd.f32 0.0, %v3487
    %v3489 = vpop.f32.mrf.mxu0
    %v3490 = vadd.f32 0.0, %v3489
    %v3491 = vpop.f32.mrf.mxu0
    %v3492 = vadd.f32 0.0, %v3491
    %3493 = vmatprep.mubr.bf16.mxu0 0
    %3494 = vmatmul.mubr.bf16.gmra.mxu0 %v3237
    %v3495 = vpop.f32.mrf.mxu0
    %v3496 = vadd.f32 0.0, %v3495
    %v3497 = vpop.f32.mrf.mxu0
    %v3498 = vadd.f32 0.0, %v3497
    %v3499 = vpop.f32.mrf.mxu0
    %v3500 = vadd.f32 0.0, %v3499
    %v3501 = vpop.f32.mrf.mxu0
    %v3502 = vadd.f32 0.0, %v3501
    %3503 = vdwg.mxu0
    %v3504 = vadd.f32 %v2988, %v3274
    %v3505 = vadd.f32 %v2990, %v3276
    %v3506 = vadd.f32 %v3041, %v3327
    %v3507 = vadd.f32 %v3043, %v3329
    %v3508 = vadd.f32 %v3094, %v3380
    %v3509 = vadd.f32 %v3096, %v3382
    %v3510 = vadd.f32 %v3147, %v3433
    %v3511 = vadd.f32 %v3149, %v3435
    %v3512 = vadd.f32 %v3200, %v3486
    %v3513 = vadd.f32 %v3202, %v3488
    %v3514 = vadd.f32 %v2992, %v3278
    %v3515 = vadd.f32 %v2994, %v3280
    %v3516 = vadd.f32 %v3045, %v3331
    %v3517 = vadd.f32 %v3047, %v3333
    %v3518 = vadd.f32 %v3098, %v3384
    %v3519 = vadd.f32 %v3100, %v3386
    %v3520 = vadd.f32 %v3151, %v3437
    %v3521 = vadd.f32 %v3153, %v3439
    %v3522 = vadd.f32 %v3204, %v3490
    %v3523 = vadd.f32 %v3206, %v3492
    %v3524 = vadd.f32 %v2998, %v3284
    %v3525 = vadd.f32 %v3000, %v3286
    %v3526 = vadd.f32 %v3051, %v3337
    %v3527 = vadd.f32 %v3053, %v3339
    %v3528 = vadd.f32 %v3104, %v3390
    %v3529 = vadd.f32 %v3106, %v3392
    %v3530 = vadd.f32 %v3157, %v3443
    %v3531 = vadd.f32 %v3159, %v3445
    %v3532 = vadd.f32 %v3210, %v3496
    %v3533 = vadd.f32 %v3212, %v3498
    %v3534 = vadd.f32 %v3002, %v3288
    %v3535 = vadd.f32 %v3004, %v3290
    %v3536 = vadd.f32 %v3055, %v3341
    %v3537 = vadd.f32 %v3057, %v3343
    %v3538 = vadd.f32 %v3108, %v3394
    %v3539 = vadd.f32 %v3110, %v3396
    %v3540 = vadd.f32 %v3161, %v3447
    %v3541 = vadd.f32 %v3163, %v3449
    %v3542 = vadd.f32 %v3214, %v3500
    %v3543 = vadd.f32 %v3216, %v3502
    %v3544 = vadd.f32 %v3504, %v3505
    %v3545 = vadd.f32 %v3544, %v3506
    %v3546 = vadd.f32 %v3545, %v3507
    %v3547 = vadd.f32 %v3546, %v3508
    %v3548 = vadd.f32 %v3547, %v3509
    %v3549 = vadd.f32 %v3548, %v3510
    %v3550 = vadd.f32 %v3549, %v3511
    %v3551 = vadd.f32 %v3550, %v3512
    %v3552 = vadd.f32 %v3551, %v3513
    %3553 = vadd.xlane.f32.xlu0 %v3552
    %v3554 = vpop.xlane.xlu0 %3553
    %v3555 = vadd.f32 %v3514, %v3515
    %v3556 = vadd.f32 %v3555, %v3516
    %v3557 = vadd.f32 %v3556, %v3517
    %v3558 = vadd.f32 %v3557, %v3518
    %v3559 = vadd.f32 %v3558, %v3519
    %v3560 = vadd.f32 %v3559, %v3520
    %v3561 = vadd.f32 %v3560, %v3521
    %v3562 = vadd.f32 %v3561, %v3522
    %v3563 = vadd.f32 %v3562, %v3523
    %3564 = vadd.xlane.f32.xlu0 %v3563
    %v3565 = vpop.xlane.xlu0 %3564
    %v3566 = vadd.f32 %v3524, %v3525
    %v3567 = vadd.f32 %v3566, %v3526
    %v3568 = vadd.f32 %v3567, %v3527
    %v3569 = vadd.f32 %v3568, %v3528
    %v3570 = vadd.f32 %v3569, %v3529
    %v3571 = vadd.f32 %v3570, %v3530
    %v3572 = vadd.f32 %v3571, %v3531
    %v3573 = vadd.f32 %v3572, %v3532
    %v3574 = vadd.f32 %v3573, %v3533
    %3575 = vadd.xlane.f32.xlu0 %v3574
    %v3576 = vpop.xlane.xlu0 %3575
    %v3577 = vadd.f32 %v3534, %v3535
    %v3578 = vadd.f32 %v3577, %v3536
    %v3579 = vadd.f32 %v3578, %v3537
    %v3580 = vadd.f32 %v3579, %v3538
    %v3581 = vadd.f32 %v3580, %v3539
    %v3582 = vadd.f32 %v3581, %v3540
    %v3583 = vadd.f32 %v3582, %v3541
    %v3584 = vadd.f32 %v3583, %v3542
    %v3585 = vadd.f32 %v3584, %v3543
    %3586 = vadd.xlane.f32.xlu0 %v3585
    %v3587 = vpop.xlane.xlu0 %3586
    %v3588 = vmul.f32 %v3554, 0.05
    %v3589 = vmul.f32 %v3565, 0.05
    %v3590 = vmul.f32 %v3576, 0.05
    %v3591 = vmul.f32 %v3587, 0.05
    %v3592 = vmul.f32 %v3504, %v3504
    %v3593 = vmul.f32 %v3505, %v3505
    %v3594 = vmul.f32 %v3506, %v3506
    %v3595 = vmul.f32 %v3507, %v3507
    %v3596 = vmul.f32 %v3508, %v3508
    %v3597 = vmul.f32 %v3509, %v3509
    %v3598 = vmul.f32 %v3510, %v3510
    %v3599 = vmul.f32 %v3511, %v3511
    %v3600 = vmul.f32 %v3512, %v3512
    %v3601 = vmul.f32 %v3513, %v3513
    %v3602 = vmul.f32 %v3514, %v3514
    %v3603 = vmul.f32 %v3515, %v3515
    %v3604 = vmul.f32 %v3516, %v3516
    %v3605 = vmul.f32 %v3517, %v3517
    %v3606 = vmul.f32 %v3518, %v3518
    %v3607 = vmul.f32 %v3519, %v3519
    %v3608 = vmul.f32 %v3520, %v3520
    %v3609 = vmul.f32 %v3521, %v3521
    %v3610 = vmul.f32 %v3522, %v3522
    %v3611 = vmul.f32 %v3523, %v3523
    %v3612 = vmul.f32 %v3524, %v3524
    %v3613 = vmul.f32 %v3525, %v3525
    %v3614 = vmul.f32 %v3526, %v3526
    %v3615 = vmul.f32 %v3527, %v3527
    %v3616 = vmul.f32 %v3528, %v3528
    %v3617 = vmul.f32 %v3529, %v3529
    %v3618 = vmul.f32 %v3530, %v3530
    %v3619 = vmul.f32 %v3531, %v3531
    %v3620 = vmul.f32 %v3532, %v3532
    %v3621 = vmul.f32 %v3533, %v3533
    %v3622 = vmul.f32 %v3534, %v3534
    %v3623 = vmul.f32 %v3535, %v3535
    %v3624 = vmul.f32 %v3536, %v3536
    %v3625 = vmul.f32 %v3537, %v3537
    %v3626 = vmul.f32 %v3538, %v3538
    %v3627 = vmul.f32 %v3539, %v3539
    %v3628 = vmul.f32 %v3540, %v3540
    %v3629 = vmul.f32 %v3541, %v3541
    %v3630 = vmul.f32 %v3542, %v3542
    %v3631 = vmul.f32 %v3543, %v3543
    %v3632 = vadd.f32 %v3592, %v3593
    %v3633 = vadd.f32 %v3632, %v3594
    %v3634 = vadd.f32 %v3633, %v3595
    %v3635 = vadd.f32 %v3634, %v3596
    %v3636 = vadd.f32 %v3635, %v3597
    %v3637 = vadd.f32 %v3636, %v3598
    %v3638 = vadd.f32 %v3637, %v3599
    %v3639 = vadd.f32 %v3638, %v3600
    %v3640 = vadd.f32 %v3639, %v3601
    %3641 = vadd.xlane.f32.xlu0 %v3640
    %v3642 = vpop.xlane.xlu0 %3641
    %v3643 = vadd.f32 %v3602, %v3603
    %v3644 = vadd.f32 %v3643, %v3604
    %v3645 = vadd.f32 %v3644, %v3605
    %v3646 = vadd.f32 %v3645, %v3606
    %v3647 = vadd.f32 %v3646, %v3607
    %v3648 = vadd.f32 %v3647, %v3608
    %v3649 = vadd.f32 %v3648, %v3609
    %v3650 = vadd.f32 %v3649, %v3610
    %v3651 = vadd.f32 %v3650, %v3611
    %3652 = vadd.xlane.f32.xlu0 %v3651
    %v3653 = vpop.xlane.xlu0 %3652
    %v3654 = vadd.f32 %v3612, %v3613
    %v3655 = vadd.f32 %v3654, %v3614
    %v3656 = vadd.f32 %v3655, %v3615
    %v3657 = vadd.f32 %v3656, %v3616
    %v3658 = vadd.f32 %v3657, %v3617
    %v3659 = vadd.f32 %v3658, %v3618
    %v3660 = vadd.f32 %v3659, %v3619
    %v3661 = vadd.f32 %v3660, %v3620
    %v3662 = vadd.f32 %v3661, %v3621
    %3663 = vadd.xlane.f32.xlu0 %v3662
    %v3664 = vpop.xlane.xlu0 %3663
    %v3665 = vadd.f32 %v3622, %v3623
    %v3666 = vadd.f32 %v3665, %v3624
    %v3667 = vadd.f32 %v3666, %v3625
    %v3668 = vadd.f32 %v3667, %v3626
    %v3669 = vadd.f32 %v3668, %v3627
    %v3670 = vadd.f32 %v3669, %v3628
    %v3671 = vadd.f32 %v3670, %v3629
    %v3672 = vadd.f32 %v3671, %v3630
    %v3673 = vadd.f32 %v3672, %v3631
    %3674 = vadd.xlane.f32.xlu0 %v3673
    %v3675 = vpop.xlane.xlu0 %3674
    %v3676 = vmul.f32 %v3642, 0.05
    %v3677 = vmul.f32 %v3653, 0.05
    %v3678 = vmul.f32 %v3664, 0.05
    %v3679 = vmul.f32 %v3675, 0.05
    %v3680 = vmul.f32 %v3588, %v3588
    %v3681 = vmul.f32 %v3589, %v3589
    %v3682 = vmul.f32 %v3590, %v3590
    %v3683 = vmul.f32 %v3591, %v3591
    %v3684 = vsub.f32 %v3676, %v3680
    %v3685 = vsub.f32 %v3677, %v3681
    %v3686 = vsub.f32 %v3678, %v3682
    %v3687 = vsub.f32 %v3679, %v3683
    %v3688 = vmax.f32 %v3684, 0.0
    %v3689 = vmax.f32 %v3685, 0.0
    %v3690 = vmax.f32 %v3686, 0.0
    %v3691 = vmax.f32 %v3687, 0.0
    %v3692 = vadd.f32 %v3688, 1e-05
    %v3693 = vadd.f32 %v3689, 1e-05
    %v3694 = vadd.f32 %v3690, 1e-05
    %v3695 = vadd.f32 %v3691, 1e-05
    %v3696 = vrsqrt.pop %v3692
    %v3697 = vrsqrt.pop %v3693
    %v3698 = vrsqrt.pop %v3694
    %v3699 = vrsqrt.pop %v3695
    %v3700 = vmul.f32 %v2639, %v3696
    %v3701 = vmul.f32 %v2640, %v3697
    %v3702 = vmul.f32 %v2641, %v3698
    %v3703 = vmul.f32 %v2642, %v3699
    %3705 = vset.pattern.permute.xlu0 0
    %3706 = vperm.xlu0 %3705, %v3700
    %v3707 = vpop.permute.xlu0 %3706
    %3710 = vset.pattern.permute.xlu0 0
    %3711 = vperm.xlu0 %3710, %v3701
    %v3712 = vpop.permute.xlu0 %3711
    %3715 = vset.pattern.permute.xlu0 0
    %3716 = vperm.xlu0 %3715, %v3702
    %v3717 = vpop.permute.xlu0 %3716
    %3720 = vset.pattern.permute.xlu0 0
    %3721 = vperm.xlu0 %3720, %v3703
    %v3722 = vpop.permute.xlu0 %3721
    %v3724 = vmul.f32 %v3504, %v3707
    %v3725 = vmul.f32 %v3505, %v3707
    %v3726 = vmul.f32 %v3506, %v3707
    %v3727 = vmul.f32 %v3507, %v3707
    %v3728 = vmul.f32 %v3508, %v3707
    %v3729 = vmul.f32 %v3509, %v3707
    %v3730 = vmul.f32 %v3510, %v3707
    %v3731 = vmul.f32 %v3511, %v3707
    %v3732 = vmul.f32 %v3512, %v3707
    %v3733 = vmul.f32 %v3513, %v3707
    %v3734 = vmul.f32 %v3514, %v3712
    %v3735 = vmul.f32 %v3515, %v3712
    %v3736 = vmul.f32 %v3516, %v3712
    %v3737 = vmul.f32 %v3517, %v3712
    %v3738 = vmul.f32 %v3518, %v3712
    %v3739 = vmul.f32 %v3519, %v3712
    %v3740 = vmul.f32 %v3520, %v3712
    %v3741 = vmul.f32 %v3521, %v3712
    %v3742 = vmul.f32 %v3522, %v3712
    %v3743 = vmul.f32 %v3523, %v3712
    %v3744 = vmul.f32 %v3524, %v3717
    %v3745 = vmul.f32 %v3525, %v3717
    %v3746 = vmul.f32 %v3526, %v3717
    %v3747 = vmul.f32 %v3527, %v3717
    %v3748 = vmul.f32 %v3528, %v3717
    %v3749 = vmul.f32 %v3529, %v3717
    %v3750 = vmul.f32 %v3530, %v3717
    %v3751 = vmul.f32 %v3531, %v3717
    %v3752 = vmul.f32 %v3532, %v3717
    %v3753 = vmul.f32 %v3533, %v3717
    %v3754 = vmul.f32 %v3534, %v3722
    %v3755 = vmul.f32 %v3535, %v3722
    %v3756 = vmul.f32 %v3536, %v3722
    %v3757 = vmul.f32 %v3537, %v3722
    %v3758 = vmul.f32 %v3538, %v3722
    %v3759 = vmul.f32 %v3539, %v3722
    %v3760 = vmul.f32 %v3540, %v3722
    %v3761 = vmul.f32 %v3541, %v3722
    %v3762 = vmul.f32 %v3542, %v3722
    %v3763 = vmul.f32 %v3543, %v3722
    %v3764 = vmul.f32 %v3588, %v3700
    %v3765 = vmul.f32 %v3589, %v3701
    %v3766 = vmul.f32 %v3590, %v3702
    %v3767 = vmul.f32 %v3591, %v3703
    %v3768 = vsub.f32 %v2643, %v3764
    %v3769 = vsub.f32 %v2644, %v3765
    %v3770 = vsub.f32 %v2645, %v3766
    %v3771 = vsub.f32 %v2646, %v3767
    %3773 = vset.pattern.permute.xlu0 0
    %3774 = vperm.xlu0 %3773, %v3768
    %v3775 = vpop.permute.xlu0 %3774
    %3778 = vset.pattern.permute.xlu0 0
    %3779 = vperm.xlu0 %3778, %v3769
    %v3780 = vpop.permute.xlu0 %3779
    %3783 = vset.pattern.permute.xlu0 0
    %3784 = vperm.xlu0 %3783, %v3770
    %v3785 = vpop.permute.xlu0 %3784
    %3788 = vset.pattern.permute.xlu0 0
    %3789 = vperm.xlu0 %3788, %v3771
    %v3790 = vpop.permute.xlu0 %3789
    %v3792 = vadd.f32 %v3724, %v3775
    %v3793 = vadd.f32 %v3725, %v3775
    %v3794 = vadd.f32 %v3726, %v3775
    %v3795 = vadd.f32 %v3727, %v3775
    %v3796 = vadd.f32 %v3728, %v3775
    %v3797 = vadd.f32 %v3729, %v3775
    %v3798 = vadd.f32 %v3730, %v3775
    %v3799 = vadd.f32 %v3731, %v3775
    %v3800 = vadd.f32 %v3732, %v3775
    %v3801 = vadd.f32 %v3733, %v3775
    %v3802 = vadd.f32 %v3734, %v3780
    %v3803 = vadd.f32 %v3735, %v3780
    %v3804 = vadd.f32 %v3736, %v3780
    %v3805 = vadd.f32 %v3737, %v3780
    %v3806 = vadd.f32 %v3738, %v3780
    %v3807 = vadd.f32 %v3739, %v3780
    %v3808 = vadd.f32 %v3740, %v3780
    %v3809 = vadd.f32 %v3741, %v3780
    %v3810 = vadd.f32 %v3742, %v3780
    %v3811 = vadd.f32 %v3743, %v3780
    %v3812 = vadd.f32 %v3744, %v3785
    %v3813 = vadd.f32 %v3745, %v3785
    %v3814 = vadd.f32 %v3746, %v3785
    %v3815 = vadd.f32 %v3747, %v3785
    %v3816 = vadd.f32 %v3748, %v3785
    %v3817 = vadd.f32 %v3749, %v3785
    %v3818 = vadd.f32 %v3750, %v3785
    %v3819 = vadd.f32 %v3751, %v3785
    %v3820 = vadd.f32 %v3752, %v3785
    %v3821 = vadd.f32 %v3753, %v3785
    %v3822 = vadd.f32 %v3754, %v3790
    %v3823 = vadd.f32 %v3755, %v3790
    %v3824 = vadd.f32 %v3756, %v3790
    %v3825 = vadd.f32 %v3757, %v3790
    %v3826 = vadd.f32 %v3758, %v3790
    %v3827 = vadd.f32 %v3759, %v3790
    %v3828 = vadd.f32 %v3760, %v3790
    %v3829 = vadd.f32 %v3761, %v3790
    %v3830 = vadd.f32 %v3762, %v3790
    %v3831 = vadd.f32 %v3763, %v3790
    %vm3832 = vcmp.ge.f32.partialorder %v3792, 0.0
    %vm3833 = vcmp.ge.f32.partialorder %v3793, 0.0
    %vm3834 = vcmp.ge.f32.partialorder %v3794, 0.0
    %vm3835 = vcmp.ge.f32.partialorder %v3795, 0.0
    %vm3836 = vcmp.ge.f32.partialorder %v3796, 0.0
    %vm3837 = vcmp.ge.f32.partialorder %v3797, 0.0
    %vm3838 = vcmp.ge.f32.partialorder %v3798, 0.0
    %vm3839 = vcmp.ge.f32.partialorder %v3799, 0.0
    %vm3840 = vcmp.ge.f32.partialorder %v3800, 0.0
    %vm3841 = vcmp.ge.f32.partialorder %v3801, 0.0
    %vm3842 = vcmp.ge.f32.partialorder %v3802, 0.0
    %vm3843 = vcmp.ge.f32.partialorder %v3803, 0.0
    %vm3844 = vcmp.ge.f32.partialorder %v3804, 0.0
    %vm3845 = vcmp.ge.f32.partialorder %v3805, 0.0
    %vm3846 = vcmp.ge.f32.partialorder %v3806, 0.0
    %vm3847 = vcmp.ge.f32.partialorder %v3807, 0.0
    %vm3848 = vcmp.ge.f32.partialorder %v3808, 0.0
    %vm3849 = vcmp.ge.f32.partialorder %v3809, 0.0
    %vm3850 = vcmp.ge.f32.partialorder %v3810, 0.0
    %vm3851 = vcmp.ge.f32.partialorder %v3811, 0.0
    %vm3852 = vcmp.ge.f32.partialorder %v3812, 0.0
    %vm3853 = vcmp.ge.f32.partialorder %v3813, 0.0
    %vm3854 = vcmp.ge.f32.partialorder %v3814, 0.0
    %vm3855 = vcmp.ge.f32.partialorder %v3815, 0.0
    %vm3856 = vcmp.ge.f32.partialorder %v3816, 0.0
    %vm3857 = vcmp.ge.f32.partialorder %v3817, 0.0
    %vm3858 = vcmp.ge.f32.partialorder %v3818, 0.0
    %vm3859 = vcmp.ge.f32.partialorder %v3819, 0.0
    %vm3860 = vcmp.ge.f32.partialorder %v3820, 0.0
    %vm3861 = vcmp.ge.f32.partialorder %v3821, 0.0
    %vm3862 = vcmp.ge.f32.partialorder %v3822, 0.0
    %vm3863 = vcmp.ge.f32.partialorder %v3823, 0.0
    %vm3864 = vcmp.ge.f32.partialorder %v3824, 0.0
    %vm3865 = vcmp.ge.f32.partialorder %v3825, 0.0
    %vm3866 = vcmp.ge.f32.partialorder %v3826, 0.0
    %vm3867 = vcmp.ge.f32.partialorder %v3827, 0.0
    %vm3868 = vcmp.ge.f32.partialorder %v3828, 0.0
    %vm3869 = vcmp.ge.f32.partialorder %v3829, 0.0
    %vm3870 = vcmp.ge.f32.partialorder %v3830, 0.0
    %vm3871 = vcmp.ge.f32.partialorder %v3831, 0.0
    %v3872 = vmul.f32 %v3792, 0.01
    %v3873 = vmul.f32 %v3793, 0.01
    %v3874 = vmul.f32 %v3794, 0.01
    %v3875 = vmul.f32 %v3795, 0.01
    %v3876 = vmul.f32 %v3796, 0.01
    %v3877 = vmul.f32 %v3797, 0.01
    %v3878 = vmul.f32 %v3798, 0.01
    %v3879 = vmul.f32 %v3799, 0.01
    %v3880 = vmul.f32 %v3800, 0.01
    %v3881 = vmul.f32 %v3801, 0.01
    %v3882 = vmul.f32 %v3802, 0.01
    %v3883 = vmul.f32 %v3803, 0.01
    %v3884 = vmul.f32 %v3804, 0.01
    %v3885 = vmul.f32 %v3805, 0.01
    %v3886 = vmul.f32 %v3806, 0.01
    %v3887 = vmul.f32 %v3807, 0.01
    %v3888 = vmul.f32 %v3808, 0.01
    %v3889 = vmul.f32 %v3809, 0.01
    %v3890 = vmul.f32 %v3810, 0.01
    %v3891 = vmul.f32 %v3811, 0.01
    %v3892 = vmul.f32 %v3812, 0.01
    %v3893 = vmul.f32 %v3813, 0.01
    %v3894 = vmul.f32 %v3814, 0.01
    %v3895 = vmul.f32 %v3815, 0.01
    %v3896 = vmul.f32 %v3816, 0.01
    %v3897 = vmul.f32 %v3817, 0.01
    %v3898 = vmul.f32 %v3818, 0.01
    %v3899 = vmul.f32 %v3819, 0.01
    %v3900 = vmul.f32 %v3820, 0.01
    %v3901 = vmul.f32 %v3821, 0.01
    %v3902 = vmul.f32 %v3822, 0.01
    %v3903 = vmul.f32 %v3823, 0.01
    %v3904 = vmul.f32 %v3824, 0.01
    %v3905 = vmul.f32 %v3825, 0.01
    %v3906 = vmul.f32 %v3826, 0.01
    %v3907 = vmul.f32 %v3827, 0.01
    %v3908 = vmul.f32 %v3828, 0.01
    %v3909 = vmul.f32 %v3829, 0.01
    %v3910 = vmul.f32 %v3830, 0.01
    %v3911 = vmul.f32 %v3831, 0.01
    %v3912 = vsel %vm3832, %v3792, %v3872
    %v3913 = vsel %vm3833, %v3793, %v3873
    %v3914 = vsel %vm3834, %v3794, %v3874
    %v3915 = vsel %vm3835, %v3795, %v3875
    %v3916 = vsel %vm3836, %v3796, %v3876
    %v3917 = vsel %vm3837, %v3797, %v3877
    %v3918 = vsel %vm3838, %v3798, %v3878
    %v3919 = vsel %vm3839, %v3799, %v3879
    %v3920 = vsel %vm3840, %v3800, %v3880
    %v3921 = vsel %vm3841, %v3801, %v3881
    %v3922 = vsel %vm3842, %v3802, %v3882
    %v3923 = vsel %vm3843, %v3803, %v3883
    %v3924 = vsel %vm3844, %v3804, %v3884
    %v3925 = vsel %vm3845, %v3805, %v3885
    %v3926 = vsel %vm3846, %v3806, %v3886
    %v3927 = vsel %vm3847, %v3807, %v3887
    %v3928 = vsel %vm3848, %v3808, %v3888
    %v3929 = vsel %vm3849, %v3809, %v3889
    %v3930 = vsel %vm3850, %v3810, %v3890
    %v3931 = vsel %vm3851, %v3811, %v3891
    %v3932 = vsel %vm3852, %v3812, %v3892
    %v3933 = vsel %vm3853, %v3813, %v3893
    %v3934 = vsel %vm3854, %v3814, %v3894
    %v3935 = vsel %vm3855, %v3815, %v3895
    %v3936 = vsel %vm3856, %v3816, %v3896
    %v3937 = vsel %vm3857, %v3817, %v3897
    %v3938 = vsel %vm3858, %v3818, %v3898
    %v3939 = vsel %vm3859, %v3819, %v3899
    %v3940 = vsel %vm3860, %v3820, %v3900
    %v3941 = vsel %vm3861, %v3821, %v3901
    %v3942 = vsel %vm3862, %v3822, %v3902
    %v3943 = vsel %vm3863, %v3823, %v3903
    %v3944 = vsel %vm3864, %v3824, %v3904
    %v3945 = vsel %vm3865, %v3825, %v3905
    %v3946 = vsel %vm3866, %v3826, %v3906
    %v3947 = vsel %vm3867, %v3827, %v3907
    %v3948 = vsel %vm3868, %v3828, %v3908
    %v3949 = vsel %vm3869, %v3829, %v3909
    %v3950 = vsel %vm3870, %v3830, %v3910
    %v3951 = vsel %vm3871, %v3831, %v3911
    %v3952 = vmul.f32 %v3912, %v1423
    %v3953 = vmul.f32 %v3913, %v1427
    %v3954 = vmul.f32 %v3914, %v1431
    %v3955 = vmul.f32 %v3915, %v1435
    %v3956 = vmul.f32 %v3916, %v1439
    %v3957 = vmul.f32 %v3917, %v1443
    %v3958 = vmul.f32 %v3918, %v1447
    %v3959 = vmul.f32 %v3919, %v1451
    %v3960 = vmul.f32 %v3920, %v1455
    %v3961 = vmul.f32 %v3921, %v1459
    %v3962 = vmul.f32 %v3922, %v1423
    %v3963 = vmul.f32 %v3923, %v1427
    %v3964 = vmul.f32 %v3924, %v1431
    %v3965 = vmul.f32 %v3925, %v1435
    %v3966 = vmul.f32 %v3926, %v1439
    %v3967 = vmul.f32 %v3927, %v1443
    %v3968 = vmul.f32 %v3928, %v1447
    %v3969 = vmul.f32 %v3929, %v1451
    %v3970 = vmul.f32 %v3930, %v1455
    %v3971 = vmul.f32 %v3931, %v1459
    %v3972 = vmul.f32 %v3932, %v1423
    %v3973 = vmul.f32 %v3933, %v1427
    %v3974 = vmul.f32 %v3934, %v1431
    %v3975 = vmul.f32 %v3935, %v1435
    %v3976 = vmul.f32 %v3936, %v1439
    %v3977 = vmul.f32 %v3937, %v1443
    %v3978 = vmul.f32 %v3938, %v1447
    %v3979 = vmul.f32 %v3939, %v1451
    %v3980 = vmul.f32 %v3940, %v1455
    %v3981 = vmul.f32 %v3941, %v1459
    %v3982 = vmul.f32 %v3942, %v1423
    %v3983 = vmul.f32 %v3943, %v1427
    %v3984 = vmul.f32 %v3944, %v1431
    %v3985 = vmul.f32 %v3945, %v1435
    %v3986 = vmul.f32 %v3946, %v1439
    %v3987 = vmul.f32 %v3947, %v1443
    %v3988 = vmul.f32 %v3948, %v1447
    %v3989 = vmul.f32 %v3949, %v1451
    %v3990 = vmul.f32 %v3950, %v1455
    %v3991 = vmul.f32 %v3951, %v1459
    %v3992 = vpack.c.bf16 %v3962, %v3952
    %v3993 = vpack.c.bf16 %v3963, %v3953
    %v3994 = vpack.c.bf16 %v3964, %v3954
    %v3995 = vpack.c.bf16 %v3965, %v3955
    %v3996 = vpack.c.bf16 %v3966, %v3956
    %v3997 = vpack.c.bf16 %v3967, %v3957
    %v3998 = vpack.c.bf16 %v3968, %v3958
    %v3999 = vpack.c.bf16 %v3969, %v3959
    %v4000 = vpack.c.bf16 %v3970, %v3960
    %v4001 = vpack.c.bf16 %v3971, %v3961
    %v4002 = vpack.c.bf16 %v3982, %v3972
    %v4003 = vpack.c.bf16 %v3983, %v3973
    %v4004 = vpack.c.bf16 %v3984, %v3974
    %v4005 = vpack.c.bf16 %v3985, %v3975
    %v4006 = vpack.c.bf16 %v3986, %v3976
    %v4007 = vpack.c.bf16 %v3987, %v3977
    %v4008 = vpack.c.bf16 %v3988, %v3978
    %v4009 = vpack.c.bf16 %v3989, %v3979
    %v4010 = vpack.c.bf16 %v3990, %v3980
    %v4011 = vpack.c.bf16 %v3991, %v3981
    %v4012 = vld [vmem:[%s11] sm:$0xf]
    %v4013 = vld [vmem:[%s11 + $0x4] sm:$0xf]
    %v4014 = vld [vmem:[%s11 + $0x8] sm:$0xf]
    %v4015 = vld [vmem:[%s11 + $0xc] sm:$0xf]
    %v4016 = vld [vmem:[%s11 + $0x10] sm:$0xf]
    %v4017 = vld [vmem:[%s11 + $0x14] sm:$0xf]
    %v4018 = vld [vmem:[%s11 + $0x18] sm:$0xf]
    %v4019 = vld [vmem:[%s11 + $0x1c] sm:$0xf]
    %s4020 = scalar_lea.vmem %s11, 32
    %v4021 = vld [vmem:[%s4020] sm:$0xf]
    %v4022 = vld [vmem:[%s4020 + $0x4] sm:$0xf]
    %v4023 = vld [vmem:[%s4020 + $0x8] sm:$0xf]
    %v4024 = vld [vmem:[%s4020 + $0xc] sm:$0xf]
    %v4025 = vld [vmem:[%s4020 + $0x10] sm:$0xf]
    %v4026 = vld [vmem:[%s4020 + $0x14] sm:$0xf]
    %v4027 = vld [vmem:[%s4020 + $0x18] sm:$0xf]
    %v4028 = vld [vmem:[%s4020 + $0x1c] sm:$0xf]
    %v4037 = vunpack.c.l.b16 %v4021
    %v4038 = vunpack.c.l.b16 %v4022
    %v4039 = vunpack.c.l.b16 %v4023
    %v4040 = vunpack.c.l.b16 %v4024
    %v4041 = vunpack.c.l.b16 %v4025
    %v4042 = vunpack.c.l.b16 %v4026
    %v4043 = vunpack.c.l.b16 %v4027
    %v4044 = vunpack.c.l.b16 %v4028
    %v4045 = vpack.c.b16 %v4038, %v4037
    %v4046 = vpack.c.b16 %v4040, %v4039
    %v4047 = vpack.c.b16 %v4042, %v4041
    %v4048 = vpack.c.b16 %v4044, %v4043
    %vm4049 = vcmask 261120
    %v4051 = vsel %vm4049, %v4045, 0
    %v4054 = vsel %vm4049, %v4046, 0
    %v4057 = vsel %vm4049, %v4047, 0
    %v4060 = vsel %vm4049, %v4048, 0
    %4062 = vmatprep.subr.bf16.mxu0 0
    %4063 = vmatpush1.bf16.msra.mxu0 0
    %4064 = vmatprep.subr.bf16.mxu0 0
    %4065 = vmatpush1.bf16.msra.mxu0 0
    %4066 = vmatprep.subr.bf16.mxu0 0
    %4067 = vmatpush1.bf16.msra.mxu0 0
    %4068 = vmatprep.subr.bf16.mxu0 0
    %4069 = vmatpush1.bf16.msra.mxu0 0
    %4070 = vmatprep.subr.bf16.mxu0 0
    %4071 = vmatpush1.bf16.msra.mxu0 0
    %4072 = vmatprep.subr.bf16.mxu0 0
    %4073 = vmatpush1.bf16.msra.mxu0 0
    %4074 = vmatprep.subr.bf16.mxu0 0
    %4075 = vmatpush1.bf16.msra.mxu0 %v4003
    %4076 = vmatprep.subr.bf16.mxu0 0
    %4077 = vmatpush1.bf16.msra.mxu0 %v3993
    %4078 = vmatprep.subr.bf16.mxu0 0
    %4079 = vmatpush2.bf16.msra.mxu0 0
    %4080 = vmatprep.subr.bf16.mxu0 0
    %4081 = vmatpush2.bf16.msra.mxu0 0
    %4082 = vmatprep.subr.bf16.mxu0 0
    %4083 = vmatpush2.bf16.msra.mxu0 0
    %4084 = vmatprep.subr.bf16.mxu0 0
    %4085 = vmatpush2.bf16.msra.mxu0 0
    %4086 = vmatprep.subr.bf16.mxu0 0
    %4087 = vmatpush2.bf16.msra.mxu0 0
    %4088 = vmatprep.subr.bf16.mxu0 0
    %4089 = vmatpush2.bf16.msra.mxu0 0
    %4090 = vmatprep.subr.bf16.mxu0 0
    %4091 = vmatpush2.bf16.msra.mxu0 0
    %4092 = vmatprep.subr.bf16.mxu0 0
    %4093 = vmatpush2.bf16.msra.mxu0 0
    %4094 = vmatprep.mubr.bf16.mxu0 0
    %4095 = vmatmul.mubr.bf16.gmra.mxu0 %v4051
    %v4096 = vpop.f32.mrf.mxu0
    %v4097 = vadd.f32 0.0, %v4096
    %v4098 = vpop.f32.mrf.mxu0
    %v4099 = vpop.f32.mrf.mxu0
    %v4100 = vadd.f32 0.0, %v4099
    %v4101 = vpop.f32.mrf.mxu0
    %4102 = vmatprep.mubr.bf16.mxu0 0
    %4103 = vmatmul.mubr.bf16.gmra.mxu0 %v4054
    %v4104 = vpop.f32.mrf.mxu0
    %v4105 = vadd.f32 0.0, %v4104
    %v4106 = vpop.f32.mrf.mxu0
    %v4107 = vpop.f32.mrf.mxu0
    %v4108 = vadd.f32 0.0, %v4107
    %v4109 = vpop.f32.mrf.mxu0
    %4110 = vmatprep.mubr.bf16.mxu0 0
    %4111 = vmatmul.mubr.bf16.gmra.mxu0 %v4057
    %v4112 = vpop.f32.mrf.mxu0
    %v4113 = vadd.f32 0.0, %v4112
    %v4114 = vpop.f32.mrf.mxu0
    %v4115 = vpop.f32.mrf.mxu0
    %v4116 = vadd.f32 0.0, %v4115
    %v4117 = vpop.f32.mrf.mxu0
    %4118 = vmatprep.mubr.bf16.mxu0 0
    %4119 = vmatmul.mubr.bf16.gmra.mxu0 %v4060
    %v4120 = vpop.f32.mrf.mxu0
    %v4121 = vadd.f32 0.0, %v4120
    %v4122 = vpop.f32.mrf.mxu0
    %v4123 = vpop.f32.mrf.mxu0
    %v4124 = vadd.f32 0.0, %v4123
    %v4125 = vpop.f32.mrf.mxu0
    %4126 = vdwg.mxu0
    %v4135 = vunpack.c.l.b16 %v4012
    %v4136 = vunpack.c.l.b16 %v4013
    %v4137 = vunpack.c.l.b16 %v4014
    %v4138 = vunpack.c.l.b16 %v4015
    %v4139 = vunpack.c.l.b16 %v4016
    %v4140 = vunpack.c.l.b16 %v4017
    %v4141 = vunpack.c.l.b16 %v4018
    %v4142 = vunpack.c.l.b16 %v4019
    %v4143 = vpack.c.b16 %v4136, %v4135
    %v4144 = vpack.c.b16 %v4138, %v4137
    %v4145 = vpack.c.b16 %v4140, %v4139
    %v4146 = vpack.c.b16 %v4142, %v4141
    %v4148 = vsel %vm4049, %v4143, 0
    %v4151 = vsel %vm4049, %v4144, 0
    %v4154 = vsel %vm4049, %v4145, 0
    %v4157 = vsel %vm4049, %v4146, 0
    %4159 = vmatprep.subr.bf16.mxu0 0
    %4160 = vmatpush1.bf16.msra.mxu0 0
    %4161 = vmatprep.subr.bf16.mxu0 0
    %4162 = vmatpush1.bf16.msra.mxu0 0
    %4163 = vmatprep.subr.bf16.mxu0 0
    %4164 = vmatpush1.bf16.msra.mxu0 0
    %4165 = vmatprep.subr.bf16.mxu0 0
    %4166 = vmatpush1.bf16.msra.mxu0 0
    %4167 = vmatprep.subr.bf16.mxu0 0
    %4168 = vmatpush1.bf16.msra.mxu0 0
    %4169 = vmatprep.subr.bf16.mxu0 0
    %4170 = vmatpush1.bf16.msra.mxu0 0
    %4171 = vmatprep.subr.bf16.mxu0 0
    %4172 = vmatpush1.bf16.msra.mxu0 %v4002
    %4173 = vmatprep.subr.bf16.mxu0 0
    %4174 = vmatpush1.bf16.msra.mxu0 %v3992
    %4175 = vmatprep.subr.bf16.mxu0 0
    %4176 = vmatpush2.bf16.msra.mxu0 0
    %4177 = vmatprep.subr.bf16.mxu0 0
    %4178 = vmatpush2.bf16.msra.mxu0 0
    %4179 = vmatprep.subr.bf16.mxu0 0
    %4180 = vmatpush2.bf16.msra.mxu0 0
    %4181 = vmatprep.subr.bf16.mxu0 0
    %4182 = vmatpush2.bf16.msra.mxu0 0
    %4183 = vmatprep.subr.bf16.mxu0 0
    %4184 = vmatpush2.bf16.msra.mxu0 0
    %4185 = vmatprep.subr.bf16.mxu0 0
    %4186 = vmatpush2.bf16.msra.mxu0 0
    %4187 = vmatprep.subr.bf16.mxu0 0
    %4188 = vmatpush2.bf16.msra.mxu0 0
    %4189 = vmatprep.subr.bf16.mxu0 0
    %4190 = vmatpush2.bf16.msra.mxu0 0
    %4191 = vmatprep.mubr.bf16.mxu0 0
    %4192 = vmatmul.mubr.bf16.gmra.mxu0 %v4148
    %v4193 = vpop.f32.mrf.mxu0
    %v4194 = vadd.f32 %v4097, %v4193
    %v4195 = vpop.f32.mrf.mxu0
    %v4196 = vpop.f32.mrf.mxu0
    %v4197 = vadd.f32 %v4100, %v4196
    %v4198 = vpop.f32.mrf.mxu0
    %4199 = vmatprep.mubr.bf16.mxu0 0
    %4200 = vmatmul.mubr.bf16.gmra.mxu0 %v4151
    %v4201 = vpop.f32.mrf.mxu0
    %v4202 = vadd.f32 %v4105, %v4201
    %v4203 = vpop.f32.mrf.mxu0
    %v4204 = vpop.f32.mrf.mxu0
    %v4205 = vadd.f32 %v4108, %v4204
    %v4206 = vpop.f32.mrf.mxu0
    %4207 = vmatprep.mubr.bf16.mxu0 0
    %4208 = vmatmul.mubr.bf16.gmra.mxu0 %v4154
    %v4209 = vpop.f32.mrf.mxu0
    %v4210 = vadd.f32 %v4113, %v4209
    %v4211 = vpop.f32.mrf.mxu0
    %v4212 = vpop.f32.mrf.mxu0
    %v4213 = vadd.f32 %v4116, %v4212
    %v4214 = vpop.f32.mrf.mxu0
    %4215 = vmatprep.mubr.bf16.mxu0 0
    %4216 = vmatmul.mubr.bf16.gmra.mxu0 %v4157
    %v4217 = vpop.f32.mrf.mxu0
    %v4218 = vadd.f32 %v4121, %v4217
    %v4219 = vpop.f32.mrf.mxu0
    %v4220 = vpop.f32.mrf.mxu0
    %v4221 = vadd.f32 %v4124, %v4220
    %v4222 = vpop.f32.mrf.mxu0
    %4223 = vdwg.mxu0
    %s4224 = scalar_lea.vmem %s11, 64
    %v4225 = vld [vmem:[%s4224] sm:$0xf]
    %v4226 = vld [vmem:[%s4224 + $0x4] sm:$0xf]
    %v4227 = vld [vmem:[%s4224 + $0x8] sm:$0xf]
    %v4228 = vld [vmem:[%s4224 + $0xc] sm:$0xf]
    %v4229 = vld [vmem:[%s4224 + $0x10] sm:$0xf]
    %v4230 = vld [vmem:[%s4224 + $0x14] sm:$0xf]
    %v4231 = vld [vmem:[%s4224 + $0x18] sm:$0xf]
    %v4232 = vld [vmem:[%s4224 + $0x1c] sm:$0xf]
    %v4241 = vunpack.c.l.b16 %v4225
    %v4242 = vunpack.c.l.b16 %v4226
    %v4243 = vunpack.c.l.b16 %v4227
    %v4244 = vunpack.c.l.b16 %v4228
    %v4245 = vunpack.c.l.b16 %v4229
    %v4246 = vunpack.c.l.b16 %v4230
    %v4247 = vunpack.c.l.b16 %v4231
    %v4248 = vunpack.c.l.b16 %v4232
    %v4249 = vpack.c.b16 %v4242, %v4241
    %v4250 = vpack.c.b16 %v4244, %v4243
    %v4251 = vpack.c.b16 %v4246, %v4245
    %v4252 = vpack.c.b16 %v4248, %v4247
    %v4254 = vsel %vm4049, %v4249, 0
    %v4257 = vsel %vm4049, %v4250, 0
    %v4260 = vsel %vm4049, %v4251, 0
    %v4263 = vsel %vm4049, %v4252, 0
    %4265 = vmatprep.subr.bf16.mxu0 0
    %4266 = vmatpush1.bf16.msra.mxu0 0
    %4267 = vmatprep.subr.bf16.mxu0 0
    %4268 = vmatpush1.bf16.msra.mxu0 0
    %4269 = vmatprep.subr.bf16.mxu0 0
    %4270 = vmatpush1.bf16.msra.mxu0 0
    %4271 = vmatprep.subr.bf16.mxu0 0
    %4272 = vmatpush1.bf16.msra.mxu0 0
    %4273 = vmatprep.subr.bf16.mxu0 0
    %4274 = vmatpush1.bf16.msra.mxu0 0
    %4275 = vmatprep.subr.bf16.mxu0 0
    %4276 = vmatpush1.bf16.msra.mxu0 0
    %4277 = vmatprep.subr.bf16.mxu0 0
    %4278 = vmatpush1.bf16.msra.mxu0 %v4004
    %4279 = vmatprep.subr.bf16.mxu0 0
    %4280 = vmatpush1.bf16.msra.mxu0 %v3994
    %4281 = vmatprep.subr.bf16.mxu0 0
    %4282 = vmatpush2.bf16.msra.mxu0 0
    %4283 = vmatprep.subr.bf16.mxu0 0
    %4284 = vmatpush2.bf16.msra.mxu0 0
    %4285 = vmatprep.subr.bf16.mxu0 0
    %4286 = vmatpush2.bf16.msra.mxu0 0
    %4287 = vmatprep.subr.bf16.mxu0 0
    %4288 = vmatpush2.bf16.msra.mxu0 0
    %4289 = vmatprep.subr.bf16.mxu0 0
    %4290 = vmatpush2.bf16.msra.mxu0 0
    %4291 = vmatprep.subr.bf16.mxu0 0
    %4292 = vmatpush2.bf16.msra.mxu0 0
    %4293 = vmatprep.subr.bf16.mxu0 0
    %4294 = vmatpush2.bf16.msra.mxu0 0
    %4295 = vmatprep.subr.bf16.mxu0 0
    %4296 = vmatpush2.bf16.msra.mxu0 0
    %4297 = vmatprep.mubr.bf16.mxu0 0
    %4298 = vmatmul.mubr.bf16.gmra.mxu0 %v4254
    %v4299 = vpop.f32.mrf.mxu0
    %v4300 = vadd.f32 0.0, %v4299
    %v4301 = vpop.f32.mrf.mxu0
    %v4302 = vpop.f32.mrf.mxu0
    %v4303 = vadd.f32 0.0, %v4302
    %v4304 = vpop.f32.mrf.mxu0
    %4305 = vmatprep.mubr.bf16.mxu0 0
    %4306 = vmatmul.mubr.bf16.gmra.mxu0 %v4257
    %v4307 = vpop.f32.mrf.mxu0
    %v4308 = vadd.f32 0.0, %v4307
    %v4309 = vpop.f32.mrf.mxu0
    %v4310 = vpop.f32.mrf.mxu0
    %v4311 = vadd.f32 0.0, %v4310
    %v4312 = vpop.f32.mrf.mxu0
    %4313 = vmatprep.mubr.bf16.mxu0 0
    %4314 = vmatmul.mubr.bf16.gmra.mxu0 %v4260
    %v4315 = vpop.f32.mrf.mxu0
    %v4316 = vadd.f32 0.0, %v4315
    %v4317 = vpop.f32.mrf.mxu0
    %v4318 = vpop.f32.mrf.mxu0
    %v4319 = vadd.f32 0.0, %v4318
    %v4320 = vpop.f32.mrf.mxu0
    %4321 = vmatprep.mubr.bf16.mxu0 0
    %4322 = vmatmul.mubr.bf16.gmra.mxu0 %v4263
    %v4323 = vpop.f32.mrf.mxu0
    %v4324 = vadd.f32 0.0, %v4323
    %v4325 = vpop.f32.mrf.mxu0
    %v4326 = vpop.f32.mrf.mxu0
    %v4327 = vadd.f32 0.0, %v4326
    %v4328 = vpop.f32.mrf.mxu0
    %4329 = vdwg.mxu0
    %v4330 = vadd.f32 %v4194, %v4300
    %v4331 = vadd.f32 %v4197, %v4303
    %v4332 = vadd.f32 %v4202, %v4308
    %v4333 = vadd.f32 %v4205, %v4311
    %v4334 = vadd.f32 %v4210, %v4316
    %v4335 = vadd.f32 %v4213, %v4319
    %v4336 = vadd.f32 %v4218, %v4324
    %v4337 = vadd.f32 %v4221, %v4327
    %s4338 = scalar_lea.vmem %s11, 96
    %v4339 = vld [vmem:[%s4338] sm:$0xf]
    %v4340 = vld [vmem:[%s4338 + $0x4] sm:$0xf]
    %v4341 = vld [vmem:[%s4338 + $0x8] sm:$0xf]
    %v4342 = vld [vmem:[%s4338 + $0xc] sm:$0xf]
    %v4343 = vld [vmem:[%s4338 + $0x10] sm:$0xf]
    %v4344 = vld [vmem:[%s4338 + $0x14] sm:$0xf]
    %v4345 = vld [vmem:[%s4338 + $0x18] sm:$0xf]
    %v4346 = vld [vmem:[%s4338 + $0x1c] sm:$0xf]
    %v4355 = vunpack.c.l.b16 %v4339
    %v4356 = vunpack.c.l.b16 %v4340
    %v4357 = vunpack.c.l.b16 %v4341
    %v4358 = vunpack.c.l.b16 %v4342
    %v4359 = vunpack.c.l.b16 %v4343
    %v4360 = vunpack.c.l.b16 %v4344
    %v4361 = vunpack.c.l.b16 %v4345
    %v4362 = vunpack.c.l.b16 %v4346
    %v4363 = vpack.c.b16 %v4356, %v4355
    %v4364 = vpack.c.b16 %v4358, %v4357
    %v4365 = vpack.c.b16 %v4360, %v4359
    %v4366 = vpack.c.b16 %v4362, %v4361
    %v4368 = vsel %vm4049, %v4363, 0
    %v4371 = vsel %vm4049, %v4364, 0
    %v4374 = vsel %vm4049, %v4365, 0
    %v4377 = vsel %vm4049, %v4366, 0
    %4379 = vmatprep.subr.bf16.mxu0 0
    %4380 = vmatpush1.bf16.msra.mxu0 0
    %4381 = vmatprep.subr.bf16.mxu0 0
    %4382 = vmatpush1.bf16.msra.mxu0 0
    %4383 = vmatprep.subr.bf16.mxu0 0
    %4384 = vmatpush1.bf16.msra.mxu0 0
    %4385 = vmatprep.subr.bf16.mxu0 0
    %4386 = vmatpush1.bf16.msra.mxu0 0
    %4387 = vmatprep.subr.bf16.mxu0 0
    %4388 = vmatpush1.bf16.msra.mxu0 0
    %4389 = vmatprep.subr.bf16.mxu0 0
    %4390 = vmatpush1.bf16.msra.mxu0 0
    %4391 = vmatprep.subr.bf16.mxu0 0
    %4392 = vmatpush1.bf16.msra.mxu0 %v4005
    %4393 = vmatprep.subr.bf16.mxu0 0
    %4394 = vmatpush1.bf16.msra.mxu0 %v3995
    %4395 = vmatprep.subr.bf16.mxu0 0
    %4396 = vmatpush2.bf16.msra.mxu0 0
    %4397 = vmatprep.subr.bf16.mxu0 0
    %4398 = vmatpush2.bf16.msra.mxu0 0
    %4399 = vmatprep.subr.bf16.mxu0 0
    %4400 = vmatpush2.bf16.msra.mxu0 0
    %4401 = vmatprep.subr.bf16.mxu0 0
    %4402 = vmatpush2.bf16.msra.mxu0 0
    %4403 = vmatprep.subr.bf16.mxu0 0
    %4404 = vmatpush2.bf16.msra.mxu0 0
    %4405 = vmatprep.subr.bf16.mxu0 0
    %4406 = vmatpush2.bf16.msra.mxu0 0
    %4407 = vmatprep.subr.bf16.mxu0 0
    %4408 = vmatpush2.bf16.msra.mxu0 0
    %4409 = vmatprep.subr.bf16.mxu0 0
    %4410 = vmatpush2.bf16.msra.mxu0 0
    %4411 = vmatprep.mubr.bf16.mxu0 0
    %4412 = vmatmul.mubr.bf16.gmra.mxu0 %v4368
    %v4413 = vpop.f32.mrf.mxu0
    %v4414 = vadd.f32 0.0, %v4413
    %v4415 = vpop.f32.mrf.mxu0
    %v4416 = vpop.f32.mrf.mxu0
    %v4417 = vadd.f32 0.0, %v4416
    %v4418 = vpop.f32.mrf.mxu0
    %4419 = vmatprep.mubr.bf16.mxu0 0
    %4420 = vmatmul.mubr.bf16.gmra.mxu0 %v4371
    %v4421 = vpop.f32.mrf.mxu0
    %v4422 = vadd.f32 0.0, %v4421
    %v4423 = vpop.f32.mrf.mxu0
    %v4424 = vpop.f32.mrf.mxu0
    %v4425 = vadd.f32 0.0, %v4424
    %v4426 = vpop.f32.mrf.mxu0
    %4427 = vmatprep.mubr.bf16.mxu0 0
    %4428 = vmatmul.mubr.bf16.gmra.mxu0 %v4374
    %v4429 = vpop.f32.mrf.mxu0
    %v4430 = vadd.f32 0.0, %v4429
    %v4431 = vpop.f32.mrf.mxu0
    %v4432 = vpop.f32.mrf.mxu0
    %v4433 = vadd.f32 0.0, %v4432
    %v4434 = vpop.f32.mrf.mxu0
    %4435 = vmatprep.mubr.bf16.mxu0 0
    %4436 = vmatmul.mubr.bf16.gmra.mxu0 %v4377
    %v4437 = vpop.f32.mrf.mxu0
    %v4438 = vadd.f32 0.0, %v4437
    %v4439 = vpop.f32.mrf.mxu0
    %v4440 = vpop.f32.mrf.mxu0
    %v4441 = vadd.f32 0.0, %v4440
    %v4442 = vpop.f32.mrf.mxu0
    %4443 = vdwg.mxu0
    %v4444 = vadd.f32 %v4330, %v4414
    %v4445 = vadd.f32 %v4331, %v4417
    %v4446 = vadd.f32 %v4332, %v4422
    %v4447 = vadd.f32 %v4333, %v4425
    %v4448 = vadd.f32 %v4334, %v4430
    %v4449 = vadd.f32 %v4335, %v4433
    %v4450 = vadd.f32 %v4336, %v4438
    %v4451 = vadd.f32 %v4337, %v4441
    %s4452 = scalar_lea.vmem %s11, 128
    %v4453 = vld [vmem:[%s4452] sm:$0xf]
    %v4454 = vld [vmem:[%s4452 + $0x4] sm:$0xf]
    %v4455 = vld [vmem:[%s4452 + $0x8] sm:$0xf]
    %v4456 = vld [vmem:[%s4452 + $0xc] sm:$0xf]
    %v4457 = vld [vmem:[%s4452 + $0x10] sm:$0xf]
    %v4458 = vld [vmem:[%s4452 + $0x14] sm:$0xf]
    %v4459 = vld [vmem:[%s4452 + $0x18] sm:$0xf]
    %v4460 = vld [vmem:[%s4452 + $0x1c] sm:$0xf]
    %v4469 = vunpack.c.l.b16 %v4453
    %v4470 = vunpack.c.l.b16 %v4454
    %v4471 = vunpack.c.l.b16 %v4455
    %v4472 = vunpack.c.l.b16 %v4456
    %v4473 = vunpack.c.l.b16 %v4457
    %v4474 = vunpack.c.l.b16 %v4458
    %v4475 = vunpack.c.l.b16 %v4459
    %v4476 = vunpack.c.l.b16 %v4460
    %v4477 = vpack.c.b16 %v4470, %v4469
    %v4478 = vpack.c.b16 %v4472, %v4471
    %v4479 = vpack.c.b16 %v4474, %v4473
    %v4480 = vpack.c.b16 %v4476, %v4475
    %v4482 = vsel %vm4049, %v4477, 0
    %v4485 = vsel %vm4049, %v4478, 0
    %v4488 = vsel %vm4049, %v4479, 0
    %v4491 = vsel %vm4049, %v4480, 0
    %4493 = vmatprep.subr.bf16.mxu0 0
    %4494 = vmatpush1.bf16.msra.mxu0 0
    %4495 = vmatprep.subr.bf16.mxu0 0
    %4496 = vmatpush1.bf16.msra.mxu0 0
    %4497 = vmatprep.subr.bf16.mxu0 0
    %4498 = vmatpush1.bf16.msra.mxu0 0
    %4499 = vmatprep.subr.bf16.mxu0 0
    %4500 = vmatpush1.bf16.msra.mxu0 0
    %4501 = vmatprep.subr.bf16.mxu0 0
    %4502 = vmatpush1.bf16.msra.mxu0 0
    %4503 = vmatprep.subr.bf16.mxu0 0
    %4504 = vmatpush1.bf16.msra.mxu0 0
    %4505 = vmatprep.subr.bf16.mxu0 0
    %4506 = vmatpush1.bf16.msra.mxu0 %v4006
    %4507 = vmatprep.subr.bf16.mxu0 0
    %4508 = vmatpush1.bf16.msra.mxu0 %v3996
    %4509 = vmatprep.subr.bf16.mxu0 0
    %4510 = vmatpush2.bf16.msra.mxu0 0
    %4511 = vmatprep.subr.bf16.mxu0 0
    %4512 = vmatpush2.bf16.msra.mxu0 0
    %4513 = vmatprep.subr.bf16.mxu0 0
    %4514 = vmatpush2.bf16.msra.mxu0 0
    %4515 = vmatprep.subr.bf16.mxu0 0
    %4516 = vmatpush2.bf16.msra.mxu0 0
    %4517 = vmatprep.subr.bf16.mxu0 0
    %4518 = vmatpush2.bf16.msra.mxu0 0
    %4519 = vmatprep.subr.bf16.mxu0 0
    %4520 = vmatpush2.bf16.msra.mxu0 0
    %4521 = vmatprep.subr.bf16.mxu0 0
    %4522 = vmatpush2.bf16.msra.mxu0 0
    %4523 = vmatprep.subr.bf16.mxu0 0
    %4524 = vmatpush2.bf16.msra.mxu0 0
    %4525 = vmatprep.mubr.bf16.mxu0 0
    %4526 = vmatmul.mubr.bf16.gmra.mxu0 %v4482
    %v4527 = vpop.f32.mrf.mxu0
    %v4528 = vadd.f32 0.0, %v4527
    %v4529 = vpop.f32.mrf.mxu0
    %v4530 = vpop.f32.mrf.mxu0
    %v4531 = vadd.f32 0.0, %v4530
    %v4532 = vpop.f32.mrf.mxu0
    %4533 = vmatprep.mubr.bf16.mxu0 0
    %4534 = vmatmul.mubr.bf16.gmra.mxu0 %v4485
    %v4535 = vpop.f32.mrf.mxu0
    %v4536 = vadd.f32 0.0, %v4535
    %v4537 = vpop.f32.mrf.mxu0
    %v4538 = vpop.f32.mrf.mxu0
    %v4539 = vadd.f32 0.0, %v4538
    %v4540 = vpop.f32.mrf.mxu0
    %4541 = vmatprep.mubr.bf16.mxu0 0
    %4542 = vmatmul.mubr.bf16.gmra.mxu0 %v4488
    %v4543 = vpop.f32.mrf.mxu0
    %v4544 = vadd.f32 0.0, %v4543
    %v4545 = vpop.f32.mrf.mxu0
    %v4546 = vpop.f32.mrf.mxu0
    %v4547 = vadd.f32 0.0, %v4546
    %v4548 = vpop.f32.mrf.mxu0
    %4549 = vmatprep.mubr.bf16.mxu0 0
    %4550 = vmatmul.mubr.bf16.gmra.mxu0 %v4491
    %v4551 = vpop.f32.mrf.mxu0
    %v4552 = vadd.f32 0.0, %v4551
    %v4553 = vpop.f32.mrf.mxu0
    %v4554 = vpop.f32.mrf.mxu0
    %v4555 = vadd.f32 0.0, %v4554
    %v4556 = vpop.f32.mrf.mxu0
    %4557 = vdwg.mxu0
    %v4558 = vadd.f32 %v4444, %v4528
    %v4559 = vadd.f32 %v4445, %v4531
    %v4560 = vadd.f32 %v4446, %v4536
    %v4561 = vadd.f32 %v4447, %v4539
    %v4562 = vadd.f32 %v4448, %v4544
    %v4563 = vadd.f32 %v4449, %v4547
    %v4564 = vadd.f32 %v4450, %v4552
    %v4565 = vadd.f32 %v4451, %v4555
    %s4566 = scalar_lea.vmem %s11, 160
    %v4567 = vld [vmem:[%s4566] sm:$0xf]
    %v4568 = vld [vmem:[%s4566 + $0x4] sm:$0xf]
    %v4569 = vld [vmem:[%s4566 + $0x8] sm:$0xf]
    %v4570 = vld [vmem:[%s4566 + $0xc] sm:$0xf]
    %v4571 = vld [vmem:[%s4566 + $0x10] sm:$0xf]
    %v4572 = vld [vmem:[%s4566 + $0x14] sm:$0xf]
    %v4573 = vld [vmem:[%s4566 + $0x18] sm:$0xf]
    %v4574 = vld [vmem:[%s4566 + $0x1c] sm:$0xf]
    %v4583 = vunpack.c.l.b16 %v4567
    %v4584 = vunpack.c.l.b16 %v4568
    %v4585 = vunpack.c.l.b16 %v4569
    %v4586 = vunpack.c.l.b16 %v4570
    %v4587 = vunpack.c.l.b16 %v4571
    %v4588 = vunpack.c.l.b16 %v4572
    %v4589 = vunpack.c.l.b16 %v4573
    %v4590 = vunpack.c.l.b16 %v4574
    %v4591 = vpack.c.b16 %v4584, %v4583
    %v4592 = vpack.c.b16 %v4586, %v4585
    %v4593 = vpack.c.b16 %v4588, %v4587
    %v4594 = vpack.c.b16 %v4590, %v4589
    %v4596 = vsel %vm4049, %v4591, 0
    %v4599 = vsel %vm4049, %v4592, 0
    %v4602 = vsel %vm4049, %v4593, 0
    %v4605 = vsel %vm4049, %v4594, 0
    %4607 = vmatprep.subr.bf16.mxu0 0
    %4608 = vmatpush1.bf16.msra.mxu0 0
    %4609 = vmatprep.subr.bf16.mxu0 0
    %4610 = vmatpush1.bf16.msra.mxu0 0
    %4611 = vmatprep.subr.bf16.mxu0 0
    %4612 = vmatpush1.bf16.msra.mxu0 0
    %4613 = vmatprep.subr.bf16.mxu0 0
    %4614 = vmatpush1.bf16.msra.mxu0 0
    %4615 = vmatprep.subr.bf16.mxu0 0
    %4616 = vmatpush1.bf16.msra.mxu0 0
    %4617 = vmatprep.subr.bf16.mxu0 0
    %4618 = vmatpush1.bf16.msra.mxu0 0
    %4619 = vmatprep.subr.bf16.mxu0 0
    %4620 = vmatpush1.bf16.msra.mxu0 %v4007
    %4621 = vmatprep.subr.bf16.mxu0 0
    %4622 = vmatpush1.bf16.msra.mxu0 %v3997
    %4623 = vmatprep.subr.bf16.mxu0 0
    %4624 = vmatpush2.bf16.msra.mxu0 0
    %4625 = vmatprep.subr.bf16.mxu0 0
    %4626 = vmatpush2.bf16.msra.mxu0 0
    %4627 = vmatprep.subr.bf16.mxu0 0
    %4628 = vmatpush2.bf16.msra.mxu0 0
    %4629 = vmatprep.subr.bf16.mxu0 0
    %4630 = vmatpush2.bf16.msra.mxu0 0
    %4631 = vmatprep.subr.bf16.mxu0 0
    %4632 = vmatpush2.bf16.msra.mxu0 0
    %4633 = vmatprep.subr.bf16.mxu0 0
    %4634 = vmatpush2.bf16.msra.mxu0 0
    %4635 = vmatprep.subr.bf16.mxu0 0
    %4636 = vmatpush2.bf16.msra.mxu0 0
    %4637 = vmatprep.subr.bf16.mxu0 0
    %4638 = vmatpush2.bf16.msra.mxu0 0
    %4639 = vmatprep.mubr.bf16.mxu0 0
    %4640 = vmatmul.mubr.bf16.gmra.mxu0 %v4596
    %v4641 = vpop.f32.mrf.mxu0
    %v4642 = vadd.f32 0.0, %v4641
    %v4643 = vpop.f32.mrf.mxu0
    %v4644 = vpop.f32.mrf.mxu0
    %v4645 = vadd.f32 0.0, %v4644
    %v4646 = vpop.f32.mrf.mxu0
    %4647 = vmatprep.mubr.bf16.mxu0 0
    %4648 = vmatmul.mubr.bf16.gmra.mxu0 %v4599
    %v4649 = vpop.f32.mrf.mxu0
    %v4650 = vadd.f32 0.0, %v4649
    %v4651 = vpop.f32.mrf.mxu0
    %v4652 = vpop.f32.mrf.mxu0
    %v4653 = vadd.f32 0.0, %v4652
    %v4654 = vpop.f32.mrf.mxu0
    %4655 = vmatprep.mubr.bf16.mxu0 0
    %4656 = vmatmul.mubr.bf16.gmra.mxu0 %v4602
    %v4657 = vpop.f32.mrf.mxu0
    %v4658 = vadd.f32 0.0, %v4657
    %v4659 = vpop.f32.mrf.mxu0
    %v4660 = vpop.f32.mrf.mxu0
    %v4661 = vadd.f32 0.0, %v4660
    %v4662 = vpop.f32.mrf.mxu0
    %4663 = vmatprep.mubr.bf16.mxu0 0
    %4664 = vmatmul.mubr.bf16.gmra.mxu0 %v4605
    %v4665 = vpop.f32.mrf.mxu0
    %v4666 = vadd.f32 0.0, %v4665
    %v4667 = vpop.f32.mrf.mxu0
    %v4668 = vpop.f32.mrf.mxu0
    %v4669 = vadd.f32 0.0, %v4668
    %v4670 = vpop.f32.mrf.mxu0
    %4671 = vdwg.mxu0
    %v4672 = vadd.f32 %v4558, %v4642
    %v4673 = vadd.f32 %v4559, %v4645
    %v4674 = vadd.f32 %v4560, %v4650
    %v4675 = vadd.f32 %v4561, %v4653
    %v4676 = vadd.f32 %v4562, %v4658
    %v4677 = vadd.f32 %v4563, %v4661
    %v4678 = vadd.f32 %v4564, %v4666
    %v4679 = vadd.f32 %v4565, %v4669
    %s4680 = scalar_lea.vmem %s11, 192
    %v4681 = vld [vmem:[%s4680] sm:$0xf]
    %v4682 = vld [vmem:[%s4680 + $0x4] sm:$0xf]
    %v4683 = vld [vmem:[%s4680 + $0x8] sm:$0xf]
    %v4684 = vld [vmem:[%s4680 + $0xc] sm:$0xf]
    %v4685 = vld [vmem:[%s4680 + $0x10] sm:$0xf]
    %v4686 = vld [vmem:[%s4680 + $0x14] sm:$0xf]
    %v4687 = vld [vmem:[%s4680 + $0x18] sm:$0xf]
    %v4688 = vld [vmem:[%s4680 + $0x1c] sm:$0xf]
    %v4697 = vunpack.c.l.b16 %v4681
    %v4698 = vunpack.c.l.b16 %v4682
    %v4699 = vunpack.c.l.b16 %v4683
    %v4700 = vunpack.c.l.b16 %v4684
    %v4701 = vunpack.c.l.b16 %v4685
    %v4702 = vunpack.c.l.b16 %v4686
    %v4703 = vunpack.c.l.b16 %v4687
    %v4704 = vunpack.c.l.b16 %v4688
    %v4705 = vpack.c.b16 %v4698, %v4697
    %v4706 = vpack.c.b16 %v4700, %v4699
    %v4707 = vpack.c.b16 %v4702, %v4701
    %v4708 = vpack.c.b16 %v4704, %v4703
    %v4710 = vsel %vm4049, %v4705, 0
    %v4713 = vsel %vm4049, %v4706, 0
    %v4716 = vsel %vm4049, %v4707, 0
    %v4719 = vsel %vm4049, %v4708, 0
    %4721 = vmatprep.subr.bf16.mxu0 0
    %4722 = vmatpush1.bf16.msra.mxu0 0
    %4723 = vmatprep.subr.bf16.mxu0 0
    %4724 = vmatpush1.bf16.msra.mxu0 0
    %4725 = vmatprep.subr.bf16.mxu0 0
    %4726 = vmatpush1.bf16.msra.mxu0 0
    %4727 = vmatprep.subr.bf16.mxu0 0
    %4728 = vmatpush1.bf16.msra.mxu0 0
    %4729 = vmatprep.subr.bf16.mxu0 0
    %4730 = vmatpush1.bf16.msra.mxu0 0
    %4731 = vmatprep.subr.bf16.mxu0 0
    %4732 = vmatpush1.bf16.msra.mxu0 0
    %4733 = vmatprep.subr.bf16.mxu0 0
    %4734 = vmatpush1.bf16.msra.mxu0 %v4008
    %4735 = vmatprep.subr.bf16.mxu0 0
    %4736 = vmatpush1.bf16.msra.mxu0 %v3998
    %4737 = vmatprep.subr.bf16.mxu0 0
    %4738 = vmatpush2.bf16.msra.mxu0 0
    %4739 = vmatprep.subr.bf16.mxu0 0
    %4740 = vmatpush2.bf16.msra.mxu0 0
    %4741 = vmatprep.subr.bf16.mxu0 0
    %4742 = vmatpush2.bf16.msra.mxu0 0
    %4743 = vmatprep.subr.bf16.mxu0 0
    %4744 = vmatpush2.bf16.msra.mxu0 0
    %4745 = vmatprep.subr.bf16.mxu0 0
    %4746 = vmatpush2.bf16.msra.mxu0 0
    %4747 = vmatprep.subr.bf16.mxu0 0
    %4748 = vmatpush2.bf16.msra.mxu0 0
    %4749 = vmatprep.subr.bf16.mxu0 0
    %4750 = vmatpush2.bf16.msra.mxu0 0
    %4751 = vmatprep.subr.bf16.mxu0 0
    %4752 = vmatpush2.bf16.msra.mxu0 0
    %4753 = vmatprep.mubr.bf16.mxu0 0
    %4754 = vmatmul.mubr.bf16.gmra.mxu0 %v4710
    %v4755 = vpop.f32.mrf.mxu0
    %v4756 = vadd.f32 0.0, %v4755
    %v4757 = vpop.f32.mrf.mxu0
    %v4758 = vpop.f32.mrf.mxu0
    %v4759 = vadd.f32 0.0, %v4758
    %v4760 = vpop.f32.mrf.mxu0
    %4761 = vmatprep.mubr.bf16.mxu0 0
    %4762 = vmatmul.mubr.bf16.gmra.mxu0 %v4713
    %v4763 = vpop.f32.mrf.mxu0
    %v4764 = vadd.f32 0.0, %v4763
    %v4765 = vpop.f32.mrf.mxu0
    %v4766 = vpop.f32.mrf.mxu0
    %v4767 = vadd.f32 0.0, %v4766
    %v4768 = vpop.f32.mrf.mxu0
    %4769 = vmatprep.mubr.bf16.mxu0 0
    %4770 = vmatmul.mubr.bf16.gmra.mxu0 %v4716
    %v4771 = vpop.f32.mrf.mxu0
    %v4772 = vadd.f32 0.0, %v4771
    %v4773 = vpop.f32.mrf.mxu0
    %v4774 = vpop.f32.mrf.mxu0
    %v4775 = vadd.f32 0.0, %v4774
    %v4776 = vpop.f32.mrf.mxu0
    %4777 = vmatprep.mubr.bf16.mxu0 0
    %4778 = vmatmul.mubr.bf16.gmra.mxu0 %v4719
    %v4779 = vpop.f32.mrf.mxu0
    %v4780 = vadd.f32 0.0, %v4779
    %v4781 = vpop.f32.mrf.mxu0
    %v4782 = vpop.f32.mrf.mxu0
    %v4783 = vadd.f32 0.0, %v4782
    %v4784 = vpop.f32.mrf.mxu0
    %4785 = vdwg.mxu0
    %v4786 = vadd.f32 %v4672, %v4756
    %v4787 = vadd.f32 %v4673, %v4759
    %v4788 = vadd.f32 %v4674, %v4764
    %v4789 = vadd.f32 %v4675, %v4767
    %v4790 = vadd.f32 %v4676, %v4772
    %v4791 = vadd.f32 %v4677, %v4775
    %v4792 = vadd.f32 %v4678, %v4780
    %v4793 = vadd.f32 %v4679, %v4783
    %s4794 = scalar_lea.vmem %s11, 224
    %v4795 = vld [vmem:[%s4794] sm:$0xf]
    %v4796 = vld [vmem:[%s4794 + $0x4] sm:$0xf]
    %v4797 = vld [vmem:[%s4794 + $0x8] sm:$0xf]
    %v4798 = vld [vmem:[%s4794 + $0xc] sm:$0xf]
    %v4799 = vld [vmem:[%s4794 + $0x10] sm:$0xf]
    %v4800 = vld [vmem:[%s4794 + $0x14] sm:$0xf]
    %v4801 = vld [vmem:[%s4794 + $0x18] sm:$0xf]
    %v4802 = vld [vmem:[%s4794 + $0x1c] sm:$0xf]
    %v4811 = vunpack.c.l.b16 %v4795
    %v4812 = vunpack.c.l.b16 %v4796
    %v4813 = vunpack.c.l.b16 %v4797
    %v4814 = vunpack.c.l.b16 %v4798
    %v4815 = vunpack.c.l.b16 %v4799
    %v4816 = vunpack.c.l.b16 %v4800
    %v4817 = vunpack.c.l.b16 %v4801
    %v4818 = vunpack.c.l.b16 %v4802
    %v4819 = vpack.c.b16 %v4812, %v4811
    %v4820 = vpack.c.b16 %v4814, %v4813
    %v4821 = vpack.c.b16 %v4816, %v4815
    %v4822 = vpack.c.b16 %v4818, %v4817
    %v4824 = vsel %vm4049, %v4819, 0
    %v4827 = vsel %vm4049, %v4820, 0
    %v4830 = vsel %vm4049, %v4821, 0
    %v4833 = vsel %vm4049, %v4822, 0
    %4835 = vmatprep.subr.bf16.mxu0 0
    %4836 = vmatpush1.bf16.msra.mxu0 0
    %4837 = vmatprep.subr.bf16.mxu0 0
    %4838 = vmatpush1.bf16.msra.mxu0 0
    %4839 = vmatprep.subr.bf16.mxu0 0
    %4840 = vmatpush1.bf16.msra.mxu0 0
    %4841 = vmatprep.subr.bf16.mxu0 0
    %4842 = vmatpush1.bf16.msra.mxu0 0
    %4843 = vmatprep.subr.bf16.mxu0 0
    %4844 = vmatpush1.bf16.msra.mxu0 0
    %4845 = vmatprep.subr.bf16.mxu0 0
    %4846 = vmatpush1.bf16.msra.mxu0 0
    %4847 = vmatprep.subr.bf16.mxu0 0
    %4848 = vmatpush1.bf16.msra.mxu0 %v4009
    %4849 = vmatprep.subr.bf16.mxu0 0
    %4850 = vmatpush1.bf16.msra.mxu0 %v3999
    %4851 = vmatprep.subr.bf16.mxu0 0
    %4852 = vmatpush2.bf16.msra.mxu0 0
    %4853 = vmatprep.subr.bf16.mxu0 0
    %4854 = vmatpush2.bf16.msra.mxu0 0
    %4855 = vmatprep.subr.bf16.mxu0 0
    %4856 = vmatpush2.bf16.msra.mxu0 0
    %4857 = vmatprep.subr.bf16.mxu0 0
    %4858 = vmatpush2.bf16.msra.mxu0 0
    %4859 = vmatprep.subr.bf16.mxu0 0
    %4860 = vmatpush2.bf16.msra.mxu0 0
    %4861 = vmatprep.subr.bf16.mxu0 0
    %4862 = vmatpush2.bf16.msra.mxu0 0
    %4863 = vmatprep.subr.bf16.mxu0 0
    %4864 = vmatpush2.bf16.msra.mxu0 0
    %4865 = vmatprep.subr.bf16.mxu0 0
    %4866 = vmatpush2.bf16.msra.mxu0 0
    %4867 = vmatprep.mubr.bf16.mxu0 0
    %4868 = vmatmul.mubr.bf16.gmra.mxu0 %v4824
    %v4869 = vpop.f32.mrf.mxu0
    %v4870 = vadd.f32 0.0, %v4869
    %v4871 = vpop.f32.mrf.mxu0
    %v4872 = vpop.f32.mrf.mxu0
    %v4873 = vadd.f32 0.0, %v4872
    %v4874 = vpop.f32.mrf.mxu0
    %4875 = vmatprep.mubr.bf16.mxu0 0
    %4876 = vmatmul.mubr.bf16.gmra.mxu0 %v4827
    %v4877 = vpop.f32.mrf.mxu0
    %v4878 = vadd.f32 0.0, %v4877
    %v4879 = vpop.f32.mrf.mxu0
    %v4880 = vpop.f32.mrf.mxu0
    %v4881 = vadd.f32 0.0, %v4880
    %v4882 = vpop.f32.mrf.mxu0
    %4883 = vmatprep.mubr.bf16.mxu0 0
    %4884 = vmatmul.mubr.bf16.gmra.mxu0 %v4830
    %v4885 = vpop.f32.mrf.mxu0
    %v4886 = vadd.f32 0.0, %v4885
    %v4887 = vpop.f32.mrf.mxu0
    %v4888 = vpop.f32.mrf.mxu0
    %v4889 = vadd.f32 0.0, %v4888
    %v4890 = vpop.f32.mrf.mxu0
    %4891 = vmatprep.mubr.bf16.mxu0 0
    %4892 = vmatmul.mubr.bf16.gmra.mxu0 %v4833
    %v4893 = vpop.f32.mrf.mxu0
    %v4894 = vadd.f32 0.0, %v4893
    %v4895 = vpop.f32.mrf.mxu0
    %v4896 = vpop.f32.mrf.mxu0
    %v4897 = vadd.f32 0.0, %v4896
    %v4898 = vpop.f32.mrf.mxu0
    %4899 = vdwg.mxu0
    %v4900 = vadd.f32 %v4786, %v4870
    %v4901 = vadd.f32 %v4787, %v4873
    %v4902 = vadd.f32 %v4788, %v4878
    %v4903 = vadd.f32 %v4789, %v4881
    %v4904 = vadd.f32 %v4790, %v4886
    %v4905 = vadd.f32 %v4791, %v4889
    %v4906 = vadd.f32 %v4792, %v4894
    %v4907 = vadd.f32 %v4793, %v4897
    %s4908 = scalar_lea.vmem %s11, 256
    %v4909 = vld [vmem:[%s4908] sm:$0xf]
    %v4910 = vld [vmem:[%s4908 + $0x4] sm:$0xf]
    %v4911 = vld [vmem:[%s4908 + $0x8] sm:$0xf]
    %v4912 = vld [vmem:[%s4908 + $0xc] sm:$0xf]
    %v4913 = vld [vmem:[%s4908 + $0x10] sm:$0xf]
    %v4914 = vld [vmem:[%s4908 + $0x14] sm:$0xf]
    %v4915 = vld [vmem:[%s4908 + $0x18] sm:$0xf]
    %v4916 = vld [vmem:[%s4908 + $0x1c] sm:$0xf]
    %v4925 = vunpack.c.l.b16 %v4909
    %v4926 = vunpack.c.l.b16 %v4910
    %v4927 = vunpack.c.l.b16 %v4911
    %v4928 = vunpack.c.l.b16 %v4912
    %v4929 = vunpack.c.l.b16 %v4913
    %v4930 = vunpack.c.l.b16 %v4914
    %v4931 = vunpack.c.l.b16 %v4915
    %v4932 = vunpack.c.l.b16 %v4916
    %v4933 = vpack.c.b16 %v4926, %v4925
    %v4934 = vpack.c.b16 %v4928, %v4927
    %v4935 = vpack.c.b16 %v4930, %v4929
    %v4936 = vpack.c.b16 %v4932, %v4931
    %v4938 = vsel %vm4049, %v4933, 0
    %v4941 = vsel %vm4049, %v4934, 0
    %v4944 = vsel %vm4049, %v4935, 0
    %v4947 = vsel %vm4049, %v4936, 0
    %4949 = vmatprep.subr.bf16.mxu0 0
    %4950 = vmatpush1.bf16.msra.mxu0 0
    %4951 = vmatprep.subr.bf16.mxu0 0
    %4952 = vmatpush1.bf16.msra.mxu0 0
    %4953 = vmatprep.subr.bf16.mxu0 0
    %4954 = vmatpush1.bf16.msra.mxu0 0
    %4955 = vmatprep.subr.bf16.mxu0 0
    %4956 = vmatpush1.bf16.msra.mxu0 0
    %4957 = vmatprep.subr.bf16.mxu0 0
    %4958 = vmatpush1.bf16.msra.mxu0 0
    %4959 = vmatprep.subr.bf16.mxu0 0
    %4960 = vmatpush1.bf16.msra.mxu0 0
    %4961 = vmatprep.subr.bf16.mxu0 0
    %4962 = vmatpush1.bf16.msra.mxu0 %v4010
    %4963 = vmatprep.subr.bf16.mxu0 0
    %4964 = vmatpush1.bf16.msra.mxu0 %v4000
    %4965 = vmatprep.subr.bf16.mxu0 0
    %4966 = vmatpush2.bf16.msra.mxu0 0
    %4967 = vmatprep.subr.bf16.mxu0 0
    %4968 = vmatpush2.bf16.msra.mxu0 0
    %4969 = vmatprep.subr.bf16.mxu0 0
    %4970 = vmatpush2.bf16.msra.mxu0 0
    %4971 = vmatprep.subr.bf16.mxu0 0
    %4972 = vmatpush2.bf16.msra.mxu0 0
    %4973 = vmatprep.subr.bf16.mxu0 0
    %4974 = vmatpush2.bf16.msra.mxu0 0
    %4975 = vmatprep.subr.bf16.mxu0 0
    %4976 = vmatpush2.bf16.msra.mxu0 0
    %4977 = vmatprep.subr.bf16.mxu0 0
    %4978 = vmatpush2.bf16.msra.mxu0 0
    %4979 = vmatprep.subr.bf16.mxu0 0
    %4980 = vmatpush2.bf16.msra.mxu0 0
    %4981 = vmatprep.mubr.bf16.mxu0 0
    %4982 = vmatmul.mubr.bf16.gmra.mxu0 %v4938
    %v4983 = vpop.f32.mrf.mxu0
    %v4984 = vadd.f32 0.0, %v4983
    %v4985 = vpop.f32.mrf.mxu0
    %v4986 = vpop.f32.mrf.mxu0
    %v4987 = vadd.f32 0.0, %v4986
    %v4988 = vpop.f32.mrf.mxu0
    %4989 = vmatprep.mubr.bf16.mxu0 0
    %4990 = vmatmul.mubr.bf16.gmra.mxu0 %v4941
    %v4991 = vpop.f32.mrf.mxu0
    %v4992 = vadd.f32 0.0, %v4991
    %v4993 = vpop.f32.mrf.mxu0
    %v4994 = vpop.f32.mrf.mxu0
    %v4995 = vadd.f32 0.0, %v4994
    %v4996 = vpop.f32.mrf.mxu0
    %4997 = vmatprep.mubr.bf16.mxu0 0
    %4998 = vmatmul.mubr.bf16.gmra.mxu0 %v4944
    %v4999 = vpop.f32.mrf.mxu0
    %v5000 = vadd.f32 0.0, %v4999
    %v5001 = vpop.f32.mrf.mxu0
    %v5002 = vpop.f32.mrf.mxu0
    %v5003 = vadd.f32 0.0, %v5002
    %v5004 = vpop.f32.mrf.mxu0
    %5005 = vmatprep.mubr.bf16.mxu0 0
    %5006 = vmatmul.mubr.bf16.gmra.mxu0 %v4947
    %v5007 = vpop.f32.mrf.mxu0
    %v5008 = vadd.f32 0.0, %v5007
    %v5009 = vpop.f32.mrf.mxu0
    %v5010 = vpop.f32.mrf.mxu0
    %v5011 = vadd.f32 0.0, %v5010
    %v5012 = vpop.f32.mrf.mxu0
    %5013 = vdwg.mxu0
    %v5014 = vadd.f32 %v4900, %v4984
    %v5015 = vadd.f32 %v4901, %v4987
    %v5016 = vadd.f32 %v4902, %v4992
    %v5017 = vadd.f32 %v4903, %v4995
    %v5018 = vadd.f32 %v4904, %v5000
    %v5019 = vadd.f32 %v4905, %v5003
    %v5020 = vadd.f32 %v4906, %v5008
    %v5021 = vadd.f32 %v4907, %v5011
    %s5022 = scalar_lea.vmem %s11, 288
    %v5023 = vld [vmem:[%s5022] sm:$0xf]
    %v5024 = vld [vmem:[%s5022 + $0x4] sm:$0xf]
    %v5025 = vld [vmem:[%s5022 + $0x8] sm:$0xf]
    %v5026 = vld [vmem:[%s5022 + $0xc] sm:$0xf]
    %v5027 = vld [vmem:[%s5022 + $0x10] sm:$0xf]
    %v5028 = vld [vmem:[%s5022 + $0x14] sm:$0xf]
    %v5029 = vld [vmem:[%s5022 + $0x18] sm:$0xf]
    %v5030 = vld [vmem:[%s5022 + $0x1c] sm:$0xf]
    %v5039 = vunpack.c.l.b16 %v5023
    %v5040 = vunpack.c.l.b16 %v5024
    %v5041 = vunpack.c.l.b16 %v5025
    %v5042 = vunpack.c.l.b16 %v5026
    %v5043 = vunpack.c.l.b16 %v5027
    %v5044 = vunpack.c.l.b16 %v5028
    %v5045 = vunpack.c.l.b16 %v5029
    %v5046 = vunpack.c.l.b16 %v5030
    %v5047 = vpack.c.b16 %v5040, %v5039
    %v5048 = vpack.c.b16 %v5042, %v5041
    %v5049 = vpack.c.b16 %v5044, %v5043
    %v5050 = vpack.c.b16 %v5046, %v5045
    %v5052 = vsel %vm4049, %v5047, 0
    %v5055 = vsel %vm4049, %v5048, 0
    %v5058 = vsel %vm4049, %v5049, 0
    %v5061 = vsel %vm4049, %v5050, 0
    %5063 = vmatprep.subr.bf16.mxu0 0
    %5064 = vmatpush1.bf16.msra.mxu0 0
    %5065 = vmatprep.subr.bf16.mxu0 0
    %5066 = vmatpush1.bf16.msra.mxu0 0
    %5067 = vmatprep.subr.bf16.mxu0 0
    %5068 = vmatpush1.bf16.msra.mxu0 0
    %5069 = vmatprep.subr.bf16.mxu0 0
    %5070 = vmatpush1.bf16.msra.mxu0 0
    %5071 = vmatprep.subr.bf16.mxu0 0
    %5072 = vmatpush1.bf16.msra.mxu0 0
    %5073 = vmatprep.subr.bf16.mxu0 0
    %5074 = vmatpush1.bf16.msra.mxu0 0
    %5075 = vmatprep.subr.bf16.mxu0 0
    %5076 = vmatpush1.bf16.msra.mxu0 %v4011
    %5077 = vmatprep.subr.bf16.mxu0 0
    %5078 = vmatpush1.bf16.msra.mxu0 %v4001
    %5079 = vmatprep.subr.bf16.mxu0 0
    %5080 = vmatpush2.bf16.msra.mxu0 0
    %5081 = vmatprep.subr.bf16.mxu0 0
    %5082 = vmatpush2.bf16.msra.mxu0 0
    %5083 = vmatprep.subr.bf16.mxu0 0
    %5084 = vmatpush2.bf16.msra.mxu0 0
    %5085 = vmatprep.subr.bf16.mxu0 0
    %5086 = vmatpush2.bf16.msra.mxu0 0
    %5087 = vmatprep.subr.bf16.mxu0 0
    %5088 = vmatpush2.bf16.msra.mxu0 0
    %5089 = vmatprep.subr.bf16.mxu0 0
    %5090 = vmatpush2.bf16.msra.mxu0 0
    %5091 = vmatprep.subr.bf16.mxu0 0
    %5092 = vmatpush2.bf16.msra.mxu0 0
    %5093 = vmatprep.subr.bf16.mxu0 0
    %5094 = vmatpush2.bf16.msra.mxu0 0
    %5095 = vmatprep.mubr.bf16.mxu0 0
    %5096 = vmatmul.mubr.bf16.gmra.mxu0 %v5052
    %v5097 = vpop.f32.mrf.mxu0
    %v5098 = vadd.f32 0.0, %v5097
    %v5099 = vpop.f32.mrf.mxu0
    %v5100 = vpop.f32.mrf.mxu0
    %v5101 = vadd.f32 0.0, %v5100
    %v5102 = vpop.f32.mrf.mxu0
    %5103 = vmatprep.mubr.bf16.mxu0 0
    %5104 = vmatmul.mubr.bf16.gmra.mxu0 %v5055
    %v5105 = vpop.f32.mrf.mxu0
    %v5106 = vadd.f32 0.0, %v5105
    %v5107 = vpop.f32.mrf.mxu0
    %v5108 = vpop.f32.mrf.mxu0
    %v5109 = vadd.f32 0.0, %v5108
    %v5110 = vpop.f32.mrf.mxu0
    %5111 = vmatprep.mubr.bf16.mxu0 0
    %5112 = vmatmul.mubr.bf16.gmra.mxu0 %v5058
    %v5113 = vpop.f32.mrf.mxu0
    %v5114 = vadd.f32 0.0, %v5113
    %v5115 = vpop.f32.mrf.mxu0
    %v5116 = vpop.f32.mrf.mxu0
    %v5117 = vadd.f32 0.0, %v5116
    %v5118 = vpop.f32.mrf.mxu0
    %5119 = vmatprep.mubr.bf16.mxu0 0
    %5120 = vmatmul.mubr.bf16.gmra.mxu0 %v5061
    %v5121 = vpop.f32.mrf.mxu0
    %v5122 = vadd.f32 0.0, %v5121
    %v5123 = vpop.f32.mrf.mxu0
    %v5124 = vpop.f32.mrf.mxu0
    %v5125 = vadd.f32 0.0, %v5124
    %v5126 = vpop.f32.mrf.mxu0
    %5127 = vdwg.mxu0
    %v5128 = vadd.f32 %v5014, %v5098
    %v5129 = vadd.f32 %v5015, %v5101
    %v5130 = vadd.f32 %v5016, %v5106
    %v5131 = vadd.f32 %v5017, %v5109
    %v5132 = vadd.f32 %v5018, %v5114
    %v5133 = vadd.f32 %v5019, %v5117
    %v5134 = vadd.f32 %v5020, %v5122
    %v5135 = vadd.f32 %v5021, %v5125
    %5136 = vadd.xlane.f32.xlu0 %v5128
    %v5137 = vpop.xlane.xlu0 %5136
    %5138 = vadd.xlane.f32.xlu0 %v5129
    %v5139 = vpop.xlane.xlu0 %5138
    %5140 = vadd.xlane.f32.xlu0 %v5130
    %v5141 = vpop.xlane.xlu0 %5140
    %5142 = vadd.xlane.f32.xlu0 %v5131
    %v5143 = vpop.xlane.xlu0 %5142
    %5144 = vadd.xlane.f32.xlu0 %v5132
    %v5145 = vpop.xlane.xlu0 %5144
    %5146 = vadd.xlane.f32.xlu0 %v5133
    %v5147 = vpop.xlane.xlu0 %5146
    %5148 = vadd.xlane.f32.xlu0 %v5134
    %v5149 = vpop.xlane.xlu0 %5148
    %5150 = vadd.xlane.f32.xlu0 %v5135
    %v5151 = vpop.xlane.xlu0 %5150
    %v5152 = vmul.f32 %v5137, 0.5
    %v5153 = vmul.f32 %v5139, 0.5
    %v5154 = vmul.f32 %v5141, 0.5
    %v5155 = vmul.f32 %v5143, 0.5
    %v5156 = vmul.f32 %v5145, 0.5
    %v5157 = vmul.f32 %v5147, 0.5
    %v5158 = vmul.f32 %v5149, 0.5
    %v5159 = vmul.f32 %v5151, 0.5
    %v5160 = vmul.f32 %v5128, %v5128
    %v5161 = vmul.f32 %v5129, %v5129
    %v5162 = vmul.f32 %v5130, %v5130
    %v5163 = vmul.f32 %v5131, %v5131
    %v5164 = vmul.f32 %v5132, %v5132
    %v5165 = vmul.f32 %v5133, %v5133
    %v5166 = vmul.f32 %v5134, %v5134
    %v5167 = vmul.f32 %v5135, %v5135
    %5168 = vadd.xlane.f32.xlu0 %v5160
    %v5169 = vpop.xlane.xlu0 %5168
    %5170 = vadd.xlane.f32.xlu0 %v5161
    %v5171 = vpop.xlane.xlu0 %5170
    %5172 = vadd.xlane.f32.xlu0 %v5162
    %v5173 = vpop.xlane.xlu0 %5172
    %5174 = vadd.xlane.f32.xlu0 %v5163
    %v5175 = vpop.xlane.xlu0 %5174
    %5176 = vadd.xlane.f32.xlu0 %v5164
    %v5177 = vpop.xlane.xlu0 %5176
    %5178 = vadd.xlane.f32.xlu0 %v5165
    %v5179 = vpop.xlane.xlu0 %5178
    %5180 = vadd.xlane.f32.xlu0 %v5166
    %v5181 = vpop.xlane.xlu0 %5180
    %5182 = vadd.xlane.f32.xlu0 %v5167
    %v5183 = vpop.xlane.xlu0 %5182
    %v5184 = vmul.f32 %v5169, 0.5
    %v5185 = vmul.f32 %v5171, 0.5
    %v5186 = vmul.f32 %v5173, 0.5
    %v5187 = vmul.f32 %v5175, 0.5
    %v5188 = vmul.f32 %v5177, 0.5
    %v5189 = vmul.f32 %v5179, 0.5
    %v5190 = vmul.f32 %v5181, 0.5
    %v5191 = vmul.f32 %v5183, 0.5
    %v5192 = vmul.f32 %v5152, %v5152
    %v5193 = vmul.f32 %v5153, %v5153
    %v5194 = vmul.f32 %v5154, %v5154
    %v5195 = vmul.f32 %v5155, %v5155
    %v5196 = vmul.f32 %v5156, %v5156
    %v5197 = vmul.f32 %v5157, %v5157
    %v5198 = vmul.f32 %v5158, %v5158
    %v5199 = vmul.f32 %v5159, %v5159
    %v5200 = vsub.f32 %v5184, %v5192
    %v5201 = vsub.f32 %v5185, %v5193
    %v5202 = vsub.f32 %v5186, %v5194
    %v5203 = vsub.f32 %v5187, %v5195
    %v5204 = vsub.f32 %v5188, %v5196
    %v5205 = vsub.f32 %v5189, %v5197
    %v5206 = vsub.f32 %v5190, %v5198
    %v5207 = vsub.f32 %v5191, %v5199
    %v5208 = vmax.f32 %v5200, 0.0
    %v5209 = vmax.f32 %v5201, 0.0
    %v5210 = vmax.f32 %v5202, 0.0
    %v5211 = vmax.f32 %v5203, 0.0
    %v5212 = vmax.f32 %v5204, 0.0
    %v5213 = vmax.f32 %v5205, 0.0
    %v5214 = vmax.f32 %v5206, 0.0
    %v5215 = vmax.f32 %v5207, 0.0
    %v5216 = vld [vmem:[%s12] sm:$0xff]
    %v5217 = vld [vmem:[%s12 + $0x8] sm:$0xff]
    %v5218 = vld [vmem:[%s12 + $0x10] sm:$0xff]
    %v5219 = vld [vmem:[%s12 + $0x18] sm:$0xff]
    %v5220 = vld [vmem:[%s12 + $0x20] sm:$0xff]
    %v5221 = vld [vmem:[%s12 + $0x28] sm:$0xff]
    %v5222 = vld [vmem:[%s12 + $0x30] sm:$0xff]
    %v5223 = vld [vmem:[%s12 + $0x38] sm:$0xff]
    %v5224 = vadd.f32 %v5208, 1e-05
    %v5225 = vadd.f32 %v5209, 1e-05
    %v5226 = vadd.f32 %v5210, 1e-05
    %v5227 = vadd.f32 %v5211, 1e-05
    %v5228 = vadd.f32 %v5212, 1e-05
    %v5229 = vadd.f32 %v5213, 1e-05
    %v5230 = vadd.f32 %v5214, 1e-05
    %v5231 = vadd.f32 %v5215, 1e-05
    %v5232 = vrsqrt.pop %v5224
    %v5233 = vrsqrt.pop %v5225
    %v5234 = vrsqrt.pop %v5226
    %v5235 = vrsqrt.pop %v5227
    %v5236 = vrsqrt.pop %v5228
    %v5237 = vrsqrt.pop %v5229
    %v5238 = vrsqrt.pop %v5230
    %v5239 = vrsqrt.pop %v5231
    %v5240 = vmul.f32 %v5216, %v5232
    %v5241 = vmul.f32 %v5217, %v5233
    %v5242 = vmul.f32 %v5218, %v5234
    %v5243 = vmul.f32 %v5219, %v5235
    %v5244 = vmul.f32 %v5220, %v5236
    %v5245 = vmul.f32 %v5221, %v5237
    %v5246 = vmul.f32 %v5222, %v5238
    %v5247 = vmul.f32 %v5223, %v5239
    %5249 = vset.pattern.permute.xlu0 0
    %5250 = vperm.xlu0 %5249, %v5240
    %v5251 = vpop.permute.xlu0 %5250
    %5254 = vset.pattern.permute.xlu0 0
    %5255 = vperm.xlu0 %5254, %v5241
    %v5256 = vpop.permute.xlu0 %5255
    %5259 = vset.pattern.permute.xlu0 0
    %5260 = vperm.xlu0 %5259, %v5242
    %v5261 = vpop.permute.xlu0 %5260
    %5264 = vset.pattern.permute.xlu0 0
    %5265 = vperm.xlu0 %5264, %v5243
    %v5266 = vpop.permute.xlu0 %5265
    %5269 = vset.pattern.permute.xlu0 0
    %5270 = vperm.xlu0 %5269, %v5244
    %v5271 = vpop.permute.xlu0 %5270
    %5274 = vset.pattern.permute.xlu0 0
    %5275 = vperm.xlu0 %5274, %v5245
    %v5276 = vpop.permute.xlu0 %5275
    %5279 = vset.pattern.permute.xlu0 0
    %5280 = vperm.xlu0 %5279, %v5246
    %v5281 = vpop.permute.xlu0 %5280
    %5284 = vset.pattern.permute.xlu0 0
    %5285 = vperm.xlu0 %5284, %v5247
    %v5286 = vpop.permute.xlu0 %5285
    %v5288 = vmul.f32 %v5128, %v5251
    %v5289 = vmul.f32 %v5129, %v5256
    %v5290 = vmul.f32 %v5130, %v5261
    %v5291 = vmul.f32 %v5131, %v5266
    %v5292 = vmul.f32 %v5132, %v5271
    %v5293 = vmul.f32 %v5133, %v5276
    %v5294 = vmul.f32 %v5134, %v5281
    %v5295 = vmul.f32 %v5135, %v5286
    %v5296 = vld [vmem:[%s13] sm:$0xff]
    %v5297 = vld [vmem:[%s13 + $0x8] sm:$0xff]
    %v5298 = vld [vmem:[%s13 + $0x10] sm:$0xff]
    %v5299 = vld [vmem:[%s13 + $0x18] sm:$0xff]
    %v5300 = vld [vmem:[%s13 + $0x20] sm:$0xff]
    %v5301 = vld [vmem:[%s13 + $0x28] sm:$0xff]
    %v5302 = vld [vmem:[%s13 + $0x30] sm:$0xff]
    %v5303 = vld [vmem:[%s13 + $0x38] sm:$0xff]
    %v5304 = vmul.f32 %v5152, %v5240
    %v5305 = vmul.f32 %v5153, %v5241
    %v5306 = vmul.f32 %v5154, %v5242
    %v5307 = vmul.f32 %v5155, %v5243
    %v5308 = vmul.f32 %v5156, %v5244
    %v5309 = vmul.f32 %v5157, %v5245
    %v5310 = vmul.f32 %v5158, %v5246
    %v5311 = vmul.f32 %v5159, %v5247
    %v5312 = vsub.f32 %v5296, %v5304
    %v5313 = vsub.f32 %v5297, %v5305
    %v5314 = vsub.f32 %v5298, %v5306
    %v5315 = vsub.f32 %v5299, %v5307
    %v5316 = vsub.f32 %v5300, %v5308
    %v5317 = vsub.f32 %v5301, %v5309
    %v5318 = vsub.f32 %v5302, %v5310
    %v5319 = vsub.f32 %v5303, %v5311
    %5321 = vset.pattern.permute.xlu0 0
    %5322 = vperm.xlu0 %5321, %v5312
    %v5323 = vpop.permute.xlu0 %5322
    %5326 = vset.pattern.permute.xlu0 0
    %5327 = vperm.xlu0 %5326, %v5313
    %v5328 = vpop.permute.xlu0 %5327
    %5331 = vset.pattern.permute.xlu0 0
    %5332 = vperm.xlu0 %5331, %v5314
    %v5333 = vpop.permute.xlu0 %5332
    %5336 = vset.pattern.permute.xlu0 0
    %5337 = vperm.xlu0 %5336, %v5315
    %v5338 = vpop.permute.xlu0 %5337
    %5341 = vset.pattern.permute.xlu0 0
    %5342 = vperm.xlu0 %5341, %v5316
    %v5343 = vpop.permute.xlu0 %5342
    %5346 = vset.pattern.permute.xlu0 0
    %5347 = vperm.xlu0 %5346, %v5317
    %v5348 = vpop.permute.xlu0 %5347
    %5351 = vset.pattern.permute.xlu0 0
    %5352 = vperm.xlu0 %5351, %v5318
    %v5353 = vpop.permute.xlu0 %5352
    %5356 = vset.pattern.permute.xlu0 0
    %5357 = vperm.xlu0 %5356, %v5319
    %v5358 = vpop.permute.xlu0 %5357
    %v5360 = vadd.f32 %v5288, %v5323
    %v5361 = vadd.f32 %v5289, %v5328
    %v5362 = vadd.f32 %v5290, %v5333
    %v5363 = vadd.f32 %v5291, %v5338
    %v5364 = vadd.f32 %v5292, %v5343
    %v5365 = vadd.f32 %v5293, %v5348
    %v5366 = vadd.f32 %v5294, %v5353
    %v5367 = vadd.f32 %v5295, %v5358
    %vm5368 = vcmp.ge.f32.partialorder %v5360, 0.0
    %vm5369 = vcmp.ge.f32.partialorder %v5361, 0.0
    %vm5370 = vcmp.ge.f32.partialorder %v5362, 0.0
    %vm5371 = vcmp.ge.f32.partialorder %v5363, 0.0
    %vm5372 = vcmp.ge.f32.partialorder %v5364, 0.0
    %vm5373 = vcmp.ge.f32.partialorder %v5365, 0.0
    %vm5374 = vcmp.ge.f32.partialorder %v5366, 0.0
    %vm5375 = vcmp.ge.f32.partialorder %v5367, 0.0
    %v5376 = vmul.f32 %v5360, 0.01
    %v5377 = vmul.f32 %v5361, 0.01
    %v5378 = vmul.f32 %v5362, 0.01
    %v5379 = vmul.f32 %v5363, 0.01
    %v5380 = vmul.f32 %v5364, 0.01
    %v5381 = vmul.f32 %v5365, 0.01
    %v5382 = vmul.f32 %v5366, 0.01
    %v5383 = vmul.f32 %v5367, 0.01
    %v5384 = vsel %vm5368, %v5360, %v5376
    %v5385 = vsel %vm5369, %v5361, %v5377
    %v5386 = vsel %vm5370, %v5362, %v5378
    %v5387 = vsel %vm5371, %v5363, %v5379
    %v5388 = vsel %vm5372, %v5364, %v5380
    %v5389 = vsel %vm5373, %v5365, %v5381
    %v5390 = vsel %vm5374, %v5366, %v5382
    %v5391 = vsel %vm5375, %v5367, %v5383
    %v5392 = vld [vmem:[%s14] sm:$0x3]
    %v5393 = vpack.c.bf16 %v5385, %v5384
    %v5394 = vpack.c.bf16 %v5387, %v5386
    %v5395 = vpack.c.bf16 %v5389, %v5388
    %v5396 = vpack.c.bf16 %v5391, %v5390
    %v5397 = vld [vmem:[%s15] sm:$0xf]
    %5399 = vset.pattern.permute.xlu0 0
    %5400 = vperm.xlu0 %5399, %v5397
    %v5401 = vpop.permute.xlu0 %5400
    %vm5403 = vcmask 523264
    %v5405 = vsel %vm5403, %v5392, 0
    %5407 = vmatprep.subr.bf16.mxu0 0
    %5408 = vmatpush1.bf16.msra.mxu0 0
    %5409 = vmatprep.subr.bf16.mxu0 0
    %5410 = vmatpush1.bf16.msra.mxu0 0
    %5411 = vmatprep.subr.bf16.mxu0 0
    %5412 = vmatpush1.bf16.msra.mxu0 0
    %5413 = vmatprep.subr.bf16.mxu0 0
    %5414 = vmatpush1.bf16.msra.mxu0 0
    %5415 = vmatprep.subr.bf16.mxu0 0
    %5416 = vmatpush1.bf16.msra.mxu0 %v5396
    %5417 = vmatprep.subr.bf16.mxu0 0
    %5418 = vmatpush1.bf16.msra.mxu0 %v5395
    %5419 = vmatprep.subr.bf16.mxu0 0
    %5420 = vmatpush1.bf16.msra.mxu0 %v5394
    %5421 = vmatprep.subr.bf16.mxu0 0
    %5422 = vmatpush1.bf16.msra.mxu0 %v5393
    %5423 = vmatprep.subr.bf16.mxu0 0
    %5424 = vmatpush2.bf16.msra.mxu0 0
    %5425 = vmatprep.subr.bf16.mxu0 0
    %5426 = vmatpush2.bf16.msra.mxu0 0
    %5427 = vmatprep.subr.bf16.mxu0 0
    %5428 = vmatpush2.bf16.msra.mxu0 0
    %5429 = vmatprep.subr.bf16.mxu0 0
    %5430 = vmatpush2.bf16.msra.mxu0 0
    %5431 = vmatprep.subr.bf16.mxu0 0
    %5432 = vmatpush2.bf16.msra.mxu0 0
    %5433 = vmatprep.subr.bf16.mxu0 0
    %5434 = vmatpush2.bf16.msra.mxu0 0
    %5435 = vmatprep.subr.bf16.mxu0 0
    %5436 = vmatpush2.bf16.msra.mxu0 0
    %5437 = vmatprep.subr.bf16.mxu0 0
    %5438 = vmatpush2.bf16.msra.mxu0 0
    %5439 = vmatprep.mubr.bf16.mxu0 0
    %5440 = vmatmul.mubr.bf16.gmra.mxu0 %v5405
    %v5441 = vpop.f32.mrf.mxu0
    %v5442 = vadd.f32 %v5401, %v5441
    %v5443 = vpop.f32.mrf.mxu0
    %v5444 = vpop.f32.mrf.mxu0
    %v5445 = vpop.f32.mrf.mxu0
    %5446 = vdwg.mxu0
    %5447 = vst [vmem:[#allocation2] sm:$0xf] %v5442
    // Predicated region
    $region66: #{tpu_custom_call.1} parent=1 // pred_check
      _
    $region67: #{tpu_custom_call.1} parent=1 // pred_check_branch
      %5449 = sbr.rel (0) target = $region69
    $region68: #{tpu_custom_call.1} parent=1 // pred_region
      %s5451 = ssub.s32 64, 64
      %5452 = vsyncadd [#allocation3], %s5451
      %s5454 = sshll.u32 [#allocation2], 4
      %s5455 = int_to_ptr.vmem [resolvable:$true] %s5454
      %5457 = dma.vmem_to_hbm [thread:$0]  %s5455, 64, %s16, [#allocation3]
    $region69: #{tpu_custom_call.1} parent=1 // pred_fallthru
      _
    // Predicated region
    $region70: #{tpu_custom_call.1} parent=1 // pred_check
      _
    $region71: #{tpu_custom_call.1} parent=1 // pred_check_branch
      %5459 = sbr.rel (0) target = $region73
    $region72: #{tpu_custom_call.1} parent=1 // pred_region
      %5460 = dma.done [#allocation3], 64
    $region73: #{tpu_custom_call.1} parent=1 // pred_fallthru
      _
    %5461 = vsyncpa [#allocation3], 1

</llo_original>
